<compile_context>
chip_gen: v6e
topology: v6e:2x2x1
jax: 0.10.0
libtpu: 0.0.40
codegen_flags: <defaults>
</compile_context>

<pallas_src>
import functools

import jax
import jax.numpy as jnp
from jax.experimental import pallas as pl
from jax.experimental.pallas import tpu as pltpu


def _round_up(v, m):
    return (v + m - 1) // m * m


# ----------------------------------------------------------------------------
# Pallas kernel: one walk step for a tile of `tr` curves.
# Layout: channels on sublanes, curves (rows) on lanes.
#   pick_ref  : (k, c, tr)  gathered neighbor features
#   pre_ref   : (c, tr)     pre_feature (momentum-blended previous feature)
#   cur_ref   : (c, tr)     cur_feature from the previous step (zeros at step 0)
#   wpick_ref : (8, c)      rows: [w_agent_pick ; wm_cur0 ; wm_cur1 ; 0...]
#   wpre_ref  : (8, c)      rows: [w_agent_pre  ; wm_pre0 ; wm_pre1 ; 0...]
#   b_ref     : (4,) SMEM   [agent_bias, m0_bias, m1_bias, 0]
# Outputs:
#   curnew_ref: (c, tr) f32  selected neighbor feature (new cur_feature)
#   misc_ref  : (8, tr) f32  row0 = selected slot (exact small float),
#                            rows1:3 = momentum-MLP logits, rows3:8 = 0
# ----------------------------------------------------------------------------
def _walk_step_kernel(pick_ref, pre_ref, cur_ref, wpick_ref, wpre_ref, b_ref,
                      curnew_ref, misc_ref, *, k, apply_crossover):
    c, tr = pre_ref.shape
    pre = pre_ref[...]
    wpick = wpick_ref[...]                                           # (8, c)
    wpre = wpre_ref[...]                                             # (8, c)

    # One fused 8-row matmul against pre: row0 -> agent pre-term,
    # rows 1:3 -> momentum-MLP "pre" logits.
    pre_dot = jnp.dot(wpre, pre, preferred_element_type=jnp.float32)  # (8, tr)
    base = pre_dot[0:1, :] + b_ref[0]                    # hoisted agent base

    if apply_crossover:
        cur = cur_ref[...]
        u = cur - pre                                                # (c, tr)
        ss_u = jnp.sum(u * u, axis=0, keepdims=True)                 # |u|^2

    best_s = jnp.full((1, tr), -jnp.inf, dtype=jnp.float32)
    best_j = jnp.zeros((1, tr), dtype=jnp.int32)
    cur_new = jnp.zeros((c, tr), dtype=jnp.float32)
    mcur = jnp.zeros((2, tr), dtype=jnp.float32)
    for j in range(k):
        pv = pick_ref[j]                                             # (c, tr)
        dj = jnp.dot(wpick, pv, preferred_element_type=jnp.float32)  # (8, tr)
        s = dj[0:1, :] + base                                        # agent score
        if apply_crossover:
            v = pv - cur
            dotv = jnp.sum(u * v, axis=0, keepdims=True)
            ss_v = jnp.sum(v * v, axis=0, keepdims=True)
            inv = jax.lax.rsqrt(jnp.maximum(ss_u * ss_v, 1e-16))
            s = s * jnp.clip(1.0 + dotv * inv, 0.0, 1.0)
        take = s > best_s                        # first max wins (torch tie rule)
        best_s = jnp.where(take, s, best_s)
        best_j = jnp.where(take, jnp.int32(j), best_j)
        cur_new = jnp.where(take, pv, cur_new)               # winner's feature
        mcur = jnp.where(take, dj[1:3, :], mcur)             # winner's mm-cur logits

    curnew_ref[...] = cur_new
    misc_ref[0:1, :] = best_j.astype(jnp.float32)            # exact small ints
    misc_ref[1:2, :] = mcur[0:1, :] + pre_dot[1:2, :] + b_ref[1]
    misc_ref[2:3, :] = mcur[1:2, :] + pre_dot[2:3, :] + b_ref[2]
    misc_ref[3:8, :] = jnp.zeros((5, tr), jnp.float32)


def _walk_step_pallas(pick, pre, cur_feat, wpick8, wpre8, bvec, *,
                      apply_crossover, tr):
    k, c_pad, r_pad = pick.shape
    kernel = functools.partial(_walk_step_kernel, k=k,
                               apply_crossover=apply_crossover)
    return pl.pallas_call(
        kernel,
        out_shape=(
            jax.ShapeDtypeStruct((c_pad, r_pad), jnp.float32),
            jax.ShapeDtypeStruct((8, r_pad), jnp.float32),
        ),
        grid_spec=pltpu.PrefetchScalarGridSpec(
            num_scalar_prefetch=0,
            grid=(r_pad // tr,),
            in_specs=[
                pl.BlockSpec((k, c_pad, tr), lambda i: (0, 0, i)),
                pl.BlockSpec((c_pad, tr), lambda i: (0, i)),
                pl.BlockSpec((c_pad, tr), lambda i: (0, i)),
                pl.BlockSpec((8, c_pad), lambda i: (0, 0)),
                pl.BlockSpec((8, c_pad), lambda i: (0, 0)),
                pl.BlockSpec(memory_space=pltpu.MemorySpace.SMEM),
            ],
            out_specs=(
                pl.BlockSpec((c_pad, tr), lambda i: (0, i)),
                pl.BlockSpec((8, tr), lambda i: (0, i)),
            ),
        ),
        compiler_params=pltpu.CompilerParams(
            dimension_semantics=("parallel",)),
    )(pick, pre, cur_feat, wpick8, wpre8, bvec)


def _pick_row_tile(rows_pad, k, c_pad, vmem_budget=10 * 1024 * 1024):
    """Largest lane tile that divides rows_pad, fits a conservative VMEM
    double-buffer budget, and (when possible) leaves >=2 grid tiles so both
    v7x TensorCores get work."""
    def est(t):   # double-buffered inputs (pick, pre, cur) + outputs
        return 4 * t * (2 * (k * c_pad + 2 * c_pad) + 2 * (c_pad + 8))
    cands = [t for t in (1024, 512, 256, 128)
             if rows_pad % t == 0 and est(t) <= vmem_budget]
    if not cands:
        cands = [128]
    multi = [t for t in cands if rows_pad // t >= 2]
    return max(multi) if multi else max(cands)


# ----------------------------------------------------------------------------
# Pallas-backed Walk.forward (eval-mode BN folded).
#   xyz: (bn, 3, n)  (unused by the reference forward as written)
#   x  : (bn, c, n), adj: (bn, n, k) int32, cur: (bn, curve_num, 1) int32
#   -> (bn, c, curve_num, curve_length)
# ----------------------------------------------------------------------------
def walk_forward(xyz, x, adj, cur, params, *, k, curve_num, curve_length):
    del xyz  # the PyTorch forward never actually uses xyz (transpose not called)
    wa_eff, a_bias, wm_eff, m_bias = params
    bn, c, n = x.shape
    rows = bn * curve_num
    c_pad = _round_up(c, 8)
    rows_pad = _round_up(rows, 128)
    tr = _pick_row_tile(rows_pad, k, c_pad)
    lane_pad = rows_pad - rows

    # Fused kernel-layout weights (zero-padded channels contribute nothing).
    wpick8 = jnp.zeros((8, c_pad), jnp.float32)
    wpick8 = (wpick8.at[0, :c].set(wa_eff[:c])
                     .at[1, :c].set(wm_eff[0, :c])
                     .at[2, :c].set(wm_eff[1, :c]))
    wpre8 = jnp.zeros((8, c_pad), jnp.float32)
    wpre8 = (wpre8.at[0, :c].set(wa_eff[c:])
                   .at[1, :c].set(wm_eff[0, c:])
                   .at[2, :c].set(wm_eff[1, c:]))
    bvec = jnp.stack([a_bias, m_bias[0], m_bias[1],
                      jnp.zeros((), jnp.float32)]).astype(jnp.float32)

    # Channels-first flattened point features (c_pad, bn*n); column = b*n + p.
    x_cf = jnp.swapaxes(x, 0, 1).reshape(c, bn * n).astype(jnp.float32)
    if c_pad != c:
        x_cf = jnp.pad(x_cf, ((0, c_pad - c), (0, 0)))

    batch_offset = jnp.arange(bn, dtype=adj.dtype) * n
    tmp_adj = (adj + batch_offset[:, None, None]).reshape(bn * n, k)
    flatten_cur = (cur + batch_offset[:, None, None]).reshape(-1)

    def pad_lanes(a):
        if lane_pad == 0:
            return a
        pads = [(0, 0)] * (a.ndim - 1) + [(0, lane_pad)]
        return jnp.pad(a, pads)

    pre = jnp.take(x_cf, flatten_cur, axis=1)              # (c_pad, rows)
    cur_feat = jnp.zeros((c_pad, rows), jnp.float32)
    mlog = None
    curves = []
    for step in range(curve_length):
        if step > 0:
            # Momentum blend; replicates torch softmax + .view(bn,1,cn,2) quirk.
            mlog_b = mlog.reshape(2, bn, curve_num).transpose(1, 0, 2)
            att = jax.nn.softmax(mlog_b, axis=1).reshape(bn, curve_num, 2)
            w_cur = att[..., 0].reshape(rows)
            w_pre = att[..., 1].reshape(rows)
            pre = cur_feat * w_cur[None, :] + pre * w_pre[None, :]

        # TODO(synk): this gather + relayout could move inside the kernel
        # (x_cf resident in VMEM, indices via scalar prefetch) to cut the
        # dominant per-step HBM traffic; kept in XLA for lowering safety.
        pick_idx = jnp.take(tmp_adj, flatten_cur, axis=0)                # (rows, k)
        pick_cols = jnp.take(x_cf, pick_idx.T.reshape(-1), axis=1)       # (c_pad, k*rows)
        pick_k = jnp.moveaxis(pick_cols.reshape(c_pad, k, rows), 1, 0)   # (k, c_pad, rows)

        cur_new, misc = _walk_step_pallas(
            pad_lanes(pick_k), pad_lanes(pre), pad_lanes(cur_feat),
            wpick8, wpre8, bvec, apply_crossover=(step > 0), tr=tr)

        cur_feat = cur_new[:, :rows]
        mlog = misc[1:3, :rows]
        sel_r = misc[0, :rows].astype(pick_idx.dtype)
        flatten_cur = jnp.take_along_axis(pick_idx, sel_r[:, None], axis=1)[:, 0]
        curves.append(cur_feat[:c, :])

    out = jnp.stack(curves, axis=-1)                       # (c, rows, L)
    out = out.reshape(c, bn, curve_num, curve_length)
    return jnp.transpose(out, (1, 0, 2, 3))                # (bn, c, cn, L)


# ----------------------------------------------------------------------------
# Pure-jnp transcription of Walk.forward (validation reference).
# ----------------------------------------------------------------------------
def walk_reference(xyz, x, adj, cur, params, *, k, curve_num, curve_length):
    del xyz
    hi = jax.lax.Precision.HIGHEST   # torch computes these in full f32
    wa_eff, a_bias, wm_eff, m_bias = params
    bn, c, n = x.shape
    rows = bn * curve_num
    flatten_x = jnp.swapaxes(x, 1, 2).reshape(bn * n, c)
    batch_offset = jnp.arange(bn, dtype=adj.dtype) * n
    tmp_adj = (adj + batch_offset[:, None, None]).reshape(bn * n, k)
    flatten_cur = (cur + batch_offset[:, None, None]).reshape(-1)

    curves = []
    cur_feature = None
    cur_feature_cos = None
    pre_feature = None
    for step in range(curve_length):
        if step == 0:
            starting = flatten_x[flatten_cur]                          # (rows, c)
            pre_feature = jnp.transpose(
                starting.reshape(bn, curve_num, c, 1), (0, 2, 1, 3))   # (bn,c,cn,1)
        else:
            cat1 = jnp.concatenate(
                [cur_feature[..., 0], pre_feature[..., 0]], axis=1)    # (bn,2c,cn)
            mm = jnp.einsum("oc,bcn->bon", wm_eff, cat1,
                            precision=hi) + m_bias[None, :, None]
            att = jax.nn.softmax(mm, axis=1).reshape(bn, 1, curve_num, 2)
            cat4 = jnp.concatenate([cur_feature, pre_feature], axis=-1)
            pre_feature = jnp.sum(cat4 * att, axis=-1, keepdims=True)
            pre_feature_cos = jnp.transpose(
                pre_feature, (0, 2, 1, 3)).reshape(rows, c)

        pick_idx = tmp_adj[flatten_cur]                                # (rows, k)
        pick_values_flat = flatten_x[pick_idx.reshape(-1)]             # (rows*k, c)
        pick_values_cos = pick_values_flat.reshape(rows, k, c)
        pick_values = pick_values_cos.reshape(bn, curve_num, k, c)
        pick_values_cos = jnp.swapaxes(pick_values_cos, 1, 2)          # (rows,c,k)
        pick_values = jnp.transpose(pick_values, (0, 3, 1, 2))         # (bn,c,cn,k)

        pre_exp = jnp.broadcast_to(pre_feature, pick_values.shape)
        cat_pk = jnp.concatenate([pick_values, pre_exp], axis=1)       # (bn,2c,cn,k)
        logits = jnp.einsum("c,bcnk->bnk", wa_eff, cat_pk,
                            precision=hi)[:, None] + a_bias

        if step != 0:
            u = cur_feature_cos - pre_feature_cos                      # (rows,c)
            v = pick_values_cos - cur_feature_cos[..., None]           # (rows,c,k)
            dot = jnp.einsum("rc,rck->rk", u, v, precision=hi)
            n1 = jnp.linalg.norm(u, axis=1, keepdims=True)
            n2 = jnp.linalg.norm(v, axis=1)
            d = jnp.clip(1.0 + dot / jnp.maximum(n1 * n2, 1e-8), 0.0, 1.0)
            logits = logits * d.reshape(bn, curve_num, k)[:, None]

        ind = jnp.argmax(logits, axis=-1)                              # (bn,1,cn)
        onehot = jax.nn.one_hot(ind, k, dtype=logits.dtype)            # (bn,1,cn,k)
        cur_feature = jnp.sum(pick_values * onehot, axis=-1, keepdims=True)
        cur_feature_cos = jnp.transpose(
            cur_feature, (0, 2, 1, 3)).reshape(rows, c)
        sel = ind.reshape(rows)
        flatten_cur = jnp.take_along_axis(
            pick_idx, sel[:, None].astype(pick_idx.dtype), axis=1)[:, 0]
        curves.append(cur_feature)
    return jnp.concatenate(curves, axis=-1)


# ----------------------------------------------------------------------------
# Deterministic parameter construction (conv weights + eval-mode BN, folded).
# ----------------------------------------------------------------------------
def make_walk_params(key, c, eps=1e-5):
    k1, k2, kb1, kb2 = jax.random.split(key, 4)
    wa_raw = 0.3 * jax.random.normal(k1, (2 * c,), jnp.float32)      # agent Conv2d(2c,1,1)
    wm_raw = 0.3 * jax.random.normal(k2, (2, 2 * c), jnp.float32)    # momentum Conv1d(2c,2,1)

    def bn_params(kk, ch):
        ka, kb, kc_, kd = jax.random.split(kk, 4)
        gamma = 1.0 + 0.1 * jax.random.normal(ka, (ch,), jnp.float32)
        beta = 0.05 * jax.random.normal(kb, (ch,), jnp.float32)
        mean = 0.02 * jax.random.normal(kc_, (ch,), jnp.float32)
        var = 1.0 + 0.1 * jnp.abs(jax.random.normal(kd, (ch,), jnp.float32))
        return gamma, beta, mean, var

    ga, beta_a, mu_a, var_a = bn_params(kb1, 1)
    gm, beta_m, mu_m, var_m = bn_params(kb2, 2)
    sa = ga / jnp.sqrt(var_a + eps)               # (1,)
    wa_eff = sa[0] * wa_raw                       # (2c,)
    a_bias = (beta_a - mu_a * sa)[0]              # scalar
    sm = gm / jnp.sqrt(var_m + eps)               # (2,)
    wm_eff = wm_raw * sm[:, None]                 # (2, 2c)
    m_bias = beta_m - mu_m * sm                   # (2,)
    return wa_eff, a_bias, wm_eff, m_bias


if __name__ == "__main__":
    # Walk(in_channel=32, k=8, curve_num=64, curve_length=4); bn=2, n=128.
    BN_, C, N, K, CURVE_NUM, CURVE_LEN = 2, 32, 128, 8, 64, 4

    key = jax.random.PRNGKey(0)
    kx, kxyz, kcur, kp = jax.random.split(key, 4)
    x = jax.random.normal(kx, (BN_, C, N), jnp.float32)       # point features
    xyz = jax.random.normal(kxyz, (BN_, 3, N), jnp.float32)   # coordinates
    # kNN adjacency over the coordinates (self included), as in CurveNet.
    pts = jnp.swapaxes(xyz, 1, 2)                                    # (bn, n, 3)
    d2 = jnp.sum((pts[:, :, None, :] - pts[:, None, :, :]) ** 2, axis=-1)
    adj = jax.lax.top_k(-d2, K)[1].astype(jnp.int32)                 # (bn, n, k)
    cur0 = jax.random.randint(kcur, (BN_, CURVE_NUM, 1), 0, N, jnp.int32)
    params = make_walk_params(kp, C)

    fwd = jax.jit(functools.partial(
        walk_forward, k=K, curve_num=CURVE_NUM, curve_length=CURVE_LEN))
    ref_fn = jax.jit(functools.partial(
        walk_reference, k=K, curve_num=CURVE_NUM, curve_length=CURVE_LEN))

    out = jax.block_until_ready(fwd(xyz, x, adj, cur0, params))
    ref = jax.block_until_ready(ref_fn(xyz, x, adj, cur0, params))

    assert out.shape == (BN_, C, CURVE_NUM, CURVE_LEN), out.shape
    assert jnp.allclose(out, ref, rtol=1e-3, atol=1e-3), (
        float(jnp.max(jnp.abs(out - ref))))
    print("KERNEL_OK")
</pallas_src>

<mosaic_0001>
module attributes {stable_mosaic.version = 11 : i64} {
  func.func @_walk_step_kernel(%arg0: i32, %arg1: memref<8x32x128xf32, #tpu.memory_space<vmem>>, %arg2: memref<32x128xf32, #tpu.memory_space<vmem>>, %arg3: memref<32x128xf32, #tpu.memory_space<vmem>>, %arg4: memref<8x32xf32, #tpu.memory_space<vmem>>, %arg5: memref<8x32xf32, #tpu.memory_space<vmem>>, %arg6: memref<4xf32, #tpu.memory_space<smem>>, %arg7: memref<32x128xf32, #tpu.memory_space<vmem>>, %arg8: memref<8x128xf32, #tpu.memory_space<vmem>>) attributes {dimension_semantics = [#tpu.dimension_semantics<parallel>], iteration_bounds = array<i64: 1>, scalar_prefetch = 0 : i64, scratch_operands = 0 : i64, tpu.core_type = #tpu.core_type<tc>, window_params = [{transform_indices = @transform_0, window_bounds = array<i64: 8, 32, 128>}, {transform_indices = @transform_1, window_bounds = array<i64: 32, 128>}, {transform_indices = @transform_2, window_bounds = array<i64: 32, 128>}, {pipeline_mode = #tpu.pipeline_mode<synchronous>, transform_indices = @transform_3, window_bounds = array<i64: 8, 32>}, {pipeline_mode = #tpu.pipeline_mode<synchronous>, transform_indices = @transform_4, window_bounds = array<i64: 8, 32>}, {transform_indices = @transform_5, window_bounds = array<i64: 4>}, {transform_indices = @transform_6, window_bounds = array<i64: 32, 128>}, {transform_indices = @transform_7, window_bounds = array<i64: 8, 128>}]} {
    %c0 = arith.constant 0 : index
    %c0_0 = arith.constant 0 : index
    %0 = vector.load %arg2[%c0, %c0_0] : memref<32x128xf32, #tpu.memory_space<vmem>>, vector<32x128xf32>
    %c0_1 = arith.constant 0 : index
    %c0_2 = arith.constant 0 : index
    %1 = vector.load %arg4[%c0_1, %c0_2] : memref<8x32xf32, #tpu.memory_space<vmem>>, vector<8x32xf32>
    %c0_3 = arith.constant 0 : index
    %c0_4 = arith.constant 0 : index
    %2 = vector.load %arg5[%c0_3, %c0_4] : memref<8x32xf32, #tpu.memory_space<vmem>>, vector<8x32xf32>
    %cst = arith.constant dense<0.000000e+00> : vector<8x128xf32>
    %3 = tpu.matmul %2, %0, %cst {dimension_numbers = #tpu.dot_dimension_numbers<[1], [0], [0], [1], [0, 0, 1, 1], [], []>} : vector<8x32xf32>, vector<32x128xf32>, vector<8x128xf32> -> vector<8x128xf32>
    %4 = vector.extract_strided_slice %3 {offsets = [0, 0], sizes = [1, 128], strides = [1, 1]} : vector<8x128xf32> to vector<1x128xf32>
    %c0_5 = arith.constant 0 : index
    %5 = memref.load %arg6[%c0_5] : memref<4xf32, #tpu.memory_space<smem>>
    %6 = vector.broadcast %5 : f32 to vector<1x128xf32>
    %7 = arith.addf %4, %6 : vector<1x128xf32>
    %cst_6 = arith.constant 0xFF800000 : f32
    %8 = vector.broadcast %cst_6 : f32 to vector<1x128xf32>
    %c0_i32 = arith.constant 0 : i32
    %9 = vector.broadcast %c0_i32 : i32 to vector<1x128xi32>
    %cst_7 = arith.constant 0.000000e+00 : f32
    %10 = vector.broadcast %cst_7 : f32 to vector<32x128xf32>
    %cst_8 = arith.constant 0.000000e+00 : f32
    %11 = vector.broadcast %cst_8 : f32 to vector<2x128xf32>
    %c0_9 = arith.constant 0 : index
    %c0_10 = arith.constant 0 : index
    %c0_11 = arith.constant 0 : index
    %12 = vector.load %arg1[%c0_9, %c0_10, %c0_11] : memref<8x32x128xf32, #tpu.memory_space<vmem>>, vector<1x32x128xf32>
    %13 = vector.shape_cast %12 : vector<1x32x128xf32> to vector<32x128xf32>
    %cst_12 = arith.constant dense<0.000000e+00> : vector<8x128xf32>
    %14 = tpu.matmul %1, %13, %cst_12 {dimension_numbers = #tpu.dot_dimension_numbers<[1], [0], [0], [1], [0, 0, 1, 1], [], []>} : vector<8x32xf32>, vector<32x128xf32>, vector<8x128xf32> -> vector<8x128xf32>
    %15 = vector.extract_strided_slice %14 {offsets = [0, 0], sizes = [1, 128], strides = [1, 1]} : vector<8x128xf32> to vector<1x128xf32>
    %16 = arith.addf %15, %7 : vector<1x128xf32>
    %17 = arith.cmpf ogt, %16, %8 : vector<1x128xf32>
    %18 = arith.select %17, %16, %8 : vector<1x128xi1>, vector<1x128xf32>
    %c0_i32_13 = arith.constant 0 : i32
    %19 = vector.broadcast %c0_i32_13 : i32 to vector<1x128xi32>
    %20 = arith.select %17, %19, %9 : vector<1x128xi1>, vector<1x128xi32>
    %21 = vector.shape_cast %17 : vector<1x128xi1> to vector<1x128xi1>
    %22 = vector.broadcast %21 : vector<1x128xi1> to vector<32x128xi1>
    %23 = arith.select %22, %13, %10 : vector<32x128xi1>, vector<32x128xf32>
    %24 = vector.extract_strided_slice %14 {offsets = [1, 0], sizes = [2, 128], strides = [1, 1]} : vector<8x128xf32> to vector<2x128xf32>
    %25 = vector.shape_cast %17 : vector<1x128xi1> to vector<1x128xi1>
    %26 = vector.broadcast %25 : vector<1x128xi1> to vector<2x128xi1>
    %27 = arith.select %26, %24, %11 : vector<2x128xi1>, vector<2x128xf32>
    %c1 = arith.constant 1 : index
    %c0_14 = arith.constant 0 : index
    %c0_15 = arith.constant 0 : index
    %28 = vector.load %arg1[%c1, %c0_14, %c0_15] : memref<8x32x128xf32, #tpu.memory_space<vmem>>, vector<1x32x128xf32>
    %29 = vector.shape_cast %28 : vector<1x32x128xf32> to vector<32x128xf32>
    %cst_16 = arith.constant dense<0.000000e+00> : vector<8x128xf32>
    %30 = tpu.matmul %1, %29, %cst_16 {dimension_numbers = #tpu.dot_dimension_numbers<[1], [0], [0], [1], [0, 0, 1, 1], [], []>} : vector<8x32xf32>, vector<32x128xf32>, vector<8x128xf32> -> vector<8x128xf32>
    %31 = vector.extract_strided_slice %30 {offsets = [0, 0], sizes = [1, 128], strides = [1, 1]} : vector<8x128xf32> to vector<1x128xf32>
    %32 = arith.addf %31, %7 : vector<1x128xf32>
    %33 = arith.cmpf ogt, %32, %18 : vector<1x128xf32>
    %34 = arith.select %33, %32, %18 : vector<1x128xi1>, vector<1x128xf32>
    %c1_i32 = arith.constant 1 : i32
    %35 = vector.broadcast %c1_i32 : i32 to vector<1x128xi32>
    %36 = arith.select %33, %35, %20 : vector<1x128xi1>, vector<1x128xi32>
    %37 = vector.shape_cast %33 : vector<1x128xi1> to vector<1x128xi1>
    %38 = vector.broadcast %37 : vector<1x128xi1> to vector<32x128xi1>
    %39 = arith.select %38, %29, %23 : vector<32x128xi1>, vector<32x128xf32>
    %40 = vector.extract_strided_slice %30 {offsets = [1, 0], sizes = [2, 128], strides = [1, 1]} : vector<8x128xf32> to vector<2x128xf32>
    %41 = vector.shape_cast %33 : vector<1x128xi1> to vector<1x128xi1>
    %42 = vector.broadcast %41 : vector<1x128xi1> to vector<2x128xi1>
    %43 = arith.select %42, %40, %27 : vector<2x128xi1>, vector<2x128xf32>
    %c2 = arith.constant 2 : index
    %c0_17 = arith.constant 0 : index
    %c0_18 = arith.constant 0 : index
    %44 = vector.load %arg1[%c2, %c0_17, %c0_18] : memref<8x32x128xf32, #tpu.memory_space<vmem>>, vector<1x32x128xf32>
    %45 = vector.shape_cast %44 : vector<1x32x128xf32> to vector<32x128xf32>
    %cst_19 = arith.constant dense<0.000000e+00> : vector<8x128xf32>
    %46 = tpu.matmul %1, %45, %cst_19 {dimension_numbers = #tpu.dot_dimension_numbers<[1], [0], [0], [1], [0, 0, 1, 1], [], []>} : vector<8x32xf32>, vector<32x128xf32>, vector<8x128xf32> -> vector<8x128xf32>
    %47 = vector.extract_strided_slice %46 {offsets = [0, 0], sizes = [1, 128], strides = [1, 1]} : vector<8x128xf32> to vector<1x128xf32>
    %48 = arith.addf %47, %7 : vector<1x128xf32>
    %49 = arith.cmpf ogt, %48, %34 : vector<1x128xf32>
    %50 = arith.select %49, %48, %34 : vector<1x128xi1>, vector<1x128xf32>
    %c2_i32 = arith.constant 2 : i32
    %51 = vector.broadcast %c2_i32 : i32 to vector<1x128xi32>
    %52 = arith.select %49, %51, %36 : vector<1x128xi1>, vector<1x128xi32>
    %53 = vector.shape_cast %49 : vector<1x128xi1> to vector<1x128xi1>
    %54 = vector.broadcast %53 : vector<1x128xi1> to vector<32x128xi1>
    %55 = arith.select %54, %45, %39 : vector<32x128xi1>, vector<32x128xf32>
    %56 = vector.extract_strided_slice %46 {offsets = [1, 0], sizes = [2, 128], strides = [1, 1]} : vector<8x128xf32> to vector<2x128xf32>
    %57 = vector.shape_cast %49 : vector<1x128xi1> to vector<1x128xi1>
    %58 = vector.broadcast %57 : vector<1x128xi1> to vector<2x128xi1>
    %59 = arith.select %58, %56, %43 : vector<2x128xi1>, vector<2x128xf32>
    %c3 = arith.constant 3 : index
    %c0_20 = arith.constant 0 : index
    %c0_21 = arith.constant 0 : index
    %60 = vector.load %arg1[%c3, %c0_20, %c0_21] : memref<8x32x128xf32, #tpu.memory_space<vmem>>, vector<1x32x128xf32>
    %61 = vector.shape_cast %60 : vector<1x32x128xf32> to vector<32x128xf32>
    %cst_22 = arith.constant dense<0.000000e+00> : vector<8x128xf32>
    %62 = tpu.matmul %1, %61, %cst_22 {dimension_numbers = #tpu.dot_dimension_numbers<[1], [0], [0], [1], [0, 0, 1, 1], [], []>} : vector<8x32xf32>, vector<32x128xf32>, vector<8x128xf32> -> vector<8x128xf32>
    %63 = vector.extract_strided_slice %62 {offsets = [0, 0], sizes = [1, 128], strides = [1, 1]} : vector<8x128xf32> to vector<1x128xf32>
    %64 = arith.addf %63, %7 : vector<1x128xf32>
    %65 = arith.cmpf ogt, %64, %50 : vector<1x128xf32>
    %66 = arith.select %65, %64, %50 : vector<1x128xi1>, vector<1x128xf32>
    %c3_i32 = arith.constant 3 : i32
    %67 = vector.broadcast %c3_i32 : i32 to vector<1x128xi32>
    %68 = arith.select %65, %67, %52 : vector<1x128xi1>, vector<1x128xi32>
    %69 = vector.shape_cast %65 : vector<1x128xi1> to vector<1x128xi1>
    %70 = vector.broadcast %69 : vector<1x128xi1> to vector<32x128xi1>
    %71 = arith.select %70, %61, %55 : vector<32x128xi1>, vector<32x128xf32>
    %72 = vector.extract_strided_slice %62 {offsets = [1, 0], sizes = [2, 128], strides = [1, 1]} : vector<8x128xf32> to vector<2x128xf32>
    %73 = vector.shape_cast %65 : vector<1x128xi1> to vector<1x128xi1>
    %74 = vector.broadcast %73 : vector<1x128xi1> to vector<2x128xi1>
    %75 = arith.select %74, %72, %59 : vector<2x128xi1>, vector<2x128xf32>
    %c4 = arith.constant 4 : index
    %c0_23 = arith.constant 0 : index
    %c0_24 = arith.constant 0 : index
    %76 = vector.load %arg1[%c4, %c0_23, %c0_24] : memref<8x32x128xf32, #tpu.memory_space<vmem>>, vector<1x32x128xf32>
    %77 = vector.shape_cast %76 : vector<1x32x128xf32> to vector<32x128xf32>
    %cst_25 = arith.constant dense<0.000000e+00> : vector<8x128xf32>
    %78 = tpu.matmul %1, %77, %cst_25 {dimension_numbers = #tpu.dot_dimension_numbers<[1], [0], [0], [1], [0, 0, 1, 1], [], []>} : vector<8x32xf32>, vector<32x128xf32>, vector<8x128xf32> -> vector<8x128xf32>
    %79 = vector.extract_strided_slice %78 {offsets = [0, 0], sizes = [1, 128], strides = [1, 1]} : vector<8x128xf32> to vector<1x128xf32>
    %80 = arith.addf %79, %7 : vector<1x128xf32>
    %81 = arith.cmpf ogt, %80, %66 : vector<1x128xf32>
    %82 = arith.select %81, %80, %66 : vector<1x128xi1>, vector<1x128xf32>
    %c4_i32 = arith.constant 4 : i32
    %83 = vector.broadcast %c4_i32 : i32 to vector<1x128xi32>
    %84 = arith.select %81, %83, %68 : vector<1x128xi1>, vector<1x128xi32>
    %85 = vector.shape_cast %81 : vector<1x128xi1> to vector<1x128xi1>
    %86 = vector.broadcast %85 : vector<1x128xi1> to vector<32x128xi1>
    %87 = arith.select %86, %77, %71 : vector<32x128xi1>, vector<32x128xf32>
    %88 = vector.extract_strided_slice %78 {offsets = [1, 0], sizes = [2, 128], strides = [1, 1]} : vector<8x128xf32> to vector<2x128xf32>
    %89 = vector.shape_cast %81 : vector<1x128xi1> to vector<1x128xi1>
    %90 = vector.broadcast %89 : vector<1x128xi1> to vector<2x128xi1>
    %91 = arith.select %90, %88, %75 : vector<2x128xi1>, vector<2x128xf32>
    %c5 = arith.constant 5 : index
    %c0_26 = arith.constant 0 : index
    %c0_27 = arith.constant 0 : index
    %92 = vector.load %arg1[%c5, %c0_26, %c0_27] : memref<8x32x128xf32, #tpu.memory_space<vmem>>, vector<1x32x128xf32>
    %93 = vector.shape_cast %92 : vector<1x32x128xf32> to vector<32x128xf32>
    %cst_28 = arith.constant dense<0.000000e+00> : vector<8x128xf32>
    %94 = tpu.matmul %1, %93, %cst_28 {dimension_numbers = #tpu.dot_dimension_numbers<[1], [0], [0], [1], [0, 0, 1, 1], [], []>} : vector<8x32xf32>, vector<32x128xf32>, vector<8x128xf32> -> vector<8x128xf32>
    %95 = vector.extract_strided_slice %94 {offsets = [0, 0], sizes = [1, 128], strides = [1, 1]} : vector<8x128xf32> to vector<1x128xf32>
    %96 = arith.addf %95, %7 : vector<1x128xf32>
    %97 = arith.cmpf ogt, %96, %82 : vector<1x128xf32>
    %98 = arith.select %97, %96, %82 : vector<1x128xi1>, vector<1x128xf32>
    %c5_i32 = arith.constant 5 : i32
    %99 = vector.broadcast %c5_i32 : i32 to vector<1x128xi32>
    %100 = arith.select %97, %99, %84 : vector<1x128xi1>, vector<1x128xi32>
    %101 = vector.shape_cast %97 : vector<1x128xi1> to vector<1x128xi1>
    %102 = vector.broadcast %101 : vector<1x128xi1> to vector<32x128xi1>
    %103 = arith.select %102, %93, %87 : vector<32x128xi1>, vector<32x128xf32>
    %104 = vector.extract_strided_slice %94 {offsets = [1, 0], sizes = [2, 128], strides = [1, 1]} : vector<8x128xf32> to vector<2x128xf32>
    %105 = vector.shape_cast %97 : vector<1x128xi1> to vector<1x128xi1>
    %106 = vector.broadcast %105 : vector<1x128xi1> to vector<2x128xi1>
    %107 = arith.select %106, %104, %91 : vector<2x128xi1>, vector<2x128xf32>
    %c6 = arith.constant 6 : index
    %c0_29 = arith.constant 0 : index
    %c0_30 = arith.constant 0 : index
    %108 = vector.load %arg1[%c6, %c0_29, %c0_30] : memref<8x32x128xf32, #tpu.memory_space<vmem>>, vector<1x32x128xf32>
    %109 = vector.shape_cast %108 : vector<1x32x128xf32> to vector<32x128xf32>
    %cst_31 = arith.constant dense<0.000000e+00> : vector<8x128xf32>
    %110 = tpu.matmul %1, %109, %cst_31 {dimension_numbers = #tpu.dot_dimension_numbers<[1], [0], [0], [1], [0, 0, 1, 1], [], []>} : vector<8x32xf32>, vector<32x128xf32>, vector<8x128xf32> -> vector<8x128xf32>
    %111 = vector.extract_strided_slice %110 {offsets = [0, 0], sizes = [1, 128], strides = [1, 1]} : vector<8x128xf32> to vector<1x128xf32>
    %112 = arith.addf %111, %7 : vector<1x128xf32>
    %113 = arith.cmpf ogt, %112, %98 : vector<1x128xf32>
    %114 = arith.select %113, %112, %98 : vector<1x128xi1>, vector<1x128xf32>
    %c6_i32 = arith.constant 6 : i32
    %115 = vector.broadcast %c6_i32 : i32 to vector<1x128xi32>
    %116 = arith.select %113, %115, %100 : vector<1x128xi1>, vector<1x128xi32>
    %117 = vector.shape_cast %113 : vector<1x128xi1> to vector<1x128xi1>
    %118 = vector.broadcast %117 : vector<1x128xi1> to vector<32x128xi1>
    %119 = arith.select %118, %109, %103 : vector<32x128xi1>, vector<32x128xf32>
    %120 = vector.extract_strided_slice %110 {offsets = [1, 0], sizes = [2, 128], strides = [1, 1]} : vector<8x128xf32> to vector<2x128xf32>
    %121 = vector.shape_cast %113 : vector<1x128xi1> to vector<1x128xi1>
    %122 = vector.broadcast %121 : vector<1x128xi1> to vector<2x128xi1>
    %123 = arith.select %122, %120, %107 : vector<2x128xi1>, vector<2x128xf32>
    %c7 = arith.constant 7 : index
    %c0_32 = arith.constant 0 : index
    %c0_33 = arith.constant 0 : index
    %124 = vector.load %arg1[%c7, %c0_32, %c0_33] : memref<8x32x128xf32, #tpu.memory_space<vmem>>, vector<1x32x128xf32>
    %125 = vector.shape_cast %124 : vector<1x32x128xf32> to vector<32x128xf32>
    %cst_34 = arith.constant dense<0.000000e+00> : vector<8x128xf32>
    %126 = tpu.matmul %1, %125, %cst_34 {dimension_numbers = #tpu.dot_dimension_numbers<[1], [0], [0], [1], [0, 0, 1, 1], [], []>} : vector<8x32xf32>, vector<32x128xf32>, vector<8x128xf32> -> vector<8x128xf32>
    %127 = vector.extract_strided_slice %126 {offsets = [0, 0], sizes = [1, 128], strides = [1, 1]} : vector<8x128xf32> to vector<1x128xf32>
    %128 = arith.addf %127, %7 : vector<1x128xf32>
    %129 = arith.cmpf ogt, %128, %114 : vector<1x128xf32>
    %c7_i32 = arith.constant 7 : i32
    %130 = vector.broadcast %c7_i32 : i32 to vector<1x128xi32>
    %131 = arith.select %129, %130, %116 : vector<1x128xi1>, vector<1x128xi32>
    %132 = vector.shape_cast %129 : vector<1x128xi1> to vector<1x128xi1>
    %133 = vector.broadcast %132 : vector<1x128xi1> to vector<32x128xi1>
    %134 = arith.select %133, %125, %119 : vector<32x128xi1>, vector<32x128xf32>
    %135 = vector.extract_strided_slice %126 {offsets = [1, 0], sizes = [2, 128], strides = [1, 1]} : vector<8x128xf32> to vector<2x128xf32>
    %136 = vector.shape_cast %129 : vector<1x128xi1> to vector<1x128xi1>
    %137 = vector.broadcast %136 : vector<1x128xi1> to vector<2x128xi1>
    %138 = arith.select %137, %135, %123 : vector<2x128xi1>, vector<2x128xf32>
    %c0_35 = arith.constant 0 : index
    %c0_36 = arith.constant 0 : index
    %139 = vector.load %arg7[%c0_35, %c0_36] : memref<32x128xf32, #tpu.memory_space<vmem>>, vector<32x128xf32>
    tpu.vector_store %arg7[%c0_35, %c0_36], %134 {strides = array<i32>} : memref<32x128xf32, #tpu.memory_space<vmem>>, vector<32x128xf32>,
    %140 = arith.sitofp %131 : vector<1x128xi32> to vector<1x128xf32>
    %c0_37 = arith.constant 0 : index
    %c0_38 = arith.constant 0 : index
    %141 = vector.load %arg8[%c0_37, %c0_38] : memref<8x128xf32, #tpu.memory_space<vmem>>, vector<1x128xf32>
    tpu.vector_store %arg8[%c0_37, %c0_38], %140 {strides = array<i32>} : memref<8x128xf32, #tpu.memory_space<vmem>>, vector<1x128xf32>,
    %142 = vector.extract_strided_slice %138 {offsets = [0, 0], sizes = [1, 128], strides = [1, 1]} : vector<2x128xf32> to vector<1x128xf32>
    %143 = vector.extract_strided_slice %3 {offsets = [1, 0], sizes = [1, 128], strides = [1, 1]} : vector<8x128xf32> to vector<1x128xf32>
    %144 = arith.addf %142, %143 : vector<1x128xf32>
    %c1_39 = arith.constant 1 : index
    %145 = memref.load %arg6[%c1_39] : memref<4xf32, #tpu.memory_space<smem>>
    %146 = vector.broadcast %145 : f32 to vector<1x128xf32>
    %147 = arith.addf %144, %146 : vector<1x128xf32>
    %c1_40 = arith.constant 1 : index
    %c0_41 = arith.constant 0 : index
    %148 = vector.load %arg8[%c1_40, %c0_41] : memref<8x128xf32, #tpu.memory_space<vmem>>, vector<1x128xf32>
    tpu.vector_store %arg8[%c1_40, %c0_41], %147 {strides = array<i32>} : memref<8x128xf32, #tpu.memory_space<vmem>>, vector<1x128xf32>,
    %149 = vector.extract_strided_slice %138 {offsets = [1, 0], sizes = [1, 128], strides = [1, 1]} : vector<2x128xf32> to vector<1x128xf32>
    %150 = vector.extract_strided_slice %3 {offsets = [2, 0], sizes = [1, 128], strides = [1, 1]} : vector<8x128xf32> to vector<1x128xf32>
    %151 = arith.addf %149, %150 : vector<1x128xf32>
    %c2_42 = arith.constant 2 : index
    %152 = memref.load %arg6[%c2_42] : memref<4xf32, #tpu.memory_space<smem>>
    %153 = vector.broadcast %152 : f32 to vector<1x128xf32>
    %154 = arith.addf %151, %153 : vector<1x128xf32>
    %c2_43 = arith.constant 2 : index
    %c0_44 = arith.constant 0 : index
    %155 = vector.load %arg8[%c2_43, %c0_44] : memref<8x128xf32, #tpu.memory_space<vmem>>, vector<1x128xf32>
    tpu.vector_store %arg8[%c2_43, %c0_44], %154 {strides = array<i32>} : memref<8x128xf32, #tpu.memory_space<vmem>>, vector<1x128xf32>,
    %cst_45 = arith.constant 0.000000e+00 : f32
    %156 = vector.broadcast %cst_45 : f32 to vector<5x128xf32>
    %c3_46 = arith.constant 3 : index
    %c0_47 = arith.constant 0 : index
    %157 = vector.load %arg8[%c3_46, %c0_47] : memref<8x128xf32, #tpu.memory_space<vmem>>, vector<5x128xf32>
    tpu.vector_store %arg8[%c3_46, %c0_47], %156 {strides = array<i32>} : memref<8x128xf32, #tpu.memory_space<vmem>>, vector<5x128xf32>,
    return
  }
  func.func @transform_0(%arg0: i32) -> (i32, i32, i32) {
    %c0_i32 = arith.constant 0 : i32
    %c0_i32_0 = arith.constant 0 : i32
    %c0_i32_1 = arith.constant 0 : i32
    return %c0_i32, %c0_i32_0, %arg0 : i32, i32, i32
  }
  func.func @transform_1(%arg0: i32) -> (i32, i32) {
    %c0_i32 = arith.constant 0 : i32
    %c0_i32_0 = arith.constant 0 : i32
    return %c0_i32, %arg0 : i32, i32
  }
  func.func @transform_2(%arg0: i32) -> (i32, i32) {
    %c0_i32 = arith.constant 0 : i32
    %c0_i32_0 = arith.constant 0 : i32
    return %c0_i32, %arg0 : i32, i32
  }
  func.func @transform_3(%arg0: i32) -> (i32, i32) {
    %c0_i32 = arith.constant 0 : i32
    %c0_i32_0 = arith.constant 0 : i32
    %c0_i32_1 = arith.constant 0 : i32
    return %c0_i32, %c0_i32_0 : i32, i32
  }
  func.func @transform_4(%arg0: i32) -> (i32, i32) {
    %c0_i32 = arith.constant 0 : i32
    %c0_i32_0 = arith.constant 0 : i32
    %c0_i32_1 = arith.constant 0 : i32
    return %c0_i32, %c0_i32_0 : i32, i32
  }
  func.func @transform_5(%arg0: i32) -> i32 {
    %c0_i32 = arith.constant 0 : i32
    %c0_i32_0 = arith.constant 0 : i32
    return %c0_i32 : i32
  }
  func.func @transform_6(%arg0: i32) -> (i32, i32) {
    %c0_i32 = arith.constant 0 : i32
    %c0_i32_0 = arith.constant 0 : i32
    return %c0_i32, %arg0 : i32, i32
  }
  func.func @transform_7(%arg0: i32) -> (i32, i32) {
    %c0_i32 = arith.constant 0 : i32
    %c0_i32_0 = arith.constant 0 : i32
    return %c0_i32, %arg0 : i32, i32
  }
}

module attributes {stable_mosaic.version = 11 : i64} {
  func.func @_walk_step_kernel(%arg0: i32, %arg1: memref<8x32x128xf32, #tpu.memory_space<vmem>>, %arg2: memref<32x128xf32, #tpu.memory_space<vmem>>, %arg3: memref<32x128xf32, #tpu.memory_space<vmem>>, %arg4: memref<8x32xf32, #tpu.memory_space<vmem>>, %arg5: memref<8x32xf32, #tpu.memory_space<vmem>>, %arg6: memref<4xf32, #tpu.memory_space<smem>>, %arg7: memref<32x128xf32, #tpu.memory_space<vmem>>, %arg8: memref<8x128xf32, #tpu.memory_space<vmem>>) attributes {dimension_semantics = [#tpu.dimension_semantics<parallel>], iteration_bounds = array<i64: 1>, scalar_prefetch = 0 : i64, scratch_operands = 0 : i64, tpu.core_type = #tpu.core_type<tc>, window_params = [{transform_indices = @transform_0, window_bounds = array<i64: 8, 32, 128>}, {transform_indices = @transform_1, window_bounds = array<i64: 32, 128>}, {transform_indices = @transform_2, window_bounds = array<i64: 32, 128>}, {pipeline_mode = #tpu.pipeline_mode<synchronous>, transform_indices = @transform_3, window_bounds = array<i64: 8, 32>}, {pipeline_mode = #tpu.pipeline_mode<synchronous>, transform_indices = @transform_4, window_bounds = array<i64: 8, 32>}, {transform_indices = @transform_5, window_bounds = array<i64: 4>}, {transform_indices = @transform_6, window_bounds = array<i64: 32, 128>}, {transform_indices = @transform_7, window_bounds = array<i64: 8, 128>}]} {
    %c0 = arith.constant 0 : index
    %c0_0 = arith.constant 0 : index
    %0 = vector.load %arg2[%c0, %c0_0] : memref<32x128xf32, #tpu.memory_space<vmem>>, vector<32x128xf32>
    %c0_1 = arith.constant 0 : index
    %c0_2 = arith.constant 0 : index
    %1 = vector.load %arg4[%c0_1, %c0_2] : memref<8x32xf32, #tpu.memory_space<vmem>>, vector<8x32xf32>
    %c0_3 = arith.constant 0 : index
    %c0_4 = arith.constant 0 : index
    %2 = vector.load %arg5[%c0_3, %c0_4] : memref<8x32xf32, #tpu.memory_space<vmem>>, vector<8x32xf32>
    %cst = arith.constant dense<0.000000e+00> : vector<8x128xf32>
    %3 = tpu.matmul %2, %0, %cst {dimension_numbers = #tpu.dot_dimension_numbers<[1], [0], [0], [1], [0, 0, 1, 1], [], []>} : vector<8x32xf32>, vector<32x128xf32>, vector<8x128xf32> -> vector<8x128xf32>
    %4 = vector.extract_strided_slice %3 {offsets = [0, 0], sizes = [1, 128], strides = [1, 1]} : vector<8x128xf32> to vector<1x128xf32>
    %c0_5 = arith.constant 0 : index
    %5 = memref.load %arg6[%c0_5] : memref<4xf32, #tpu.memory_space<smem>>
    %6 = vector.broadcast %5 : f32 to vector<1x128xf32>
    %7 = arith.addf %4, %6 : vector<1x128xf32>
    %c0_6 = arith.constant 0 : index
    %c0_7 = arith.constant 0 : index
    %8 = vector.load %arg3[%c0_6, %c0_7] : memref<32x128xf32, #tpu.memory_space<vmem>>, vector<32x128xf32>
    %9 = arith.subf %8, %0 : vector<32x128xf32>
    %10 = arith.mulf %9, %9 : vector<32x128xf32>
    %cst_8 = arith.constant dense<0.000000e+00> : vector<128xf32>
    %11 = vector.multi_reduction <add>, %10, %cst_8 [0] : vector<32x128xf32> to vector<128xf32>
    %12 = vector.shape_cast %11 : vector<128xf32> to vector<1x128xf32>
    %cst_9 = arith.constant 0xFF800000 : f32
    %13 = vector.broadcast %cst_9 : f32 to vector<1x128xf32>
    %c0_i32 = arith.constant 0 : i32
    %14 = vector.broadcast %c0_i32 : i32 to vector<1x128xi32>
    %cst_10 = arith.constant 0.000000e+00 : f32
    %15 = vector.broadcast %cst_10 : f32 to vector<32x128xf32>
    %cst_11 = arith.constant 0.000000e+00 : f32
    %16 = vector.broadcast %cst_11 : f32 to vector<2x128xf32>
    %c0_12 = arith.constant 0 : index
    %c0_13 = arith.constant 0 : index
    %c0_14 = arith.constant 0 : index
    %17 = vector.load %arg1[%c0_12, %c0_13, %c0_14] : memref<8x32x128xf32, #tpu.memory_space<vmem>>, vector<1x32x128xf32>
    %18 = vector.shape_cast %17 : vector<1x32x128xf32> to vector<32x128xf32>
    %cst_15 = arith.constant dense<0.000000e+00> : vector<8x128xf32>
    %19 = tpu.matmul %1, %18, %cst_15 {dimension_numbers = #tpu.dot_dimension_numbers<[1], [0], [0], [1], [0, 0, 1, 1], [], []>} : vector<8x32xf32>, vector<32x128xf32>, vector<8x128xf32> -> vector<8x128xf32>
    %20 = vector.extract_strided_slice %19 {offsets = [0, 0], sizes = [1, 128], strides = [1, 1]} : vector<8x128xf32> to vector<1x128xf32>
    %21 = arith.addf %20, %7 : vector<1x128xf32>
    %22 = arith.subf %18, %8 : vector<32x128xf32>
    %23 = arith.mulf %9, %22 : vector<32x128xf32>
    %cst_16 = arith.constant dense<0.000000e+00> : vector<128xf32>
    %24 = vector.multi_reduction <add>, %23, %cst_16 [0] : vector<32x128xf32> to vector<128xf32>
    %25 = vector.shape_cast %24 : vector<128xf32> to vector<1x128xf32>
    %26 = arith.mulf %22, %22 : vector<32x128xf32>
    %cst_17 = arith.constant dense<0.000000e+00> : vector<128xf32>
    %27 = vector.multi_reduction <add>, %26, %cst_17 [0] : vector<32x128xf32> to vector<128xf32>
    %28 = vector.shape_cast %27 : vector<128xf32> to vector<1x128xf32>
    %29 = arith.mulf %12, %28 : vector<1x128xf32>
    %cst_18 = arith.constant 1.000000e-16 : f32
    %30 = vector.broadcast %cst_18 : f32 to vector<1x128xf32>
    %31 = arith.maximumf %29, %30 : vector<1x128xf32>
    %32 = math.rsqrt %31 : vector<1x128xf32>
    %33 = arith.mulf %25, %32 : vector<1x128xf32>
    %cst_19 = arith.constant 1.000000e+00 : f32
    %34 = vector.broadcast %cst_19 : f32 to vector<1x128xf32>
    %35 = arith.addf %34, %33 : vector<1x128xf32>
    %cst_20 = arith.constant 0.000000e+00 : f32
    %cst_21 = arith.constant 1.000000e+00 : f32
    %36 = vector.broadcast %cst_20 : f32 to vector<1x128xf32>
    %37 = arith.maximumf %36, %35 : vector<1x128xf32>
    %38 = vector.broadcast %cst_21 : f32 to vector<1x128xf32>
    %39 = arith.minimumf %38, %37 : vector<1x128xf32>
    %40 = arith.mulf %21, %39 : vector<1x128xf32>
    %41 = arith.cmpf ogt, %40, %13 : vector<1x128xf32>
    %42 = arith.select %41, %40, %13 : vector<1x128xi1>, vector<1x128xf32>
    %c0_i32_22 = arith.constant 0 : i32
    %43 = vector.broadcast %c0_i32_22 : i32 to vector<1x128xi32>
    %44 = arith.select %41, %43, %14 : vector<1x128xi1>, vector<1x128xi32>
    %45 = vector.shape_cast %41 : vector<1x128xi1> to vector<1x128xi1>
    %46 = vector.broadcast %45 : vector<1x128xi1> to vector<32x128xi1>
    %47 = arith.select %46, %18, %15 : vector<32x128xi1>, vector<32x128xf32>
    %48 = vector.extract_strided_slice %19 {offsets = [1, 0], sizes = [2, 128], strides = [1, 1]} : vector<8x128xf32> to vector<2x128xf32>
    %49 = vector.shape_cast %41 : vector<1x128xi1> to vector<1x128xi1>
    %50 = vector.broadcast %49 : vector<1x128xi1> to vector<2x128xi1>
    %51 = arith.select %50, %48, %16 : vector<2x128xi1>, vector<2x128xf32>
    %c1 = arith.constant 1 : index
    %c0_23 = arith.constant 0 : index
    %c0_24 = arith.constant 0 : index
    %52 = vector.load %arg1[%c1, %c0_23, %c0_24] : memref<8x32x128xf32, #tpu.memory_space<vmem>>, vector<1x32x128xf32>
    %53 = vector.shape_cast %52 : vector<1x32x128xf32> to vector<32x128xf32>
    %cst_25 = arith.constant dense<0.000000e+00> : vector<8x128xf32>
    %54 = tpu.matmul %1, %53, %cst_25 {dimension_numbers = #tpu.dot_dimension_numbers<[1], [0], [0], [1], [0, 0, 1, 1], [], []>} : vector<8x32xf32>, vector<32x128xf32>, vector<8x128xf32> -> vector<8x128xf32>
    %55 = vector.extract_strided_slice %54 {offsets = [0, 0], sizes = [1, 128], strides = [1, 1]} : vector<8x128xf32> to vector<1x128xf32>
    %56 = arith.addf %55, %7 : vector<1x128xf32>
    %57 = arith.subf %53, %8 : vector<32x128xf32>
    %58 = arith.mulf %9, %57 : vector<32x128xf32>
    %cst_26 = arith.constant dense<0.000000e+00> : vector<128xf32>
    %59 = vector.multi_reduction <add>, %58, %cst_26 [0] : vector<32x128xf32> to vector<128xf32>
    %60 = vector.shape_cast %59 : vector<128xf32> to vector<1x128xf32>
    %61 = arith.mulf %57, %57 : vector<32x128xf32>
    %cst_27 = arith.constant dense<0.000000e+00> : vector<128xf32>
    %62 = vector.multi_reduction <add>, %61, %cst_27 [0] : vector<32x128xf32> to vector<128xf32>
    %63 = vector.shape_cast %62 : vector<128xf32> to vector<1x128xf32>
    %64 = arith.mulf %12, %63 : vector<1x128xf32>
    %cst_28 = arith.constant 1.000000e-16 : f32
    %65 = vector.broadcast %cst_28 : f32 to vector<1x128xf32>
    %66 = arith.maximumf %64, %65 : vector<1x128xf32>
    %67 = math.rsqrt %66 : vector<1x128xf32>
    %68 = arith.mulf %60, %67 : vector<1x128xf32>
    %cst_29 = arith.constant 1.000000e+00 : f32
    %69 = vector.broadcast %cst_29 : f32 to vector<1x128xf32>
    %70 = arith.addf %69, %68 : vector<1x128xf32>
    %cst_30 = arith.constant 0.000000e+00 : f32
    %cst_31 = arith.constant 1.000000e+00 : f32
    %71 = vector.broadcast %cst_30 : f32 to vector<1x128xf32>
    %72 = arith.maximumf %71, %70 : vector<1x128xf32>
    %73 = vector.broadcast %cst_31 : f32 to vector<1x128xf32>
    %74 = arith.minimumf %73, %72 : vector<1x128xf32>
    %75 = arith.mulf %56, %74 : vector<1x128xf32>
    %76 = arith.cmpf ogt, %75, %42 : vector<1x128xf32>
    %77 = arith.select %76, %75, %42 : vector<1x128xi1>, vector<1x128xf32>
    %c1_i32 = arith.constant 1 : i32
    %78 = vector.broadcast %c1_i32 : i32 to vector<1x128xi32>
    %79 = arith.select %76, %78, %44 : vector<1x128xi1>, vector<1x128xi32>
    %80 = vector.shape_cast %76 : vector<1x128xi1> to vector<1x128xi1>
    %81 = vector.broadcast %80 : vector<1x128xi1> to vector<32x128xi1>
    %82 = arith.select %81, %53, %47 : vector<32x128xi1>, vector<32x128xf32>
    %83 = vector.extract_strided_slice %54 {offsets = [1, 0], sizes = [2, 128], strides = [1, 1]} : vector<8x128xf32> to vector<2x128xf32>
    %84 = vector.shape_cast %76 : vector<1x128xi1> to vector<1x128xi1>
    %85 = vector.broadcast %84 : vector<1x128xi1> to vector<2x128xi1>
    %86 = arith.select %85, %83, %51 : vector<2x128xi1>, vector<2x128xf32>
    %c2 = arith.constant 2 : index
    %c0_32 = arith.constant 0 : index
    %c0_33 = arith.constant 0 : index
    %87 = vector.load %arg1[%c2, %c0_32, %c0_33] : memref<8x32x128xf32, #tpu.memory_space<vmem>>, vector<1x32x128xf32>
    %88 = vector.shape_cast %87 : vector<1x32x128xf32> to vector<32x128xf32>
    %cst_34 = arith.constant dense<0.000000e+00> : vector<8x128xf32>
    %89 = tpu.matmul %1, %88, %cst_34 {dimension_numbers = #tpu.dot_dimension_numbers<[1], [0], [0], [1], [0, 0, 1, 1], [], []>} : vector<8x32xf32>, vector<32x128xf32>, vector<8x128xf32> -> vector<8x128xf32>
    %90 = vector.extract_strided_slice %89 {offsets = [0, 0], sizes = [1, 128], strides = [1, 1]} : vector<8x128xf32> to vector<1x128xf32>
    %91 = arith.addf %90, %7 : vector<1x128xf32>
    %92 = arith.subf %88, %8 : vector<32x128xf32>
    %93 = arith.mulf %9, %92 : vector<32x128xf32>
    %cst_35 = arith.constant dense<0.000000e+00> : vector<128xf32>
    %94 = vector.multi_reduction <add>, %93, %cst_35 [0] : vector<32x128xf32> to vector<128xf32>
    %95 = vector.shape_cast %94 : vector<128xf32> to vector<1x128xf32>
    %96 = arith.mulf %92, %92 : vector<32x128xf32>
    %cst_36 = arith.constant dense<0.000000e+00> : vector<128xf32>
    %97 = vector.multi_reduction <add>, %96, %cst_36 [0] : vector<32x128xf32> to vector<128xf32>
    %98 = vector.shape_cast %97 : vector<128xf32> to vector<1x128xf32>
    %99 = arith.mulf %12, %98 : vector<1x128xf32>
    %cst_37 = arith.constant 1.000000e-16 : f32
    %100 = vector.broadcast %cst_37 : f32 to vector<1x128xf32>
    %101 = arith.maximumf %99, %100 : vector<1x128xf32>
    %102 = math.rsqrt %101 : vector<1x128xf32>
    %103 = arith.mulf %95, %102 : vector<1x128xf32>
    %cst_38 = arith.constant 1.000000e+00 : f32
    %104 = vector.broadcast %cst_38 : f32 to vector<1x128xf32>
    %105 = arith.addf %104, %103 : vector<1x128xf32>
    %cst_39 = arith.constant 0.000000e+00 : f32
    %cst_40 = arith.constant 1.000000e+00 : f32
    %106 = vector.broadcast %cst_39 : f32 to vector<1x128xf32>
    %107 = arith.maximumf %106, %105 : vector<1x128xf32>
    %108 = vector.broadcast %cst_40 : f32 to vector<1x128xf32>
    %109 = arith.minimumf %108, %107 : vector<1x128xf32>
    %110 = arith.mulf %91, %109 : vector<1x128xf32>
    %111 = arith.cmpf ogt, %110, %77 : vector<1x128xf32>
    %112 = arith.select %111, %110, %77 : vector<1x128xi1>, vector<1x128xf32>
    %c2_i32 = arith.constant 2 : i32
    %113 = vector.broadcast %c2_i32 : i32 to vector<1x128xi32>
    %114 = arith.select %111, %113, %79 : vector<1x128xi1>, vector<1x128xi32>
    %115 = vector.shape_cast %111 : vector<1x128xi1> to vector<1x128xi1>
    %116 = vector.broadcast %115 : vector<1x128xi1> to vector<32x128xi1>
    %117 = arith.select %116, %88, %82 : vector<32x128xi1>, vector<32x128xf32>
    %118 = vector.extract_strided_slice %89 {offsets = [1, 0], sizes = [2, 128], strides = [1, 1]} : vector<8x128xf32> to vector<2x128xf32>
    %119 = vector.shape_cast %111 : vector<1x128xi1> to vector<1x128xi1>
    %120 = vector.broadcast %119 : vector<1x128xi1> to vector<2x128xi1>
    %121 = arith.select %120, %118, %86 : vector<2x128xi1>, vector<2x128xf32>
    %c3 = arith.constant 3 : index
    %c0_41 = arith.constant 0 : index
    %c0_42 = arith.constant 0 : index
    %122 = vector.load %arg1[%c3, %c0_41, %c0_42] : memref<8x32x128xf32, #tpu.memory_space<vmem>>, vector<1x32x128xf32>
    %123 = vector.shape_cast %122 : vector<1x32x128xf32> to vector<32x128xf32>
    %cst_43 = arith.constant dense<0.000000e+00> : vector<8x128xf32>
    %124 = tpu.matmul %1, %123, %cst_43 {dimension_numbers = #tpu.dot_dimension_numbers<[1], [0], [0], [1], [0, 0, 1, 1], [], []>} : vector<8x32xf32>, vector<32x128xf32>, vector<8x128xf32> -> vector<8x128xf32>
    %125 = vector.extract_strided_slice %124 {offsets = [0, 0], sizes = [1, 128], strides = [1, 1]} : vector<8x128xf32> to vector<1x128xf32>
    %126 = arith.addf %125, %7 : vector<1x128xf32>
    %127 = arith.subf %123, %8 : vector<32x128xf32>
    %128 = arith.mulf %9, %127 : vector<32x128xf32>
    %cst_44 = arith.constant dense<0.000000e+00> : vector<128xf32>
    %129 = vector.multi_reduction <add>, %128, %cst_44 [0] : vector<32x128xf32> to vector<128xf32>
    %130 = vector.shape_cast %129 : vector<128xf32> to vector<1x128xf32>
    %131 = arith.mulf %127, %127 : vector<32x128xf32>
    %cst_45 = arith.constant dense<0.000000e+00> : vector<128xf32>
    %132 = vector.multi_reduction <add>, %131, %cst_45 [0] : vector<32x128xf32> to vector<128xf32>
    %133 = vector.shape_cast %132 : vector<128xf32> to vector<1x128xf32>
    %134 = arith.mulf %12, %133 : vector<1x128xf32>
    %cst_46 = arith.constant 1.000000e-16 : f32
    %135 = vector.broadcast %cst_46 : f32 to vector<1x128xf32>
    %136 = arith.maximumf %134, %135 : vector<1x128xf32>
    %137 = math.rsqrt %136 : vector<1x128xf32>
    %138 = arith.mulf %130, %137 : vector<1x128xf32>
    %cst_47 = arith.constant 1.000000e+00 : f32
    %139 = vector.broadcast %cst_47 : f32 to vector<1x128xf32>
    %140 = arith.addf %139, %138 : vector<1x128xf32>
    %cst_48 = arith.constant 0.000000e+00 : f32
    %cst_49 = arith.constant 1.000000e+00 : f32
    %141 = vector.broadcast %cst_48 : f32 to vector<1x128xf32>
    %142 = arith.maximumf %141, %140 : vector<1x128xf32>
    %143 = vector.broadcast %cst_49 : f32 to vector<1x128xf32>
    %144 = arith.minimumf %143, %142 : vector<1x128xf32>
    %145 = arith.mulf %126, %144 : vector<1x128xf32>
    %146 = arith.cmpf ogt, %145, %112 : vector<1x128xf32>
    %147 = arith.select %146, %145, %112 : vector<1x128xi1>, vector<1x128xf32>
    %c3_i32 = arith.constant 3 : i32
    %148 = vector.broadcast %c3_i32 : i32 to vector<1x128xi32>
    %149 = arith.select %146, %148, %114 : vector<1x128xi1>, vector<1x128xi32>
    %150 = vector.shape_cast %146 : vector<1x128xi1> to vector<1x128xi1>
    %151 = vector.broadcast %150 : vector<1x128xi1> to vector<32x128xi1>
    %152 = arith.select %151, %123, %117 : vector<32x128xi1>, vector<32x128xf32>
    %153 = vector.extract_strided_slice %124 {offsets = [1, 0], sizes = [2, 128], strides = [1, 1]} : vector<8x128xf32> to vector<2x128xf32>
    %154 = vector.shape_cast %146 : vector<1x128xi1> to vector<1x128xi1>
    %155 = vector.broadcast %154 : vector<1x128xi1> to vector<2x128xi1>
    %156 = arith.select %155, %153, %121 : vector<2x128xi1>, vector<2x128xf32>
    %c4 = arith.constant 4 : index
    %c0_50 = arith.constant 0 : index
    %c0_51 = arith.constant 0 : index
    %157 = vector.load %arg1[%c4, %c0_50, %c0_51] : memref<8x32x128xf32, #tpu.memory_space<vmem>>, vector<1x32x128xf32>
    %158 = vector.shape_cast %157 : vector<1x32x128xf32> to vector<32x128xf32>
    %cst_52 = arith.constant dense<0.000000e+00> : vector<8x128xf32>
    %159 = tpu.matmul %1, %158, %cst_52 {dimension_numbers = #tpu.dot_dimension_numbers<[1], [0], [0], [1], [0, 0, 1, 1], [], []>} : vector<8x32xf32>, vector<32x128xf32>, vector<8x128xf32> -> vector<8x128xf32>
    %160 = vector.extract_strided_slice %159 {offsets = [0, 0], sizes = [1, 128], strides = [1, 1]} : vector<8x128xf32> to vector<1x128xf32>
    %161 = arith.addf %160, %7 : vector<1x128xf32>
    %162 = arith.subf %158, %8 : vector<32x128xf32>
    %163 = arith.mulf %9, %162 : vector<32x128xf32>
    %cst_53 = arith.constant dense<0.000000e+00> : vector<128xf32>
    %164 = vector.multi_reduction <add>, %163, %cst_53 [0] : vector<32x128xf32> to vector<128xf32>
    %165 = vector.shape_cast %164 : vector<128xf32> to vector<1x128xf32>
    %166 = arith.mulf %162, %162 : vector<32x128xf32>
    %cst_54 = arith.constant dense<0.000000e+00> : vector<128xf32>
    %167 = vector.multi_reduction <add>, %166, %cst_54 [0] : vector<32x128xf32> to vector<128xf32>
    %168 = vector.shape_cast %167 : vector<128xf32> to vector<1x128xf32>
    %169 = arith.mulf %12, %168 : vector<1x128xf32>
    %cst_55 = arith.constant 1.000000e-16 : f32
    %170 = vector.broadcast %cst_55 : f32 to vector<1x128xf32>
    %171 = arith.maximumf %169, %170 : vector<1x128xf32>
    %172 = math.rsqrt %171 : vector<1x128xf32>
    %173 = arith.mulf %165, %172 : vector<1x128xf32>
    %cst_56 = arith.constant 1.000000e+00 : f32
    %174 = vector.broadcast %cst_56 : f32 to vector<1x128xf32>
    %175 = arith.addf %174, %173 : vector<1x128xf32>
    %cst_57 = arith.constant 0.000000e+00 : f32
    %cst_58 = arith.constant 1.000000e+00 : f32
    %176 = vector.broadcast %cst_57 : f32 to vector<1x128xf32>
    %177 = arith.maximumf %176, %175 : vector<1x128xf32>
    %178 = vector.broadcast %cst_58 : f32 to vector<1x128xf32>
    %179 = arith.minimumf %178, %177 : vector<1x128xf32>
    %180 = arith.mulf %161, %179 : vector<1x128xf32>
    %181 = arith.cmpf ogt, %180, %147 : vector<1x128xf32>
    %182 = arith.select %181, %180, %147 : vector<1x128xi1>, vector<1x128xf32>
    %c4_i32 = arith.constant 4 : i32
    %183 = vector.broadcast %c4_i32 : i32 to vector<1x128xi32>
    %184 = arith.select %181, %183, %149 : vector<1x128xi1>, vector<1x128xi32>
    %185 = vector.shape_cast %181 : vector<1x128xi1> to vector<1x128xi1>
    %186 = vector.broadcast %185 : vector<1x128xi1> to vector<32x128xi1>
    %187 = arith.select %186, %158, %152 : vector<32x128xi1>, vector<32x128xf32>
    %188 = vector.extract_strided_slice %159 {offsets = [1, 0], sizes = [2, 128], strides = [1, 1]} : vector<8x128xf32> to vector<2x128xf32>
    %189 = vector.shape_cast %181 : vector<1x128xi1> to vector<1x128xi1>
    %190 = vector.broadcast %189 : vector<1x128xi1> to vector<2x128xi1>
    %191 = arith.select %190, %188, %156 : vector<2x128xi1>, vector<2x128xf32>
    %c5 = arith.constant 5 : index
    %c0_59 = arith.constant 0 : index
    %c0_60 = arith.constant 0 : index
    %192 = vector.load %arg1[%c5, %c0_59, %c0_60] : memref<8x32x128xf32, #tpu.memory_space<vmem>>, vector<1x32x128xf32>
    %193 = vector.shape_cast %192 : vector<1x32x128xf32> to vector<32x128xf32>
    %cst_61 = arith.constant dense<0.000000e+00> : vector<8x128xf32>
    %194 = tpu.matmul %1, %193, %cst_61 {dimension_numbers = #tpu.dot_dimension_numbers<[1], [0], [0], [1], [0, 0, 1, 1], [], []>} : vector<8x32xf32>, vector<32x128xf32>, vector<8x128xf32> -> vector<8x128xf32>
    %195 = vector.extract_strided_slice %194 {offsets = [0, 0], sizes = [1, 128], strides = [1, 1]} : vector<8x128xf32> to vector<1x128xf32>
    %196 = arith.addf %195, %7 : vector<1x128xf32>
    %197 = arith.subf %193, %8 : vector<32x128xf32>
    %198 = arith.mulf %9, %197 : vector<32x128xf32>
    %cst_62 = arith.constant dense<0.000000e+00> : vector<128xf32>
    %199 = vector.multi_reduction <add>, %198, %cst_62 [0] : vector<32x128xf32> to vector<128xf32>
    %200 = vector.shape_cast %199 : vector<128xf32> to vector<1x128xf32>
    %201 = arith.mulf %197, %197 : vector<32x128xf32>
    %cst_63 = arith.constant dense<0.000000e+00> : vector<128xf32>
    %202 = vector.multi_reduction <add>, %201, %cst_63 [0] : vector<32x128xf32> to vector<128xf32>
    %203 = vector.shape_cast %202 : vector<128xf32> to vector<1x128xf32>
    %204 = arith.mulf %12, %203 : vector<1x128xf32>
    %cst_64 = arith.constant 1.000000e-16 : f32
    %205 = vector.broadcast %cst_64 : f32 to vector<1x128xf32>
    %206 = arith.maximumf %204, %205 : vector<1x128xf32>
    %207 = math.rsqrt %206 : vector<1x128xf32>
    %208 = arith.mulf %200, %207 : vector<1x128xf32>
    %cst_65 = arith.constant 1.000000e+00 : f32
    %209 = vector.broadcast %cst_65 : f32 to vector<1x128xf32>
    %210 = arith.addf %209, %208 : vector<1x128xf32>
    %cst_66 = arith.constant 0.000000e+00 : f32
    %cst_67 = arith.constant 1.000000e+00 : f32
    %211 = vector.broadcast %cst_66 : f32 to vector<1x128xf32>
    %212 = arith.maximumf %211, %210 : vector<1x128xf32>
    %213 = vector.broadcast %cst_67 : f32 to vector<1x128xf32>
    %214 = arith.minimumf %213, %212 : vector<1x128xf32>
    %215 = arith.mulf %196, %214 : vector<1x128xf32>
    %216 = arith.cmpf ogt, %215, %182 : vector<1x128xf32>
    %217 = arith.select %216, %215, %182 : vector<1x128xi1>, vector<1x128xf32>
    %c5_i32 = arith.constant 5 : i32
    %218 = vector.broadcast %c5_i32 : i32 to vector<1x128xi32>
    %219 = arith.select %216, %218, %184 : vector<1x128xi1>, vector<1x128xi32>
    %220 = vector.shape_cast %216 : vector<1x128xi1> to vector<1x128xi1>
    %221 = vector.broadcast %220 : vector<1x128xi1> to vector<32x128xi1>
    %222 = arith.select %221, %193, %187 : vector<32x128xi1>, vector<32x128xf32>
    %223 = vector.extract_strided_slice %194 {offsets = [1, 0], sizes = [2, 128], strides = [1, 1]} : vector<8x128xf32> to vector<2x128xf32>
    %224 = vector.shape_cast %216 : vector<1x128xi1> to vector<1x128xi1>
    %225 = vector.broadcast %224 : vector<1x128xi1> to vector<2x128xi1>
    %226 = arith.select %225, %223, %191 : vector<2x128xi1>, vector<2x128xf32>
    %c6 = arith.constant 6 : index
    %c0_68 = arith.constant 0 : index
    %c0_69 = arith.constant 0 : index
    %227 = vector.load %arg1[%c6, %c0_68, %c0_69] : memref<8x32x128xf32, #tpu.memory_space<vmem>>, vector<1x32x128xf32>
    %228 = vector.shape_cast %227 : vector<1x32x128xf32> to vector<32x128xf32>
    %cst_70 = arith.constant dense<0.000000e+00> : vector<8x128xf32>
    %229 = tpu.matmul %1, %228, %cst_70 {dimension_numbers = #tpu.dot_dimension_numbers<[1], [0], [0], [1], [0, 0, 1, 1], [], []>} : vector<8x32xf32>, vector<32x128xf32>, vector<8x128xf32> -> vector<8x128xf32>
    %230 = vector.extract_strided_slice %229 {offsets = [0, 0], sizes = [1, 128], strides = [1, 1]} : vector<8x128xf32> to vector<1x128xf32>
    %231 = arith.addf %230, %7 : vector<1x128xf32>
    %232 = arith.subf %228, %8 : vector<32x128xf32>
    %233 = arith.mulf %9, %232 : vector<32x128xf32>
    %cst_71 = arith.constant dense<0.000000e+00> : vector<128xf32>
    %234 = vector.multi_reduction <add>, %233, %cst_71 [0] : vector<32x128xf32> to vector<128xf32>
    %235 = vector.shape_cast %234 : vector<128xf32> to vector<1x128xf32>
    %236 = arith.mulf %232, %232 : vector<32x128xf32>
    %cst_72 = arith.constant dense<0.000000e+00> : vector<128xf32>
    %237 = vector.multi_reduction <add>, %236, %cst_72 [0] : vector<32x128xf32> to vector<128xf32>
    %238 = vector.shape_cast %237 : vector<128xf32> to vector<1x128xf32>
    %239 = arith.mulf %12, %238 : vector<1x128xf32>
    %cst_73 = arith.constant 1.000000e-16 : f32
    %240 = vector.broadcast %cst_73 : f32 to vector<1x128xf32>
    %241 = arith.maximumf %239, %240 : vector<1x128xf32>
    %242 = math.rsqrt %241 : vector<1x128xf32>
    %243 = arith.mulf %235, %242 : vector<1x128xf32>
    %cst_74 = arith.constant 1.000000e+00 : f32
    %244 = vector.broadcast %cst_74 : f32 to vector<1x128xf32>
    %245 = arith.addf %244, %243 : vector<1x128xf32>
    %cst_75 = arith.constant 0.000000e+00 : f32
    %cst_76 = arith.constant 1.000000e+00 : f32
    %246 = vector.broadcast %cst_75 : f32 to vector<1x128xf32>
    %247 = arith.maximumf %246, %245 : vector<1x128xf32>
    %248 = vector.broadcast %cst_76 : f32 to vector<1x128xf32>
    %249 = arith.minimumf %248, %247 : vector<1x128xf32>
    %250 = arith.mulf %231, %249 : vector<1x128xf32>
    %251 = arith.cmpf ogt, %250, %217 : vector<1x128xf32>
    %252 = arith.select %251, %250, %217 : vector<1x128xi1>, vector<1x128xf32>
    %c6_i32 = arith.constant 6 : i32
    %253 = vector.broadcast %c6_i32 : i32 to vector<1x128xi32>
    %254 = arith.select %251, %253, %219 : vector<1x128xi1>, vector<1x128xi32>
    %255 = vector.shape_cast %251 : vector<1x128xi1> to vector<1x128xi1>
    %256 = vector.broadcast %255 : vector<1x128xi1> to vector<32x128xi1>
    %257 = arith.select %256, %228, %222 : vector<32x128xi1>, vector<32x128xf32>
    %258 = vector.extract_strided_slice %229 {offsets = [1, 0], sizes = [2, 128], strides = [1, 1]} : vector<8x128xf32> to vector<2x128xf32>
    %259 = vector.shape_cast %251 : vector<1x128xi1> to vector<1x128xi1>
    %260 = vector.broadcast %259 : vector<1x128xi1> to vector<2x128xi1>
    %261 = arith.select %260, %258, %226 : vector<2x128xi1>, vector<2x128xf32>
    %c7 = arith.constant 7 : index
    %c0_77 = arith.constant 0 : index
    %c0_78 = arith.constant 0 : index
    %262 = vector.load %arg1[%c7, %c0_77, %c0_78] : memref<8x32x128xf32, #tpu.memory_space<vmem>>, vector<1x32x128xf32>
    %263 = vector.shape_cast %262 : vector<1x32x128xf32> to vector<32x128xf32>
    %cst_79 = arith.constant dense<0.000000e+00> : vector<8x128xf32>
    %264 = tpu.matmul %1, %263, %cst_79 {dimension_numbers = #tpu.dot_dimension_numbers<[1], [0], [0], [1], [0, 0, 1, 1], [], []>} : vector<8x32xf32>, vector<32x128xf32>, vector<8x128xf32> -> vector<8x128xf32>
    %265 = vector.extract_strided_slice %264 {offsets = [0, 0], sizes = [1, 128], strides = [1, 1]} : vector<8x128xf32> to vector<1x128xf32>
    %266 = arith.addf %265, %7 : vector<1x128xf32>
    %267 = arith.subf %263, %8 : vector<32x128xf32>
    %268 = arith.mulf %9, %267 : vector<32x128xf32>
    %cst_80 = arith.constant dense<0.000000e+00> : vector<128xf32>
    %269 = vector.multi_reduction <add>, %268, %cst_80 [0] : vector<32x128xf32> to vector<128xf32>
    %270 = vector.shape_cast %269 : vector<128xf32> to vector<1x128xf32>
    %271 = arith.mulf %267, %267 : vector<32x128xf32>
    %cst_81 = arith.constant dense<0.000000e+00> : vector<128xf32>
    %272 = vector.multi_reduction <add>, %271, %cst_81 [0] : vector<32x128xf32> to vector<128xf32>
    %273 = vector.shape_cast %272 : vector<128xf32> to vector<1x128xf32>
    %274 = arith.mulf %12, %273 : vector<1x128xf32>
    %cst_82 = arith.constant 1.000000e-16 : f32
    %275 = vector.broadcast %cst_82 : f32 to vector<1x128xf32>
    %276 = arith.maximumf %274, %275 : vector<1x128xf32>
    %277 = math.rsqrt %276 : vector<1x128xf32>
    %278 = arith.mulf %270, %277 : vector<1x128xf32>
    %cst_83 = arith.constant 1.000000e+00 : f32
    %279 = vector.broadcast %cst_83 : f32 to vector<1x128xf32>
    %280 = arith.addf %279, %278 : vector<1x128xf32>
    %cst_84 = arith.constant 0.000000e+00 : f32
    %cst_85 = arith.constant 1.000000e+00 : f32
    %281 = vector.broadcast %cst_84 : f32 to vector<1x128xf32>
    %282 = arith.maximumf %281, %280 : vector<1x128xf32>
    %283 = vector.broadcast %cst_85 : f32 to vector<1x128xf32>
    %284 = arith.minimumf %283, %282 : vector<1x128xf32>
    %285 = arith.mulf %266, %284 : vector<1x128xf32>
    %286 = arith.cmpf ogt, %285, %252 : vector<1x128xf32>
    %c7_i32 = arith.constant 7 : i32
    %287 = vector.broadcast %c7_i32 : i32 to vector<1x128xi32>
    %288 = arith.select %286, %287, %254 : vector<1x128xi1>, vector<1x128xi32>
    %289 = vector.shape_cast %286 : vector<1x128xi1> to vector<1x128xi1>
    %290 = vector.broadcast %289 : vector<1x128xi1> to vector<32x128xi1>
    %291 = arith.select %290, %263, %257 : vector<32x128xi1>, vector<32x128xf32>
    %292 = vector.extract_strided_slice %264 {offsets = [1, 0], sizes = [2, 128], strides = [1, 1]} : vector<8x128xf32> to vector<2x128xf32>
    %293 = vector.shape_cast %286 : vector<1x128xi1> to vector<1x128xi1>
    %294 = vector.broadcast %293 : vector<1x128xi1> to vector<2x128xi1>
    %295 = arith.select %294, %292, %261 : vector<2x128xi1>, vector<2x128xf32>
    %c0_86 = arith.constant 0 : index
    %c0_87 = arith.constant 0 : index
    %296 = vector.load %arg7[%c0_86, %c0_87] : memref<32x128xf32, #tpu.memory_space<vmem>>, vector<32x128xf32>
    tpu.vector_store %arg7[%c0_86, %c0_87], %291 {strides = array<i32>} : memref<32x128xf32, #tpu.memory_space<vmem>>, vector<32x128xf32>,
    %297 = arith.sitofp %288 : vector<1x128xi32> to vector<1x128xf32>
    %c0_88 = arith.constant 0 : index
    %c0_89 = arith.constant 0 : index
    %298 = vector.load %arg8[%c0_88, %c0_89] : memref<8x128xf32, #tpu.memory_space<vmem>>, vector<1x128xf32>
    tpu.vector_store %arg8[%c0_88, %c0_89], %297 {strides = array<i32>} : memref<8x128xf32, #tpu.memory_space<vmem>>, vector<1x128xf32>,
    %299 = vector.extract_strided_slice %295 {offsets = [0, 0], sizes = [1, 128], strides = [1, 1]} : vector<2x128xf32> to vector<1x128xf32>
    %300 = vector.extract_strided_slice %3 {offsets = [1, 0], sizes = [1, 128], strides = [1, 1]} : vector<8x128xf32> to vector<1x128xf32>
    %301 = arith.addf %299, %300 : vector<1x128xf32>
    %c1_90 = arith.constant 1 : index
    %302 = memref.load %arg6[%c1_90] : memref<4xf32, #tpu.memory_space<smem>>
    %303 = vector.broadcast %302 : f32 to vector<1x128xf32>
    %304 = arith.addf %301, %303 : vector<1x128xf32>
    %c1_91 = arith.constant 1 : index
    %c0_92 = arith.constant 0 : index
    %305 = vector.load %arg8[%c1_91, %c0_92] : memref<8x128xf32, #tpu.memory_space<vmem>>, vector<1x128xf32>
    tpu.vector_store %arg8[%c1_91, %c0_92], %304 {strides = array<i32>} : memref<8x128xf32, #tpu.memory_space<vmem>>, vector<1x128xf32>,
    %306 = vector.extract_strided_slice %295 {offsets = [1, 0], sizes = [1, 128], strides = [1, 1]} : vector<2x128xf32> to vector<1x128xf32>
    %307 = vector.extract_strided_slice %3 {offsets = [2, 0], sizes = [1, 128], strides = [1, 1]} : vector<8x128xf32> to vector<1x128xf32>
    %308 = arith.addf %306, %307 : vector<1x128xf32>
    %c2_93 = arith.constant 2 : index
    %309 = memref.load %arg6[%c2_93] : memref<4xf32, #tpu.memory_space<smem>>
    %310 = vector.broadcast %309 : f32 to vector<1x128xf32>
    %311 = arith.addf %308, %310 : vector<1x128xf32>
    %c2_94 = arith.constant 2 : index
    %c0_95 = arith.constant 0 : index
    %312 = vector.load %arg8[%c2_94, %c0_95] : memref<8x128xf32, #tpu.memory_space<vmem>>, vector<1x128xf32>
    tpu.vector_store %arg8[%c2_94, %c0_95], %311 {strides = array<i32>} : memref<8x128xf32, #tpu.memory_space<vmem>>, vector<1x128xf32>,
    %cst_96 = arith.constant 0.000000e+00 : f32
    %313 = vector.broadcast %cst_96 : f32 to vector<5x128xf32>
    %c3_97 = arith.constant 3 : index
    %c0_98 = arith.constant 0 : index
    %314 = vector.load %arg8[%c3_97, %c0_98] : memref<8x128xf32, #tpu.memory_space<vmem>>, vector<5x128xf32>
    tpu.vector_store %arg8[%c3_97, %c0_98], %313 {strides = array<i32>} : memref<8x128xf32, #tpu.memory_space<vmem>>, vector<5x128xf32>,
    return
  }
  func.func @transform_0(%arg0: i32) -> (i32, i32, i32) {
    %c0_i32 = arith.constant 0 : i32
    %c0_i32_0 = arith.constant 0 : i32
    %c0_i32_1 = arith.constant 0 : i32
    return %c0_i32, %c0_i32_0, %arg0 : i32, i32, i32
  }
  func.func @transform_1(%arg0: i32) -> (i32, i32) {
    %c0_i32 = arith.constant 0 : i32
    %c0_i32_0 = arith.constant 0 : i32
    return %c0_i32, %arg0 : i32, i32
  }
  func.func @transform_2(%arg0: i32) -> (i32, i32) {
    %c0_i32 = arith.constant 0 : i32
    %c0_i32_0 = arith.constant 0 : i32
    return %c0_i32, %arg0 : i32, i32
  }
  func.func @transform_3(%arg0: i32) -> (i32, i32) {
    %c0_i32 = arith.constant 0 : i32
    %c0_i32_0 = arith.constant 0 : i32
    %c0_i32_1 = arith.constant 0 : i32
    return %c0_i32, %c0_i32_0 : i32, i32
  }
  func.func @transform_4(%arg0: i32) -> (i32, i32) {
    %c0_i32 = arith.constant 0 : i32
    %c0_i32_0 = arith.constant 0 : i32
    %c0_i32_1 = arith.constant 0 : i32
    return %c0_i32, %c0_i32_0 : i32, i32
  }
  func.func @transform_5(%arg0: i32) -> i32 {
    %c0_i32 = arith.constant 0 : i32
    %c0_i32_0 = arith.constant 0 : i32
    return %c0_i32 : i32
  }
  func.func @transform_6(%arg0: i32) -> (i32, i32) {
    %c0_i32 = arith.constant 0 : i32
    %c0_i32_0 = arith.constant 0 : i32
    return %c0_i32, %arg0 : i32, i32
  }
  func.func @transform_7(%arg0: i32) -> (i32, i32) {
    %c0_i32 = arith.constant 0 : i32
    %c0_i32_0 = arith.constant 0 : i32
    return %c0_i32, %arg0 : i32, i32
  }
}

module attributes {stable_mosaic.version = 11 : i64} {
  func.func @_walk_step_kernel(%arg0: i32, %arg1: memref<8x32x128xf32, #tpu.memory_space<vmem>>, %arg2: memref<32x128xf32, #tpu.memory_space<vmem>>, %arg3: memref<32x128xf32, #tpu.memory_space<vmem>>, %arg4: memref<8x32xf32, #tpu.memory_space<vmem>>, %arg5: memref<8x32xf32, #tpu.memory_space<vmem>>, %arg6: memref<4xf32, #tpu.memory_space<smem>>, %arg7: memref<32x128xf32, #tpu.memory_space<vmem>>, %arg8: memref<8x128xf32, #tpu.memory_space<vmem>>) attributes {dimension_semantics = [#tpu.dimension_semantics<parallel>], iteration_bounds = array<i64: 1>, scalar_prefetch = 0 : i64, scratch_operands = 0 : i64, tpu.core_type = #tpu.core_type<tc>, window_params = [{transform_indices = @transform_0, window_bounds = array<i64: 8, 32, 128>}, {transform_indices = @transform_1, window_bounds = array<i64: 32, 128>}, {transform_indices = @transform_2, window_bounds = array<i64: 32, 128>}, {pipeline_mode = #tpu.pipeline_mode<synchronous>, transform_indices = @transform_3, window_bounds = array<i64: 8, 32>}, {pipeline_mode = #tpu.pipeline_mode<synchronous>, transform_indices = @transform_4, window_bounds = array<i64: 8, 32>}, {transform_indices = @transform_5, window_bounds = array<i64: 4>}, {transform_indices = @transform_6, window_bounds = array<i64: 32, 128>}, {transform_indices = @transform_7, window_bounds = array<i64: 8, 128>}]} {
    %c0 = arith.constant 0 : index
    %c0_0 = arith.constant 0 : index
    %0 = vector.load %arg2[%c0, %c0_0] : memref<32x128xf32, #tpu.memory_space<vmem>>, vector<32x128xf32>
    %c0_1 = arith.constant 0 : index
    %c0_2 = arith.constant 0 : index
    %1 = vector.load %arg4[%c0_1, %c0_2] : memref<8x32xf32, #tpu.memory_space<vmem>>, vector<8x32xf32>
    %c0_3 = arith.constant 0 : index
    %c0_4 = arith.constant 0 : index
    %2 = vector.load %arg5[%c0_3, %c0_4] : memref<8x32xf32, #tpu.memory_space<vmem>>, vector<8x32xf32>
    %cst = arith.constant dense<0.000000e+00> : vector<8x128xf32>
    %3 = tpu.matmul %2, %0, %cst {dimension_numbers = #tpu.dot_dimension_numbers<[1], [0], [0], [1], [0, 0, 1, 1], [], []>} : vector<8x32xf32>, vector<32x128xf32>, vector<8x128xf32> -> vector<8x128xf32>
    %4 = vector.extract_strided_slice %3 {offsets = [0, 0], sizes = [1, 128], strides = [1, 1]} : vector<8x128xf32> to vector<1x128xf32>
    %c0_5 = arith.constant 0 : index
    %5 = memref.load %arg6[%c0_5] : memref<4xf32, #tpu.memory_space<smem>>
    %6 = vector.broadcast %5 : f32 to vector<1x128xf32>
    %7 = arith.addf %4, %6 : vector<1x128xf32>
    %c0_6 = arith.constant 0 : index
    %c0_7 = arith.constant 0 : index
    %8 = vector.load %arg3[%c0_6, %c0_7] : memref<32x128xf32, #tpu.memory_space<vmem>>, vector<32x128xf32>
    %9 = arith.subf %8, %0 : vector<32x128xf32>
    %10 = arith.mulf %9, %9 : vector<32x128xf32>
    %cst_8 = arith.constant dense<0.000000e+00> : vector<128xf32>
    %11 = vector.multi_reduction <add>, %10, %cst_8 [0] : vector<32x128xf32> to vector<128xf32>
    %12 = vector.shape_cast %11 : vector<128xf32> to vector<1x128xf32>
    %cst_9 = arith.constant 0xFF800000 : f32
    %13 = vector.broadcast %cst_9 : f32 to vector<1x128xf32>
    %c0_i32 = arith.constant 0 : i32
    %14 = vector.broadcast %c0_i32 : i32 to vector<1x128xi32>
    %cst_10 = arith.constant 0.000000e+00 : f32
    %15 = vector.broadcast %cst_10 : f32 to vector<32x128xf32>
    %cst_11 = arith.constant 0.000000e+00 : f32
    %16 = vector.broadcast %cst_11 : f32 to vector<2x128xf32>
    %c0_12 = arith.constant 0 : index
    %c0_13 = arith.constant 0 : index
    %c0_14 = arith.constant 0 : index
    %17 = vector.load %arg1[%c0_12, %c0_13, %c0_14] : memref<8x32x128xf32, #tpu.memory_space<vmem>>, vector<1x32x128xf32>
    %18 = vector.shape_cast %17 : vector<1x32x128xf32> to vector<32x128xf32>
    %cst_15 = arith.constant dense<0.000000e+00> : vector<8x128xf32>
    %19 = tpu.matmul %1, %18, %cst_15 {dimension_numbers = #tpu.dot_dimension_numbers<[1], [0], [0], [1], [0, 0, 1, 1], [], []>} : vector<8x32xf32>, vector<32x128xf32>, vector<8x128xf32> -> vector<8x128xf32>
    %20 = vector.extract_strided_slice %19 {offsets = [0, 0], sizes = [1, 128], strides = [1, 1]} : vector<8x128xf32> to vector<1x128xf32>
    %21 = arith.addf %20, %7 : vector<1x128xf32>
    %22 = arith.subf %18, %8 : vector<32x128xf32>
    %23 = arith.mulf %9, %22 : vector<32x128xf32>
    %cst_16 = arith.constant dense<0.000000e+00> : vector<128xf32>
    %24 = vector.multi_reduction <add>, %23, %cst_16 [0] : vector<32x128xf32> to vector<128xf32>
    %25 = vector.shape_cast %24 : vector<128xf32> to vector<1x128xf32>
    %26 = arith.mulf %22, %22 : vector<32x128xf32>
    %cst_17 = arith.constant dense<0.000000e+00> : vector<128xf32>
    %27 = vector.multi_reduction <add>, %26, %cst_17 [0] : vector<32x128xf32> to vector<128xf32>
    %28 = vector.shape_cast %27 : vector<128xf32> to vector<1x128xf32>
    %29 = arith.mulf %12, %28 : vector<1x128xf32>
    %cst_18 = arith.constant 1.000000e-16 : f32
    %30 = vector.broadcast %cst_18 : f32 to vector<1x128xf32>
    %31 = arith.maximumf %29, %30 : vector<1x128xf32>
    %32 = math.rsqrt %31 : vector<1x128xf32>
    %33 = arith.mulf %25, %32 : vector<1x128xf32>
    %cst_19 = arith.constant 1.000000e+00 : f32
    %34 = vector.broadcast %cst_19 : f32 to vector<1x128xf32>
    %35 = arith.addf %34, %33 : vector<1x128xf32>
    %cst_20 = arith.constant 0.000000e+00 : f32
    %cst_21 = arith.constant 1.000000e+00 : f32
    %36 = vector.broadcast %cst_20 : f32 to vector<1x128xf32>
    %37 = arith.maximumf %36, %35 : vector<1x128xf32>
    %38 = vector.broadcast %cst_21 : f32 to vector<1x128xf32>
    %39 = arith.minimumf %38, %37 : vector<1x128xf32>
    %40 = arith.mulf %21, %39 : vector<1x128xf32>
    %41 = arith.cmpf ogt, %40, %13 : vector<1x128xf32>
    %42 = arith.select %41, %40, %13 : vector<1x128xi1>, vector<1x128xf32>
    %c0_i32_22 = arith.constant 0 : i32
    %43 = vector.broadcast %c0_i32_22 : i32 to vector<1x128xi32>
    %44 = arith.select %41, %43, %14 : vector<1x128xi1>, vector<1x128xi32>
    %45 = vector.shape_cast %41 : vector<1x128xi1> to vector<1x128xi1>
    %46 = vector.broadcast %45 : vector<1x128xi1> to vector<32x128xi1>
    %47 = arith.select %46, %18, %15 : vector<32x128xi1>, vector<32x128xf32>
    %48 = vector.extract_strided_slice %19 {offsets = [1, 0], sizes = [2, 128], strides = [1, 1]} : vector<8x128xf32> to vector<2x128xf32>
    %49 = vector.shape_cast %41 : vector<1x128xi1> to vector<1x128xi1>
    %50 = vector.broadcast %49 : vector<1x128xi1> to vector<2x128xi1>
    %51 = arith.select %50, %48, %16 : vector<2x128xi1>, vector<2x128xf32>
    %c1 = arith.constant 1 : index
    %c0_23 = arith.constant 0 : index
    %c0_24 = arith.constant 0 : index
    %52 = vector.load %arg1[%c1, %c0_23, %c0_24] : memref<8x32x128xf32, #tpu.memory_space<vmem>>, vector<1x32x128xf32>
    %53 = vector.shape_cast %52 : vector<1x32x128xf32> to vector<32x128xf32>
    %cst_25 = arith.constant dense<0.000000e+00> : vector<8x128xf32>
    %54 = tpu.matmul %1, %53, %cst_25 {dimension_numbers = #tpu.dot_dimension_numbers<[1], [0], [0], [1], [0, 0, 1, 1], [], []>} : vector<8x32xf32>, vector<32x128xf32>, vector<8x128xf32> -> vector<8x128xf32>
    %55 = vector.extract_strided_slice %54 {offsets = [0, 0], sizes = [1, 128], strides = [1, 1]} : vector<8x128xf32> to vector<1x128xf32>
    %56 = arith.addf %55, %7 : vector<1x128xf32>
    %57 = arith.subf %53, %8 : vector<32x128xf32>
    %58 = arith.mulf %9, %57 : vector<32x128xf32>
    %cst_26 = arith.constant dense<0.000000e+00> : vector<128xf32>
    %59 = vector.multi_reduction <add>, %58, %cst_26 [0] : vector<32x128xf32> to vector<128xf32>
    %60 = vector.shape_cast %59 : vector<128xf32> to vector<1x128xf32>
    %61 = arith.mulf %57, %57 : vector<32x128xf32>
    %cst_27 = arith.constant dense<0.000000e+00> : vector<128xf32>
    %62 = vector.multi_reduction <add>, %61, %cst_27 [0] : vector<32x128xf32> to vector<128xf32>
    %63 = vector.shape_cast %62 : vector<128xf32> to vector<1x128xf32>
    %64 = arith.mulf %12, %63 : vector<1x128xf32>
    %cst_28 = arith.constant 1.000000e-16 : f32
    %65 = vector.broadcast %cst_28 : f32 to vector<1x128xf32>
    %66 = arith.maximumf %64, %65 : vector<1x128xf32>
    %67 = math.rsqrt %66 : vector<1x128xf32>
    %68 = arith.mulf %60, %67 : vector<1x128xf32>
    %cst_29 = arith.constant 1.000000e+00 : f32
    %69 = vector.broadcast %cst_29 : f32 to vector<1x128xf32>
    %70 = arith.addf %69, %68 : vector<1x128xf32>
    %cst_30 = arith.constant 0.000000e+00 : f32
    %cst_31 = arith.constant 1.000000e+00 : f32
    %71 = vector.broadcast %cst_30 : f32 to vector<1x128xf32>
    %72 = arith.maximumf %71, %70 : vector<1x128xf32>
    %73 = vector.broadcast %cst_31 : f32 to vector<1x128xf32>
    %74 = arith.minimumf %73, %72 : vector<1x128xf32>
    %75 = arith.mulf %56, %74 : vector<1x128xf32>
    %76 = arith.cmpf ogt, %75, %42 : vector<1x128xf32>
    %77 = arith.select %76, %75, %42 : vector<1x128xi1>, vector<1x128xf32>
    %c1_i32 = arith.constant 1 : i32
    %78 = vector.broadcast %c1_i32 : i32 to vector<1x128xi32>
    %79 = arith.select %76, %78, %44 : vector<1x128xi1>, vector<1x128xi32>
    %80 = vector.shape_cast %76 : vector<1x128xi1> to vector<1x128xi1>
    %81 = vector.broadcast %80 : vector<1x128xi1> to vector<32x128xi1>
    %82 = arith.select %81, %53, %47 : vector<32x128xi1>, vector<32x128xf32>
    %83 = vector.extract_strided_slice %54 {offsets = [1, 0], sizes = [2, 128], strides = [1, 1]} : vector<8x128xf32> to vector<2x128xf32>
    %84 = vector.shape_cast %76 : vector<1x128xi1> to vector<1x128xi1>
    %85 = vector.broadcast %84 : vector<1x128xi1> to vector<2x128xi1>
    %86 = arith.select %85, %83, %51 : vector<2x128xi1>, vector<2x128xf32>
    %c2 = arith.constant 2 : index
    %c0_32 = arith.constant 0 : index
    %c0_33 = arith.constant 0 : index
    %87 = vector.load %arg1[%c2, %c0_32, %c0_33] : memref<8x32x128xf32, #tpu.memory_space<vmem>>, vector<1x32x128xf32>
    %88 = vector.shape_cast %87 : vector<1x32x128xf32> to vector<32x128xf32>
    %cst_34 = arith.constant dense<0.000000e+00> : vector<8x128xf32>
    %89 = tpu.matmul %1, %88, %cst_34 {dimension_numbers = #tpu.dot_dimension_numbers<[1], [0], [0], [1], [0, 0, 1, 1], [], []>} : vector<8x32xf32>, vector<32x128xf32>, vector<8x128xf32> -> vector<8x128xf32>
    %90 = vector.extract_strided_slice %89 {offsets = [0, 0], sizes = [1, 128], strides = [1, 1]} : vector<8x128xf32> to vector<1x128xf32>
    %91 = arith.addf %90, %7 : vector<1x128xf32>
    %92 = arith.subf %88, %8 : vector<32x128xf32>
    %93 = arith.mulf %9, %92 : vector<32x128xf32>
    %cst_35 = arith.constant dense<0.000000e+00> : vector<128xf32>
    %94 = vector.multi_reduction <add>, %93, %cst_35 [0] : vector<32x128xf32> to vector<128xf32>
    %95 = vector.shape_cast %94 : vector<128xf32> to vector<1x128xf32>
    %96 = arith.mulf %92, %92 : vector<32x128xf32>
    %cst_36 = arith.constant dense<0.000000e+00> : vector<128xf32>
    %97 = vector.multi_reduction <add>, %96, %cst_36 [0] : vector<32x128xf32> to vector<128xf32>
    %98 = vector.shape_cast %97 : vector<128xf32> to vector<1x128xf32>
    %99 = arith.mulf %12, %98 : vector<1x128xf32>
    %cst_37 = arith.constant 1.000000e-16 : f32
    %100 = vector.broadcast %cst_37 : f32 to vector<1x128xf32>
    %101 = arith.maximumf %99, %100 : vector<1x128xf32>
    %102 = math.rsqrt %101 : vector<1x128xf32>
    %103 = arith.mulf %95, %102 : vector<1x128xf32>
    %cst_38 = arith.constant 1.000000e+00 : f32
    %104 = vector.broadcast %cst_38 : f32 to vector<1x128xf32>
    %105 = arith.addf %104, %103 : vector<1x128xf32>
    %cst_39 = arith.constant 0.000000e+00 : f32
    %cst_40 = arith.constant 1.000000e+00 : f32
    %106 = vector.broadcast %cst_39 : f32 to vector<1x128xf32>
    %107 = arith.maximumf %106, %105 : vector<1x128xf32>
    %108 = vector.broadcast %cst_40 : f32 to vector<1x128xf32>
    %109 = arith.minimumf %108, %107 : vector<1x128xf32>
    %110 = arith.mulf %91, %109 : vector<1x128xf32>
    %111 = arith.cmpf ogt, %110, %77 : vector<1x128xf32>
    %112 = arith.select %111, %110, %77 : vector<1x128xi1>, vector<1x128xf32>
    %c2_i32 = arith.constant 2 : i32
    %113 = vector.broadcast %c2_i32 : i32 to vector<1x128xi32>
    %114 = arith.select %111, %113, %79 : vector<1x128xi1>, vector<1x128xi32>
    %115 = vector.shape_cast %111 : vector<1x128xi1> to vector<1x128xi1>
    %116 = vector.broadcast %115 : vector<1x128xi1> to vector<32x128xi1>
    %117 = arith.select %116, %88, %82 : vector<32x128xi1>, vector<32x128xf32>
    %118 = vector.extract_strided_slice %89 {offsets = [1, 0], sizes = [2, 128], strides = [1, 1]} : vector<8x128xf32> to vector<2x128xf32>
    %119 = vector.shape_cast %111 : vector<1x128xi1> to vector<1x128xi1>
    %120 = vector.broadcast %119 : vector<1x128xi1> to vector<2x128xi1>
    %121 = arith.select %120, %118, %86 : vector<2x128xi1>, vector<2x128xf32>
    %c3 = arith.constant 3 : index
    %c0_41 = arith.constant 0 : index
    %c0_42 = arith.constant 0 : index
    %122 = vector.load %arg1[%c3, %c0_41, %c0_42] : memref<8x32x128xf32, #tpu.memory_space<vmem>>, vector<1x32x128xf32>
    %123 = vector.shape_cast %122 : vector<1x32x128xf32> to vector<32x128xf32>
    %cst_43 = arith.constant dense<0.000000e+00> : vector<8x128xf32>
    %124 = tpu.matmul %1, %123, %cst_43 {dimension_numbers = #tpu.dot_dimension_numbers<[1], [0], [0], [1], [0, 0, 1, 1], [], []>} : vector<8x32xf32>, vector<32x128xf32>, vector<8x128xf32> -> vector<8x128xf32>
    %125 = vector.extract_strided_slice %124 {offsets = [0, 0], sizes = [1, 128], strides = [1, 1]} : vector<8x128xf32> to vector<1x128xf32>
    %126 = arith.addf %125, %7 : vector<1x128xf32>
    %127 = arith.subf %123, %8 : vector<32x128xf32>
    %128 = arith.mulf %9, %127 : vector<32x128xf32>
    %cst_44 = arith.constant dense<0.000000e+00> : vector<128xf32>
    %129 = vector.multi_reduction <add>, %128, %cst_44 [0] : vector<32x128xf32> to vector<128xf32>
    %130 = vector.shape_cast %129 : vector<128xf32> to vector<1x128xf32>
    %131 = arith.mulf %127, %127 : vector<32x128xf32>
    %cst_45 = arith.constant dense<0.000000e+00> : vector<128xf32>
    %132 = vector.multi_reduction <add>, %131, %cst_45 [0] : vector<32x128xf32> to vector<128xf32>
    %133 = vector.shape_cast %132 : vector<128xf32> to vector<1x128xf32>
    %134 = arith.mulf %12, %133 : vector<1x128xf32>
    %cst_46 = arith.constant 1.000000e-16 : f32
    %135 = vector.broadcast %cst_46 : f32 to vector<1x128xf32>
    %136 = arith.maximumf %134, %135 : vector<1x128xf32>
    %137 = math.rsqrt %136 : vector<1x128xf32>
    %138 = arith.mulf %130, %137 : vector<1x128xf32>
    %cst_47 = arith.constant 1.000000e+00 : f32
    %139 = vector.broadcast %cst_47 : f32 to vector<1x128xf32>
    %140 = arith.addf %139, %138 : vector<1x128xf32>
    %cst_48 = arith.constant 0.000000e+00 : f32
    %cst_49 = arith.constant 1.000000e+00 : f32
    %141 = vector.broadcast %cst_48 : f32 to vector<1x128xf32>
    %142 = arith.maximumf %141, %140 : vector<1x128xf32>
    %143 = vector.broadcast %cst_49 : f32 to vector<1x128xf32>
    %144 = arith.minimumf %143, %142 : vector<1x128xf32>
    %145 = arith.mulf %126, %144 : vector<1x128xf32>
    %146 = arith.cmpf ogt, %145, %112 : vector<1x128xf32>
    %147 = arith.select %146, %145, %112 : vector<1x128xi1>, vector<1x128xf32>
    %c3_i32 = arith.constant 3 : i32
    %148 = vector.broadcast %c3_i32 : i32 to vector<1x128xi32>
    %149 = arith.select %146, %148, %114 : vector<1x128xi1>, vector<1x128xi32>
    %150 = vector.shape_cast %146 : vector<1x128xi1> to vector<1x128xi1>
    %151 = vector.broadcast %150 : vector<1x128xi1> to vector<32x128xi1>
    %152 = arith.select %151, %123, %117 : vector<32x128xi1>, vector<32x128xf32>
    %153 = vector.extract_strided_slice %124 {offsets = [1, 0], sizes = [2, 128], strides = [1, 1]} : vector<8x128xf32> to vector<2x128xf32>
    %154 = vector.shape_cast %146 : vector<1x128xi1> to vector<1x128xi1>
    %155 = vector.broadcast %154 : vector<1x128xi1> to vector<2x128xi1>
    %156 = arith.select %155, %153, %121 : vector<2x128xi1>, vector<2x128xf32>
    %c4 = arith.constant 4 : index
    %c0_50 = arith.constant 0 : index
    %c0_51 = arith.constant 0 : index
    %157 = vector.load %arg1[%c4, %c0_50, %c0_51] : memref<8x32x128xf32, #tpu.memory_space<vmem>>, vector<1x32x128xf32>
    %158 = vector.shape_cast %157 : vector<1x32x128xf32> to vector<32x128xf32>
    %cst_52 = arith.constant dense<0.000000e+00> : vector<8x128xf32>
    %159 = tpu.matmul %1, %158, %cst_52 {dimension_numbers = #tpu.dot_dimension_numbers<[1], [0], [0], [1], [0, 0, 1, 1], [], []>} : vector<8x32xf32>, vector<32x128xf32>, vector<8x128xf32> -> vector<8x128xf32>
    %160 = vector.extract_strided_slice %159 {offsets = [0, 0], sizes = [1, 128], strides = [1, 1]} : vector<8x128xf32> to vector<1x128xf32>
    %161 = arith.addf %160, %7 : vector<1x128xf32>
    %162 = arith.subf %158, %8 : vector<32x128xf32>
    %163 = arith.mulf %9, %162 : vector<32x128xf32>
    %cst_53 = arith.constant dense<0.000000e+00> : vector<128xf32>
    %164 = vector.multi_reduction <add>, %163, %cst_53 [0] : vector<32x128xf32> to vector<128xf32>
    %165 = vector.shape_cast %164 : vector<128xf32> to vector<1x128xf32>
    %166 = arith.mulf %162, %162 : vector<32x128xf32>
    %cst_54 = arith.constant dense<0.000000e+00> : vector<128xf32>
    %167 = vector.multi_reduction <add>, %166, %cst_54 [0] : vector<32x128xf32> to vector<128xf32>
    %168 = vector.shape_cast %167 : vector<128xf32> to vector<1x128xf32>
    %169 = arith.mulf %12, %168 : vector<1x128xf32>
    %cst_55 = arith.constant 1.000000e-16 : f32
    %170 = vector.broadcast %cst_55 : f32 to vector<1x128xf32>
    %171 = arith.maximumf %169, %170 : vector<1x128xf32>
    %172 = math.rsqrt %171 : vector<1x128xf32>
    %173 = arith.mulf %165, %172 : vector<1x128xf32>
    %cst_56 = arith.constant 1.000000e+00 : f32
    %174 = vector.broadcast %cst_56 : f32 to vector<1x128xf32>
    %175 = arith.addf %174, %173 : vector<1x128xf32>
    %cst_57 = arith.constant 0.000000e+00 : f32
    %cst_58 = arith.constant 1.000000e+00 : f32
    %176 = vector.broadcast %cst_57 : f32 to vector<1x128xf32>
    %177 = arith.maximumf %176, %175 : vector<1x128xf32>
    %178 = vector.broadcast %cst_58 : f32 to vector<1x128xf32>
    %179 = arith.minimumf %178, %177 : vector<1x128xf32>
    %180 = arith.mulf %161, %179 : vector<1x128xf32>
    %181 = arith.cmpf ogt, %180, %147 : vector<1x128xf32>
    %182 = arith.select %181, %180, %147 : vector<1x128xi1>, vector<1x128xf32>
    %c4_i32 = arith.constant 4 : i32
    %183 = vector.broadcast %c4_i32 : i32 to vector<1x128xi32>
    %184 = arith.select %181, %183, %149 : vector<1x128xi1>, vector<1x128xi32>
    %185 = vector.shape_cast %181 : vector<1x128xi1> to vector<1x128xi1>
    %186 = vector.broadcast %185 : vector<1x128xi1> to vector<32x128xi1>
    %187 = arith.select %186, %158, %152 : vector<32x128xi1>, vector<32x128xf32>
    %188 = vector.extract_strided_slice %159 {offsets = [1, 0], sizes = [2, 128], strides = [1, 1]} : vector<8x128xf32> to vector<2x128xf32>
    %189 = vector.shape_cast %181 : vector<1x128xi1> to vector<1x128xi1>
    %190 = vector.broadcast %189 : vector<1x128xi1> to vector<2x128xi1>
    %191 = arith.select %190, %188, %156 : vector<2x128xi1>, vector<2x128xf32>
    %c5 = arith.constant 5 : index
    %c0_59 = arith.constant 0 : index
    %c0_60 = arith.constant 0 : index
    %192 = vector.load %arg1[%c5, %c0_59, %c0_60] : memref<8x32x128xf32, #tpu.memory_space<vmem>>, vector<1x32x128xf32>
    %193 = vector.shape_cast %192 : vector<1x32x128xf32> to vector<32x128xf32>
    %cst_61 = arith.constant dense<0.000000e+00> : vector<8x128xf32>
    %194 = tpu.matmul %1, %193, %cst_61 {dimension_numbers = #tpu.dot_dimension_numbers<[1], [0], [0], [1], [0, 0, 1, 1], [], []>} : vector<8x32xf32>, vector<32x128xf32>, vector<8x128xf32> -> vector<8x128xf32>
    %195 = vector.extract_strided_slice %194 {offsets = [0, 0], sizes = [1, 128], strides = [1, 1]} : vector<8x128xf32> to vector<1x128xf32>
    %196 = arith.addf %195, %7 : vector<1x128xf32>
    %197 = arith.subf %193, %8 : vector<32x128xf32>
    %198 = arith.mulf %9, %197 : vector<32x128xf32>
    %cst_62 = arith.constant dense<0.000000e+00> : vector<128xf32>
    %199 = vector.multi_reduction <add>, %198, %cst_62 [0] : vector<32x128xf32> to vector<128xf32>
    %200 = vector.shape_cast %199 : vector<128xf32> to vector<1x128xf32>
    %201 = arith.mulf %197, %197 : vector<32x128xf32>
    %cst_63 = arith.constant dense<0.000000e+00> : vector<128xf32>
    %202 = vector.multi_reduction <add>, %201, %cst_63 [0] : vector<32x128xf32> to vector<128xf32>
    %203 = vector.shape_cast %202 : vector<128xf32> to vector<1x128xf32>
    %204 = arith.mulf %12, %203 : vector<1x128xf32>
    %cst_64 = arith.constant 1.000000e-16 : f32
    %205 = vector.broadcast %cst_64 : f32 to vector<1x128xf32>
    %206 = arith.maximumf %204, %205 : vector<1x128xf32>
    %207 = math.rsqrt %206 : vector<1x128xf32>
    %208 = arith.mulf %200, %207 : vector<1x128xf32>
    %cst_65 = arith.constant 1.000000e+00 : f32
    %209 = vector.broadcast %cst_65 : f32 to vector<1x128xf32>
    %210 = arith.addf %209, %208 : vector<1x128xf32>
    %cst_66 = arith.constant 0.000000e+00 : f32
    %cst_67 = arith.constant 1.000000e+00 : f32
    %211 = vector.broadcast %cst_66 : f32 to vector<1x128xf32>
    %212 = arith.maximumf %211, %210 : vector<1x128xf32>
    %213 = vector.broadcast %cst_67 : f32 to vector<1x128xf32>
    %214 = arith.minimumf %213, %212 : vector<1x128xf32>
    %215 = arith.mulf %196, %214 : vector<1x128xf32>
    %216 = arith.cmpf ogt, %215, %182 : vector<1x128xf32>
    %217 = arith.select %216, %215, %182 : vector<1x128xi1>, vector<1x128xf32>
    %c5_i32 = arith.constant 5 : i32
    %218 = vector.broadcast %c5_i32 : i32 to vector<1x128xi32>
    %219 = arith.select %216, %218, %184 : vector<1x128xi1>, vector<1x128xi32>
    %220 = vector.shape_cast %216 : vector<1x128xi1> to vector<1x128xi1>
    %221 = vector.broadcast %220 : vector<1x128xi1> to vector<32x128xi1>
    %222 = arith.select %221, %193, %187 : vector<32x128xi1>, vector<32x128xf32>
    %223 = vector.extract_strided_slice %194 {offsets = [1, 0], sizes = [2, 128], strides = [1, 1]} : vector<8x128xf32> to vector<2x128xf32>
    %224 = vector.shape_cast %216 : vector<1x128xi1> to vector<1x128xi1>
    %225 = vector.broadcast %224 : vector<1x128xi1> to vector<2x128xi1>
    %226 = arith.select %225, %223, %191 : vector<2x128xi1>, vector<2x128xf32>
    %c6 = arith.constant 6 : index
    %c0_68 = arith.constant 0 : index
    %c0_69 = arith.constant 0 : index
    %227 = vector.load %arg1[%c6, %c0_68, %c0_69] : memref<8x32x128xf32, #tpu.memory_space<vmem>>, vector<1x32x128xf32>
    %228 = vector.shape_cast %227 : vector<1x32x128xf32> to vector<32x128xf32>
    %cst_70 = arith.constant dense<0.000000e+00> : vector<8x128xf32>
    %229 = tpu.matmul %1, %228, %cst_70 {dimension_numbers = #tpu.dot_dimension_numbers<[1], [0], [0], [1], [0, 0, 1, 1], [], []>} : vector<8x32xf32>, vector<32x128xf32>, vector<8x128xf32> -> vector<8x128xf32>
    %230 = vector.extract_strided_slice %229 {offsets = [0, 0], sizes = [1, 128], strides = [1, 1]} : vector<8x128xf32> to vector<1x128xf32>
    %231 = arith.addf %230, %7 : vector<1x128xf32>
    %232 = arith.subf %228, %8 : vector<32x128xf32>
    %233 = arith.mulf %9, %232 : vector<32x128xf32>
    %cst_71 = arith.constant dense<0.000000e+00> : vector<128xf32>
    %234 = vector.multi_reduction <add>, %233, %cst_71 [0] : vector<32x128xf32> to vector<128xf32>
    %235 = vector.shape_cast %234 : vector<128xf32> to vector<1x128xf32>
    %236 = arith.mulf %232, %232 : vector<32x128xf32>
    %cst_72 = arith.constant dense<0.000000e+00> : vector<128xf32>
    %237 = vector.multi_reduction <add>, %236, %cst_72 [0] : vector<32x128xf32> to vector<128xf32>
    %238 = vector.shape_cast %237 : vector<128xf32> to vector<1x128xf32>
    %239 = arith.mulf %12, %238 : vector<1x128xf32>
    %cst_73 = arith.constant 1.000000e-16 : f32
    %240 = vector.broadcast %cst_73 : f32 to vector<1x128xf32>
    %241 = arith.maximumf %239, %240 : vector<1x128xf32>
    %242 = math.rsqrt %241 : vector<1x128xf32>
    %243 = arith.mulf %235, %242 : vector<1x128xf32>
    %cst_74 = arith.constant 1.000000e+00 : f32
    %244 = vector.broadcast %cst_74 : f32 to vector<1x128xf32>
    %245 = arith.addf %244, %243 : vector<1x128xf32>
    %cst_75 = arith.constant 0.000000e+00 : f32
    %cst_76 = arith.constant 1.000000e+00 : f32
    %246 = vector.broadcast %cst_75 : f32 to vector<1x128xf32>
    %247 = arith.maximumf %246, %245 : vector<1x128xf32>
    %248 = vector.broadcast %cst_76 : f32 to vector<1x128xf32>
    %249 = arith.minimumf %248, %247 : vector<1x128xf32>
    %250 = arith.mulf %231, %249 : vector<1x128xf32>
    %251 = arith.cmpf ogt, %250, %217 : vector<1x128xf32>
    %252 = arith.select %251, %250, %217 : vector<1x128xi1>, vector<1x128xf32>
    %c6_i32 = arith.constant 6 : i32
    %253 = vector.broadcast %c6_i32 : i32 to vector<1x128xi32>
    %254 = arith.select %251, %253, %219 : vector<1x128xi1>, vector<1x128xi32>
    %255 = vector.shape_cast %251 : vector<1x128xi1> to vector<1x128xi1>
    %256 = vector.broadcast %255 : vector<1x128xi1> to vector<32x128xi1>
    %257 = arith.select %256, %228, %222 : vector<32x128xi1>, vector<32x128xf32>
    %258 = vector.extract_strided_slice %229 {offsets = [1, 0], sizes = [2, 128], strides = [1, 1]} : vector<8x128xf32> to vector<2x128xf32>
    %259 = vector.shape_cast %251 : vector<1x128xi1> to vector<1x128xi1>
    %260 = vector.broadcast %259 : vector<1x128xi1> to vector<2x128xi1>
    %261 = arith.select %260, %258, %226 : vector<2x128xi1>, vector<2x128xf32>
    %c7 = arith.constant 7 : index
    %c0_77 = arith.constant 0 : index
    %c0_78 = arith.constant 0 : index
    %262 = vector.load %arg1[%c7, %c0_77, %c0_78] : memref<8x32x128xf32, #tpu.memory_space<vmem>>, vector<1x32x128xf32>
    %263 = vector.shape_cast %262 : vector<1x32x128xf32> to vector<32x128xf32>
    %cst_79 = arith.constant dense<0.000000e+00> : vector<8x128xf32>
    %264 = tpu.matmul %1, %263, %cst_79 {dimension_numbers = #tpu.dot_dimension_numbers<[1], [0], [0], [1], [0, 0, 1, 1], [], []>} : vector<8x32xf32>, vector<32x128xf32>, vector<8x128xf32> -> vector<8x128xf32>
    %265 = vector.extract_strided_slice %264 {offsets = [0, 0], sizes = [1, 128], strides = [1, 1]} : vector<8x128xf32> to vector<1x128xf32>
    %266 = arith.addf %265, %7 : vector<1x128xf32>
    %267 = arith.subf %263, %8 : vector<32x128xf32>
    %268 = arith.mulf %9, %267 : vector<32x128xf32>
    %cst_80 = arith.constant dense<0.000000e+00> : vector<128xf32>
    %269 = vector.multi_reduction <add>, %268, %cst_80 [0] : vector<32x128xf32> to vector<128xf32>
    %270 = vector.shape_cast %269 : vector<128xf32> to vector<1x128xf32>
    %271 = arith.mulf %267, %267 : vector<32x128xf32>
    %cst_81 = arith.constant dense<0.000000e+00> : vector<128xf32>
    %272 = vector.multi_reduction <add>, %271, %cst_81 [0] : vector<32x128xf32> to vector<128xf32>
    %273 = vector.shape_cast %272 : vector<128xf32> to vector<1x128xf32>
    %274 = arith.mulf %12, %273 : vector<1x128xf32>
    %cst_82 = arith.constant 1.000000e-16 : f32
    %275 = vector.broadcast %cst_82 : f32 to vector<1x128xf32>
    %276 = arith.maximumf %274, %275 : vector<1x128xf32>
    %277 = math.rsqrt %276 : vector<1x128xf32>
    %278 = arith.mulf %270, %277 : vector<1x128xf32>
    %cst_83 = arith.constant 1.000000e+00 : f32
    %279 = vector.broadcast %cst_83 : f32 to vector<1x128xf32>
    %280 = arith.addf %279, %278 : vector<1x128xf32>
    %cst_84 = arith.constant 0.000000e+00 : f32
    %cst_85 = arith.constant 1.000000e+00 : f32
    %281 = vector.broadcast %cst_84 : f32 to vector<1x128xf32>
    %282 = arith.maximumf %281, %280 : vector<1x128xf32>
    %283 = vector.broadcast %cst_85 : f32 to vector<1x128xf32>
    %284 = arith.minimumf %283, %282 : vector<1x128xf32>
    %285 = arith.mulf %266, %284 : vector<1x128xf32>
    %286 = arith.cmpf ogt, %285, %252 : vector<1x128xf32>
    %c7_i32 = arith.constant 7 : i32
    %287 = vector.broadcast %c7_i32 : i32 to vector<1x128xi32>
    %288 = arith.select %286, %287, %254 : vector<1x128xi1>, vector<1x128xi32>
    %289 = vector.shape_cast %286 : vector<1x128xi1> to vector<1x128xi1>
    %290 = vector.broadcast %289 : vector<1x128xi1> to vector<32x128xi1>
    %291 = arith.select %290, %263, %257 : vector<32x128xi1>, vector<32x128xf32>
    %292 = vector.extract_strided_slice %264 {offsets = [1, 0], sizes = [2, 128], strides = [1, 1]} : vector<8x128xf32> to vector<2x128xf32>
    %293 = vector.shape_cast %286 : vector<1x128xi1> to vector<1x128xi1>
    %294 = vector.broadcast %293 : vector<1x128xi1> to vector<2x128xi1>
    %295 = arith.select %294, %292, %261 : vector<2x128xi1>, vector<2x128xf32>
    %c0_86 = arith.constant 0 : index
    %c0_87 = arith.constant 0 : index
    %296 = vector.load %arg7[%c0_86, %c0_87] : memref<32x128xf32, #tpu.memory_space<vmem>>, vector<32x128xf32>
    tpu.vector_store %arg7[%c0_86, %c0_87], %291 {strides = array<i32>} : memref<32x128xf32, #tpu.memory_space<vmem>>, vector<32x128xf32>,
    %297 = arith.sitofp %288 : vector<1x128xi32> to vector<1x128xf32>
    %c0_88 = arith.constant 0 : index
    %c0_89 = arith.constant 0 : index
    %298 = vector.load %arg8[%c0_88, %c0_89] : memref<8x128xf32, #tpu.memory_space<vmem>>, vector<1x128xf32>
    tpu.vector_store %arg8[%c0_88, %c0_89], %297 {strides = array<i32>} : memref<8x128xf32, #tpu.memory_space<vmem>>, vector<1x128xf32>,
    %299 = vector.extract_strided_slice %295 {offsets = [0, 0], sizes = [1, 128], strides = [1, 1]} : vector<2x128xf32> to vector<1x128xf32>
    %300 = vector.extract_strided_slice %3 {offsets = [1, 0], sizes = [1, 128], strides = [1, 1]} : vector<8x128xf32> to vector<1x128xf32>
    %301 = arith.addf %299, %300 : vector<1x128xf32>
    %c1_90 = arith.constant 1 : index
    %302 = memref.load %arg6[%c1_90] : memref<4xf32, #tpu.memory_space<smem>>
    %303 = vector.broadcast %302 : f32 to vector<1x128xf32>
    %304 = arith.addf %301, %303 : vector<1x128xf32>
    %c1_91 = arith.constant 1 : index
    %c0_92 = arith.constant 0 : index
    %305 = vector.load %arg8[%c1_91, %c0_92] : memref<8x128xf32, #tpu.memory_space<vmem>>, vector<1x128xf32>
    tpu.vector_store %arg8[%c1_91, %c0_92], %304 {strides = array<i32>} : memref<8x128xf32, #tpu.memory_space<vmem>>, vector<1x128xf32>,
    %306 = vector.extract_strided_slice %295 {offsets = [1, 0], sizes = [1, 128], strides = [1, 1]} : vector<2x128xf32> to vector<1x128xf32>
    %307 = vector.extract_strided_slice %3 {offsets = [2, 0], sizes = [1, 128], strides = [1, 1]} : vector<8x128xf32> to vector<1x128xf32>
    %308 = arith.addf %306, %307 : vector<1x128xf32>
    %c2_93 = arith.constant 2 : index
    %309 = memref.load %arg6[%c2_93] : memref<4xf32, #tpu.memory_space<smem>>
    %310 = vector.broadcast %309 : f32 to vector<1x128xf32>
    %311 = arith.addf %308, %310 : vector<1x128xf32>
    %c2_94 = arith.constant 2 : index
    %c0_95 = arith.constant 0 : index
    %312 = vector.load %arg8[%c2_94, %c0_95] : memref<8x128xf32, #tpu.memory_space<vmem>>, vector<1x128xf32>
    tpu.vector_store %arg8[%c2_94, %c0_95], %311 {strides = array<i32>} : memref<8x128xf32, #tpu.memory_space<vmem>>, vector<1x128xf32>,
    %cst_96 = arith.constant 0.000000e+00 : f32
    %313 = vector.broadcast %cst_96 : f32 to vector<5x128xf32>
    %c3_97 = arith.constant 3 : index
    %c0_98 = arith.constant 0 : index
    %314 = vector.load %arg8[%c3_97, %c0_98] : memref<8x128xf32, #tpu.memory_space<vmem>>, vector<5x128xf32>
    tpu.vector_store %arg8[%c3_97, %c0_98], %313 {strides = array<i32>} : memref<8x128xf32, #tpu.memory_space<vmem>>, vector<5x128xf32>,
    return
  }
  func.func @transform_0(%arg0: i32) -> (i32, i32, i32) {
    %c0_i32 = arith.constant 0 : i32
    %c0_i32_0 = arith.constant 0 : i32
    %c0_i32_1 = arith.constant 0 : i32
    return %c0_i32, %c0_i32_0, %arg0 : i32, i32, i32
  }
  func.func @transform_1(%arg0: i32) -> (i32, i32) {
    %c0_i32 = arith.constant 0 : i32
    %c0_i32_0 = arith.constant 0 : i32
    return %c0_i32, %arg0 : i32, i32
  }
  func.func @transform_2(%arg0: i32) -> (i32, i32) {
    %c0_i32 = arith.constant 0 : i32
    %c0_i32_0 = arith.constant 0 : i32
    return %c0_i32, %arg0 : i32, i32
  }
  func.func @transform_3(%arg0: i32) -> (i32, i32) {
    %c0_i32 = arith.constant 0 : i32
    %c0_i32_0 = arith.constant 0 : i32
    %c0_i32_1 = arith.constant 0 : i32
    return %c0_i32, %c0_i32_0 : i32, i32
  }
  func.func @transform_4(%arg0: i32) -> (i32, i32) {
    %c0_i32 = arith.constant 0 : i32
    %c0_i32_0 = arith.constant 0 : i32
    %c0_i32_1 = arith.constant 0 : i32
    return %c0_i32, %c0_i32_0 : i32, i32
  }
  func.func @transform_5(%arg0: i32) -> i32 {
    %c0_i32 = arith.constant 0 : i32
    %c0_i32_0 = arith.constant 0 : i32
    return %c0_i32 : i32
  }
  func.func @transform_6(%arg0: i32) -> (i32, i32) {
    %c0_i32 = arith.constant 0 : i32
    %c0_i32_0 = arith.constant 0 : i32
    return %c0_i32, %arg0 : i32, i32
  }
  func.func @transform_7(%arg0: i32) -> (i32, i32) {
    %c0_i32 = arith.constant 0 : i32
    %c0_i32_0 = arith.constant 0 : i32
    return %c0_i32, %arg0 : i32, i32
  }
}

</mosaic_0001>

<llo_original>
// kernel: mul.27
$region0: #{mul.27}
  %s0 = inlined_call_operand.vmem [shape: f32[2,64], index: 0, kind: input, shape index: {}]
  %s1 = inlined_call_operand.vmem [shape: f32[128], index: 1, kind: output, shape index: {}]
  $region1: #{mul.27} parent=0
    #allocation0 [shape = 'u8[4096]{0}', space=vmem, size = 0x1000, scoped, tag = 'scoped mem for output reshape']
    #allocation1 [shape = 'u8[4096]{0}', space=vmem, size = 0x1000, scoped, tag = 'scoped mem for input reshape']
    %s3 = sshll.u32 1, 2
    %s4 = ssub.s32 %s3, 1
    %v5 = vld [vmem:[%s0] sm:%s4]
    %6 = vst [vmem:[#allocation1] sm:%s4] %v5
    %v7 = vld [vmem:[#allocation1] sm:$0x1]
    %vm8 = vcmask 523264
    %9 = vst.msk [vmem:[#allocation0] sm:$0x1] %vm8, %v7
    %s10 = scalar_lea.vmem [#allocation1], 1
    %v11 = vld [vmem:[%s10] sm:$0x1]
    %12 = vrot.lane.b32.xlu0 %v11, 64
    %v13 = vpop.permute.xlu0 %12
    %vm14 = vcmask 1048064
    %15 = vst.msk [vmem:[#allocation0] sm:$0x1] %vm14, %v13
    %s17 = sshll.u32 1, 1
    %s18 = ssub.s32 %s17, 1
    %v20 = vld [vmem:[#allocation0] sm:%s18]
    %s21 = sshll.u32 1, 1
    %s22 = ssub.s32 %s21, 1
    %23 = vst [vmem:[%s1] sm:%s22] %v20

// kernel: walk_forward.5
$region0: #{walk_forward.5}
  #allocation0 [shape = 'u32[]', space=smem, size = 0x4, offset = 0x4, fixed_abs, tag = 'smem constant byte address 0x4 - core index']
  #allocation1 [shape = 'u32[144,128]{1,0:T(1,128)}', space=vmem, size = 0x12000, scoped, tag = 'internal scratch']
  %s0 = inlined_call_operand.vmem [shape: f32[8,32,128], index: 0, kind: input, shape index: {}]
  %s1 = inlined_call_operand.vmem [shape: f32[32,128], index: 1, kind: input, shape index: {}]
  %s2 = inlined_call_operand.vmem [shape: f32[32,128], index: 2, kind: input, shape index: {}]
  %s3 = inlined_call_operand.vmem [shape: f32[8,32], index: 3, kind: input, shape index: {}]
  %s4 = inlined_call_operand.vmem [shape: f32[8,32], index: 4, kind: input, shape index: {}]
  %s5 = inlined_call_operand.vmem [shape: f32[4], index: 5, kind: input, shape index: {}]
  %s6 = inlined_call_operand.vmem [shape: f32[32,128], index: 6, kind: output, shape index: {0}]
  %s7 = inlined_call_operand.vmem [shape: f32[8,128], index: 7, kind: output, shape index: {1}]
  %8 = xla_tuple %s6, %s7
  %s9 = sld [smem:[#allocation0]]
  $region46: #{walk_forward.5} parent=0
    _
  %s11 = ssub.s32 1, %s9
  %s12 = scalar_select 0, %s11, %s9
  $region1: #{walk_forward.5} parent=0
    #allocation2 [shape = 'u8[512]{0}', space=smem, size = 0x200, scoped, tag = 'input window, operand 5, single buffered']
    #allocation3 [shape = 's32[1]{0}', space=sflag, size = 0x4, scoped, tag = 'scoped memory for walk_forward.5']
    %13 = vsyncpa [#allocation3], 0
    // Predicated region
    $region2: #{walk_forward.5} parent=1 // pred_check
      _
    $region3: #{walk_forward.5} parent=1 // pred_check_branch
      %15 = sbr.rel (0) target = $region5
    $region4: #{walk_forward.5} parent=1 // pred_region
      _
    $region5: #{walk_forward.5} parent=1 // pred_fallthru
      _
    // Predicated region
    $region6: #{walk_forward.5} parent=1 // pred_check
      _
    $region7: #{walk_forward.5} parent=1 // pred_check_branch
      %17 = sbr.rel (0) target = $region9
    $region8: #{walk_forward.5} parent=1 // pred_region
      _
    $region9: #{walk_forward.5} parent=1 // pred_fallthru
      _
    // Predicated region
    $region10: #{walk_forward.5} parent=1 // pred_check
      _
    $region11: #{walk_forward.5} parent=1 // pred_check_branch
      %19 = sbr.rel (0) target = $region13
    $region12: #{walk_forward.5} parent=1 // pred_region
      _
    $region13: #{walk_forward.5} parent=1 // pred_fallthru
      _
    // Predicated region
    $region14: #{walk_forward.5} parent=1 // pred_check
      _
    $region15: #{walk_forward.5} parent=1 // pred_check_branch
      %21 = sbr.rel (0) target = $region17
    $region16: #{walk_forward.5} parent=1 // pred_region
      _
    $region17: #{walk_forward.5} parent=1 // pred_fallthru
      _
    // Predicated region
    $region18: #{walk_forward.5} parent=1 // pred_check
      _
    $region19: #{walk_forward.5} parent=1 // pred_check_branch
      %23 = sbr.rel (0) target = $region21
    $region20: #{walk_forward.5} parent=1 // pred_region
      _
    $region21: #{walk_forward.5} parent=1 // pred_fallthru
      _
    // Predicated region
    $region22: #{walk_forward.5} parent=1 // pred_check
      _
    $region23: #{walk_forward.5} parent=1 // pred_check_branch
      %25 = sbr.rel (0) target = $region25
    $region24: #{walk_forward.5} parent=1 // pred_region
      %s27 = ssub.s32 16, 16
      %28 = vsyncadd [#allocation3], %s27
      %s30 = sshll.u32 %s5, 4
      %s31 = int_to_ptr.vmem [resolvable:$true] %s30
      %33 = dma.vmem_to_smem %s31, 16, [#allocation2], [#allocation3]
    $region25: #{walk_forward.5} parent=1 // pred_fallthru
      _
    // Predicated region
    $region26: #{walk_forward.5} parent=1 // pred_check
      _
    $region27: #{walk_forward.5} parent=1 // pred_check_branch
      %35 = sbr.rel (0) target = $region29
    $region28: #{walk_forward.5} parent=1 // pred_region
      %36 = dma.done [#allocation3], 16
    $region29: #{walk_forward.5} parent=1 // pred_fallthru
      _
    %37 = sfence
    %v38 = vld [vmem:[%s1] sm:$0xff]
    %v39 = vld [vmem:[%s1 + $0x8] sm:$0xff]
    %v40 = vld [vmem:[%s1 + $0x10] sm:$0xff]
    %v41 = vld [vmem:[%s1 + $0x18] sm:$0xff]
    %v42 = vld [vmem:[%s3] sm:$0xff]
    %v43 = vld [vmem:[%s4] sm:$0xff]
    %vm44 = vcmask 261120
    %v46 = vsel %vm44, %v43, 0
    %48 = vmatprep.subr.mxu0 0.0
    %49 = vmatpush1.msra.mxu0 0.0
    %50 = vmatprep.subr.mxu0 0.0
    %51 = vmatpush1.msra.mxu0 0.0
    %52 = vmatprep.subr.mxu0 0.0
    %53 = vmatpush1.msra.mxu0 0.0
    %54 = vmatprep.subr.mxu0 0.0
    %55 = vmatpush1.msra.mxu0 0.0
    %56 = vmatprep.subr.mxu0 0.0
    %57 = vmatpush1.msra.mxu0 0.0
    %58 = vmatprep.subr.mxu0 0.0
    %59 = vmatpush1.msra.mxu0 0.0
    %60 = vmatprep.subr.mxu0 0.0
    %61 = vmatpush1.msra.mxu0 0.0
    %62 = vmatprep.subr.mxu0 0.0
    %63 = vmatpush1.msra.mxu0 0.0
    %64 = vmatprep.subr.mxu0 0.0
    %65 = vmatpush1.msra.mxu0 0.0
    %66 = vmatprep.subr.mxu0 0.0
    %67 = vmatpush1.msra.mxu0 0.0
    %68 = vmatprep.subr.mxu0 0.0
    %69 = vmatpush1.msra.mxu0 0.0
    %70 = vmatprep.subr.mxu0 0.0
    %71 = vmatpush1.msra.mxu0 0.0
    %72 = vmatprep.subr.mxu0 0.0
    %73 = vmatpush1.msra.mxu0 %v41
    %74 = vmatprep.subr.mxu0 0.0
    %75 = vmatpush1.msra.mxu0 %v40
    %76 = vmatprep.subr.mxu0 0.0
    %77 = vmatpush1.msra.mxu0 %v39
    %78 = vmatprep.subr.mxu0 0.0
    %79 = vmatpush1.msra.mxu0 %v38
    %80 = vmatprep.subr.mxu0 0.0
    %81 = vmatpush2.msra.mxu0 0.0
    %82 = vmatprep.subr.mxu0 0.0
    %83 = vmatpush2.msra.mxu0 0.0
    %84 = vmatprep.subr.mxu0 0.0
    %85 = vmatpush2.msra.mxu0 0.0
    %86 = vmatprep.subr.mxu0 0.0
    %87 = vmatpush2.msra.mxu0 0.0
    %88 = vmatprep.subr.mxu0 0.0
    %89 = vmatpush2.msra.mxu0 0.0
    %90 = vmatprep.subr.mxu0 0.0
    %91 = vmatpush2.msra.mxu0 0.0
    %92 = vmatprep.subr.mxu0 0.0
    %93 = vmatpush2.msra.mxu0 0.0
    %94 = vmatprep.subr.mxu0 0.0
    %95 = vmatpush2.msra.mxu0 0.0
    %96 = vmatprep.subr.mxu0 0.0
    %97 = vmatpush2.msra.mxu0 0.0
    %98 = vmatprep.subr.mxu0 0.0
    %99 = vmatpush2.msra.mxu0 0.0
    %100 = vmatprep.subr.mxu0 0.0
    %101 = vmatpush2.msra.mxu0 0.0
    %102 = vmatprep.subr.mxu0 0.0
    %103 = vmatpush2.msra.mxu0 0.0
    %104 = vmatprep.subr.mxu0 0.0
    %105 = vmatpush2.msra.mxu0 0.0
    %106 = vmatprep.subr.mxu0 0.0
    %107 = vmatpush2.msra.mxu0 0.0
    %108 = vmatprep.subr.mxu0 0.0
    %109 = vmatpush2.msra.mxu0 0.0
    %110 = vmatprep.subr.mxu0 0.0
    %111 = vmatpush2.msra.mxu0 0.0
    %112 = vmatprep.mubr.f32.mxu0 0.0
    %113 = vmatmul.mubr.f32.gmra.mxu0 %v46
    %v114 = vpop.f32.mrf.mxu0
    %v115 = vadd.f32 0.0, %v114
    %v116 = vpop.f32.mrf.mxu0
    %117 = vdwg.mxu0
    %s118 = sld [smem:[#allocation2]]
    %v119 = vstv %s118
    %v120 = vadd.f32 %v115, %v119
    %v121 = vld [vmem:[%s2] sm:$0xff]
    %v122 = vld [vmem:[%s2 + $0x8] sm:$0xff]
    %v123 = vld [vmem:[%s2 + $0x10] sm:$0xff]
    %v124 = vld [vmem:[%s2 + $0x18] sm:$0xff]
    %v125 = vsub.f32 %v121, %v38
    %v126 = vsub.f32 %v122, %v39
    %v127 = vsub.f32 %v123, %v40
    %v128 = vsub.f32 %v124, %v41
    %v129 = vmul.f32 %v125, %v125
    %v130 = vmul.f32 %v126, %v126
    %v131 = vmul.f32 %v127, %v127
    %v132 = vmul.f32 %v128, %v128
    %v133 = vadd.f32 %v129, %v130
    %v134 = vadd.f32 %v133, %v131
    %v135 = vadd.f32 %v134, %v132
    %v136 = vrot.slane %v135, 4
    %v137 = vadd.f32 %v135, %v136
    %v138 = vrot.slane %v137, 2
    %v139 = vadd.f32 %v137, %v138
    %v140 = vrot.slane %v139, 1
    %v141 = vadd.f32 %v139, %v140
    %v142 = vld [vmem:[%s0] sm:$0xff]
    %v143 = vld [vmem:[%s0 + $0x8] sm:$0xff]
    %v144 = vld [vmem:[%s0 + $0x10] sm:$0xff]
    %v145 = vld [vmem:[%s0 + $0x18] sm:$0xff]
    %v147 = vsel %vm44, %v42, 0
    %149 = vmatprep.subr.mxu0 0.0
    %150 = vmatpush1.msra.mxu0 0.0
    %151 = vmatprep.subr.mxu0 0.0
    %152 = vmatpush1.msra.mxu0 0.0
    %153 = vmatprep.subr.mxu0 0.0
    %154 = vmatpush1.msra.mxu0 0.0
    %155 = vmatprep.subr.mxu0 0.0
    %156 = vmatpush1.msra.mxu0 0.0
    %157 = vmatprep.subr.mxu0 0.0
    %158 = vmatpush1.msra.mxu0 0.0
    %159 = vmatprep.subr.mxu0 0.0
    %160 = vmatpush1.msra.mxu0 0.0
    %161 = vmatprep.subr.mxu0 0.0
    %162 = vmatpush1.msra.mxu0 0.0
    %163 = vmatprep.subr.mxu0 0.0
    %164 = vmatpush1.msra.mxu0 0.0
    %165 = vmatprep.subr.mxu0 0.0
    %166 = vmatpush1.msra.mxu0 0.0
    %167 = vmatprep.subr.mxu0 0.0
    %168 = vmatpush1.msra.mxu0 0.0
    %169 = vmatprep.subr.mxu0 0.0
    %170 = vmatpush1.msra.mxu0 0.0
    %171 = vmatprep.subr.mxu0 0.0
    %172 = vmatpush1.msra.mxu0 0.0
    %173 = vmatprep.subr.mxu0 0.0
    %174 = vmatpush1.msra.mxu0 %v145
    %175 = vmatprep.subr.mxu0 0.0
    %176 = vmatpush1.msra.mxu0 %v144
    %177 = vmatprep.subr.mxu0 0.0
    %178 = vmatpush1.msra.mxu0 %v143
    %179 = vmatprep.subr.mxu0 0.0
    %180 = vmatpush1.msra.mxu0 %v142
    %181 = vmatprep.subr.mxu0 0.0
    %182 = vmatpush2.msra.mxu0 0.0
    %183 = vmatprep.subr.mxu0 0.0
    %184 = vmatpush2.msra.mxu0 0.0
    %185 = vmatprep.subr.mxu0 0.0
    %186 = vmatpush2.msra.mxu0 0.0
    %187 = vmatprep.subr.mxu0 0.0
    %188 = vmatpush2.msra.mxu0 0.0
    %189 = vmatprep.subr.mxu0 0.0
    %190 = vmatpush2.msra.mxu0 0.0
    %191 = vmatprep.subr.mxu0 0.0
    %192 = vmatpush2.msra.mxu0 0.0
    %193 = vmatprep.subr.mxu0 0.0
    %194 = vmatpush2.msra.mxu0 0.0
    %195 = vmatprep.subr.mxu0 0.0
    %196 = vmatpush2.msra.mxu0 0.0
    %197 = vmatprep.subr.mxu0 0.0
    %198 = vmatpush2.msra.mxu0 0.0
    %199 = vmatprep.subr.mxu0 0.0
    %200 = vmatpush2.msra.mxu0 0.0
    %201 = vmatprep.subr.mxu0 0.0
    %202 = vmatpush2.msra.mxu0 0.0
    %203 = vmatprep.subr.mxu0 0.0
    %204 = vmatpush2.msra.mxu0 0.0
    %205 = vmatprep.subr.mxu0 0.0
    %206 = vmatpush2.msra.mxu0 0.0
    %207 = vmatprep.subr.mxu0 0.0
    %208 = vmatpush2.msra.mxu0 0.0
    %209 = vmatprep.subr.mxu0 0.0
    %210 = vmatpush2.msra.mxu0 0.0
    %211 = vmatprep.subr.mxu0 0.0
    %212 = vmatpush2.msra.mxu0 0.0
    %213 = vmatprep.mubr.f32.mxu0 0.0
    %214 = vmatmul.mubr.f32.gmra.mxu0 %v147
    %v215 = vpop.f32.mrf.mxu0
    %v216 = vadd.f32 0.0, %v215
    %v217 = vpop.f32.mrf.mxu0
    %218 = vdwg.mxu0
    %v219 = vadd.f32 %v216, %v120
    %v220 = vsub.f32 %v142, %v121
    %v221 = vsub.f32 %v143, %v122
    %v222 = vsub.f32 %v144, %v123
    %v223 = vsub.f32 %v145, %v124
    %v224 = vmul.f32 %v125, %v220
    %v225 = vmul.f32 %v126, %v221
    %v226 = vmul.f32 %v127, %v222
    %v227 = vmul.f32 %v128, %v223
    %v228 = vadd.f32 %v224, %v225
    %v229 = vadd.f32 %v228, %v226
    %v230 = vadd.f32 %v229, %v227
    %v231 = vrot.slane %v230, 4
    %v232 = vadd.f32 %v230, %v231
    %v233 = vrot.slane %v232, 2
    %v234 = vadd.f32 %v232, %v233
    %v235 = vrot.slane %v234, 1
    %v236 = vadd.f32 %v234, %v235
    %v237 = vmul.f32 %v220, %v220
    %v238 = vmul.f32 %v221, %v221
    %v239 = vmul.f32 %v222, %v222
    %v240 = vmul.f32 %v223, %v223
    %v241 = vadd.f32 %v237, %v238
    %v242 = vadd.f32 %v241, %v239
    %v243 = vadd.f32 %v242, %v240
    %v244 = vrot.slane %v243, 4
    %v245 = vadd.f32 %v243, %v244
    %v246 = vrot.slane %v245, 2
    %v247 = vadd.f32 %v245, %v246
    %v248 = vrot.slane %v247, 1
    %v249 = vadd.f32 %v247, %v248
    %v250 = vmul.f32 %v141, %v249
    %v251 = vmax.f32 %v250, 1e-16
    %v252 = vrsqrt.pop %v251
    %v253 = vmul.f32 %v236, %v252
    %v254 = vadd.f32 %v253, 1.0
    %v255 = vmax.f32 %v254, 0.0
    %v256 = vmin.f32 %v255, 1.0
    %v257 = vmul.f32 %v219, %v256
    %vm258 = vcmp.gt.f32.partialorder %v257, -inf
    %v259 = vsel %vm258, %v257, -inf
    %v260 = vsel %vm258, 1, 0
    %v261 = vlaneseq
    %v262 = vshrl.u32 %v261, 7
    %v263 = vsub.s32 0, %v262
    %v264 = vrot.slane %v260, %v263
    %vm265 = vcmp.eq.s32.totalorder %v264, 1
    %v266 = vsel %vm265, %v142, 0.0
    %v267 = vsel %vm265, %v143, 0.0
    %v268 = vsel %vm265, %v144, 0.0
    %v269 = vsel %vm265, %v145, 0.0
    %v270 = vsel %vm265, %v216, 0.0
    %s271 = scalar_lea.vmem %s0, 32
    %v272 = vld [vmem:[%s271] sm:$0xff]
    %v273 = vld [vmem:[%s271 + $0x8] sm:$0xff]
    %v274 = vld [vmem:[%s271 + $0x10] sm:$0xff]
    %v275 = vld [vmem:[%s271 + $0x18] sm:$0xff]
    %276 = vmatprep.subr.mxu0 0.0
    %277 = vmatpush1.msra.mxu0 0.0
    %278 = vmatprep.subr.mxu0 0.0
    %279 = vmatpush1.msra.mxu0 0.0
    %280 = vmatprep.subr.mxu0 0.0
    %281 = vmatpush1.msra.mxu0 0.0
    %282 = vmatprep.subr.mxu0 0.0
    %283 = vmatpush1.msra.mxu0 0.0
    %284 = vmatprep.subr.mxu0 0.0
    %285 = vmatpush1.msra.mxu0 0.0
    %286 = vmatprep.subr.mxu0 0.0
    %287 = vmatpush1.msra.mxu0 0.0
    %288 = vmatprep.subr.mxu0 0.0
    %289 = vmatpush1.msra.mxu0 0.0
    %290 = vmatprep.subr.mxu0 0.0
    %291 = vmatpush1.msra.mxu0 0.0
    %292 = vmatprep.subr.mxu0 0.0
    %293 = vmatpush1.msra.mxu0 0.0
    %294 = vmatprep.subr.mxu0 0.0
    %295 = vmatpush1.msra.mxu0 0.0
    %296 = vmatprep.subr.mxu0 0.0
    %297 = vmatpush1.msra.mxu0 0.0
    %298 = vmatprep.subr.mxu0 0.0
    %299 = vmatpush1.msra.mxu0 0.0
    %300 = vmatprep.subr.mxu0 0.0
    %301 = vmatpush1.msra.mxu0 %v275
    %302 = vmatprep.subr.mxu0 0.0
    %303 = vmatpush1.msra.mxu0 %v274
    %304 = vmatprep.subr.mxu0 0.0
    %305 = vmatpush1.msra.mxu0 %v273
    %306 = vmatprep.subr.mxu0 0.0
    %307 = vmatpush1.msra.mxu0 %v272
    %308 = vmatprep.subr.mxu0 0.0
    %309 = vmatpush2.msra.mxu0 0.0
    %310 = vmatprep.subr.mxu0 0.0
    %311 = vmatpush2.msra.mxu0 0.0
    %312 = vmatprep.subr.mxu0 0.0
    %313 = vmatpush2.msra.mxu0 0.0
    %314 = vmatprep.subr.mxu0 0.0
    %315 = vmatpush2.msra.mxu0 0.0
    %316 = vmatprep.subr.mxu0 0.0
    %317 = vmatpush2.msra.mxu0 0.0
    %318 = vmatprep.subr.mxu0 0.0
    %319 = vmatpush2.msra.mxu0 0.0
    %320 = vmatprep.subr.mxu0 0.0
    %321 = vmatpush2.msra.mxu0 0.0
    %322 = vmatprep.subr.mxu0 0.0
    %323 = vmatpush2.msra.mxu0 0.0
    %324 = vmatprep.subr.mxu0 0.0
    %325 = vmatpush2.msra.mxu0 0.0
    %326 = vmatprep.subr.mxu0 0.0
    %327 = vmatpush2.msra.mxu0 0.0
    %328 = vmatprep.subr.mxu0 0.0
    %329 = vmatpush2.msra.mxu0 0.0
    %330 = vmatprep.subr.mxu0 0.0
    %331 = vmatpush2.msra.mxu0 0.0
    %332 = vmatprep.subr.mxu0 0.0
    %333 = vmatpush2.msra.mxu0 0.0
    %334 = vmatprep.subr.mxu0 0.0
    %335 = vmatpush2.msra.mxu0 0.0
    %336 = vmatprep.subr.mxu0 0.0
    %337 = vmatpush2.msra.mxu0 0.0
    %338 = vmatprep.subr.mxu0 0.0
    %339 = vmatpush2.msra.mxu0 0.0
    %340 = vmatprep.mubr.f32.mxu0 0.0
    %341 = vmatmul.mubr.f32.gmra.mxu0 %v147
    %v342 = vpop.f32.mrf.mxu0
    %v343 = vadd.f32 0.0, %v342
    %v344 = vpop.f32.mrf.mxu0
    %345 = vdwg.mxu0
    %v346 = vadd.f32 %v343, %v120
    %v347 = vsub.f32 %v272, %v121
    %v348 = vsub.f32 %v273, %v122
    %v349 = vsub.f32 %v274, %v123
    %v350 = vsub.f32 %v275, %v124
    %v351 = vmul.f32 %v125, %v347
    %v352 = vmul.f32 %v126, %v348
    %v353 = vmul.f32 %v127, %v349
    %v354 = vmul.f32 %v128, %v350
    %v355 = vadd.f32 %v351, %v352
    %v356 = vadd.f32 %v355, %v353
    %v357 = vadd.f32 %v356, %v354
    %v358 = vrot.slane %v357, 4
    %v359 = vadd.f32 %v357, %v358
    %v360 = vrot.slane %v359, 2
    %v361 = vadd.f32 %v359, %v360
    %v362 = vrot.slane %v361, 1
    %v363 = vadd.f32 %v361, %v362
    %v364 = vmul.f32 %v347, %v347
    %v365 = vmul.f32 %v348, %v348
    %v366 = vmul.f32 %v349, %v349
    %v367 = vmul.f32 %v350, %v350
    %v368 = vadd.f32 %v364, %v365
    %v369 = vadd.f32 %v368, %v366
    %v370 = vadd.f32 %v369, %v367
    %v371 = vrot.slane %v370, 4
    %v372 = vadd.f32 %v370, %v371
    %v373 = vrot.slane %v372, 2
    %v374 = vadd.f32 %v372, %v373
    %v375 = vrot.slane %v374, 1
    %v376 = vadd.f32 %v374, %v375
    %v377 = vmul.f32 %v141, %v376
    %v378 = vmax.f32 %v377, 1e-16
    %v379 = vrsqrt.pop %v378
    %v380 = vmul.f32 %v363, %v379
    %v381 = vadd.f32 %v380, 1.0
    %v382 = vmax.f32 %v381, 0.0
    %v383 = vmin.f32 %v382, 1.0
    %v384 = vmul.f32 %v346, %v383
    %vm385 = vcmp.gt.f32.partialorder %v384, %v259
    %v386 = vsel %vm385, %v384, %v259
    %v387 = vsel %vm385, 1, 0
    %v388 = vlaneseq
    %v389 = vshrl.u32 %v388, 7
    %v390 = vsub.s32 0, %v389
    %v391 = vrot.slane %v387, %v390
    %vm392 = vcmp.eq.s32.totalorder %v391, 1
    %v393 = vsel %vm392, %v272, %v266
    %v394 = vsel %vm392, %v273, %v267
    %v395 = vsel %vm392, %v274, %v268
    %v396 = vsel %vm392, %v275, %v269
    %v397 = vsel %vm392, %v343, %v270
    %s398 = scalar_lea.vmem %s0, 64
    %v399 = vld [vmem:[%s398] sm:$0xff]
    %v400 = vld [vmem:[%s398 + $0x8] sm:$0xff]
    %v401 = vld [vmem:[%s398 + $0x10] sm:$0xff]
    %v402 = vld [vmem:[%s398 + $0x18] sm:$0xff]
    %403 = vmatprep.subr.mxu0 0.0
    %404 = vmatpush1.msra.mxu0 0.0
    %405 = vmatprep.subr.mxu0 0.0
    %406 = vmatpush1.msra.mxu0 0.0
    %407 = vmatprep.subr.mxu0 0.0
    %408 = vmatpush1.msra.mxu0 0.0
    %409 = vmatprep.subr.mxu0 0.0
    %410 = vmatpush1.msra.mxu0 0.0
    %411 = vmatprep.subr.mxu0 0.0
    %412 = vmatpush1.msra.mxu0 0.0
    %413 = vmatprep.subr.mxu0 0.0
    %414 = vmatpush1.msra.mxu0 0.0
    %415 = vmatprep.subr.mxu0 0.0
    %416 = vmatpush1.msra.mxu0 0.0
    %417 = vmatprep.subr.mxu0 0.0
    %418 = vmatpush1.msra.mxu0 0.0
    %419 = vmatprep.subr.mxu0 0.0
    %420 = vmatpush1.msra.mxu0 0.0
    %421 = vmatprep.subr.mxu0 0.0
    %422 = vmatpush1.msra.mxu0 0.0
    %423 = vmatprep.subr.mxu0 0.0
    %424 = vmatpush1.msra.mxu0 0.0
    %425 = vmatprep.subr.mxu0 0.0
    %426 = vmatpush1.msra.mxu0 0.0
    %427 = vmatprep.subr.mxu0 0.0
    %428 = vmatpush1.msra.mxu0 %v402
    %429 = vmatprep.subr.mxu0 0.0
    %430 = vmatpush1.msra.mxu0 %v401
    %431 = vmatprep.subr.mxu0 0.0
    %432 = vmatpush1.msra.mxu0 %v400
    %433 = vmatprep.subr.mxu0 0.0
    %434 = vmatpush1.msra.mxu0 %v399
    %435 = vmatprep.subr.mxu0 0.0
    %436 = vmatpush2.msra.mxu0 0.0
    %437 = vmatprep.subr.mxu0 0.0
    %438 = vmatpush2.msra.mxu0 0.0
    %439 = vmatprep.subr.mxu0 0.0
    %440 = vmatpush2.msra.mxu0 0.0
    %441 = vmatprep.subr.mxu0 0.0
    %442 = vmatpush2.msra.mxu0 0.0
    %443 = vmatprep.subr.mxu0 0.0
    %444 = vmatpush2.msra.mxu0 0.0
    %445 = vmatprep.subr.mxu0 0.0
    %446 = vmatpush2.msra.mxu0 0.0
    %447 = vmatprep.subr.mxu0 0.0
    %448 = vmatpush2.msra.mxu0 0.0
    %449 = vmatprep.subr.mxu0 0.0
    %450 = vmatpush2.msra.mxu0 0.0
    %451 = vmatprep.subr.mxu0 0.0
    %452 = vmatpush2.msra.mxu0 0.0
    %453 = vmatprep.subr.mxu0 0.0
    %454 = vmatpush2.msra.mxu0 0.0
    %455 = vmatprep.subr.mxu0 0.0
    %456 = vmatpush2.msra.mxu0 0.0
    %457 = vmatprep.subr.mxu0 0.0
    %458 = vmatpush2.msra.mxu0 0.0
    %459 = vmatprep.subr.mxu0 0.0
    %460 = vmatpush2.msra.mxu0 0.0
    %461 = vmatprep.subr.mxu0 0.0
    %462 = vmatpush2.msra.mxu0 0.0
    %463 = vmatprep.subr.mxu0 0.0
    %464 = vmatpush2.msra.mxu0 0.0
    %465 = vmatprep.subr.mxu0 0.0
    %466 = vmatpush2.msra.mxu0 0.0
    %467 = vmatprep.mubr.f32.mxu0 0.0
    %468 = vmatmul.mubr.f32.gmra.mxu0 %v147
    %v469 = vpop.f32.mrf.mxu0
    %v470 = vadd.f32 0.0, %v469
    %v471 = vpop.f32.mrf.mxu0
    %472 = vdwg.mxu0
    %v473 = vadd.f32 %v470, %v120
    %v474 = vsub.f32 %v399, %v121
    %v475 = vsub.f32 %v400, %v122
    %v476 = vsub.f32 %v401, %v123
    %v477 = vsub.f32 %v402, %v124
    %v478 = vmul.f32 %v125, %v474
    %v479 = vmul.f32 %v126, %v475
    %v480 = vmul.f32 %v127, %v476
    %v481 = vmul.f32 %v128, %v477
    %v482 = vadd.f32 %v478, %v479
    %v483 = vadd.f32 %v482, %v480
    %v484 = vadd.f32 %v483, %v481
    %v485 = vrot.slane %v484, 4
    %v486 = vadd.f32 %v484, %v485
    %v487 = vrot.slane %v486, 2
    %v488 = vadd.f32 %v486, %v487
    %v489 = vrot.slane %v488, 1
    %v490 = vadd.f32 %v488, %v489
    %v491 = vmul.f32 %v474, %v474
    %v492 = vmul.f32 %v475, %v475
    %v493 = vmul.f32 %v476, %v476
    %v494 = vmul.f32 %v477, %v477
    %v495 = vadd.f32 %v491, %v492
    %v496 = vadd.f32 %v495, %v493
    %v497 = vadd.f32 %v496, %v494
    %v498 = vrot.slane %v497, 4
    %v499 = vadd.f32 %v497, %v498
    %v500 = vrot.slane %v499, 2
    %v501 = vadd.f32 %v499, %v500
    %v502 = vrot.slane %v501, 1
    %v503 = vadd.f32 %v501, %v502
    %v504 = vmul.f32 %v141, %v503
    %v505 = vmax.f32 %v504, 1e-16
    %v506 = vrsqrt.pop %v505
    %v507 = vmul.f32 %v490, %v506
    %v508 = vadd.f32 %v507, 1.0
    %v509 = vmax.f32 %v508, 0.0
    %v510 = vmin.f32 %v509, 1.0
    %v511 = vmul.f32 %v473, %v510
    %vm512 = vcmp.gt.f32.partialorder %v511, %v386
    %v513 = vsel %vm512, %v511, %v386
    %v514 = vsel %vm512, 2, %v387
    %v515 = vsel %vm512, 1, 0
    %v516 = vlaneseq
    %v517 = vshrl.u32 %v516, 7
    %v518 = vsub.s32 0, %v517
    %v519 = vrot.slane %v515, %v518
    %vm520 = vcmp.eq.s32.totalorder %v519, 1
    %v521 = vsel %vm520, %v399, %v393
    %v522 = vsel %vm520, %v400, %v394
    %v523 = vsel %vm520, %v401, %v395
    %v524 = vsel %vm520, %v402, %v396
    %v525 = vsel %vm520, %v470, %v397
    %s526 = scalar_lea.vmem %s0, 96
    %v527 = vld [vmem:[%s526] sm:$0xff]
    %v528 = vld [vmem:[%s526 + $0x8] sm:$0xff]
    %v529 = vld [vmem:[%s526 + $0x10] sm:$0xff]
    %v530 = vld [vmem:[%s526 + $0x18] sm:$0xff]
    %531 = vmatprep.subr.mxu0 0.0
    %532 = vmatpush1.msra.mxu0 0.0
    %533 = vmatprep.subr.mxu0 0.0
    %534 = vmatpush1.msra.mxu0 0.0
    %535 = vmatprep.subr.mxu0 0.0
    %536 = vmatpush1.msra.mxu0 0.0
    %537 = vmatprep.subr.mxu0 0.0
    %538 = vmatpush1.msra.mxu0 0.0
    %539 = vmatprep.subr.mxu0 0.0
    %540 = vmatpush1.msra.mxu0 0.0
    %541 = vmatprep.subr.mxu0 0.0
    %542 = vmatpush1.msra.mxu0 0.0
    %543 = vmatprep.subr.mxu0 0.0
    %544 = vmatpush1.msra.mxu0 0.0
    %545 = vmatprep.subr.mxu0 0.0
    %546 = vmatpush1.msra.mxu0 0.0
    %547 = vmatprep.subr.mxu0 0.0
    %548 = vmatpush1.msra.mxu0 0.0
    %549 = vmatprep.subr.mxu0 0.0
    %550 = vmatpush1.msra.mxu0 0.0
    %551 = vmatprep.subr.mxu0 0.0
    %552 = vmatpush1.msra.mxu0 0.0
    %553 = vmatprep.subr.mxu0 0.0
    %554 = vmatpush1.msra.mxu0 0.0
    %555 = vmatprep.subr.mxu0 0.0
    %556 = vmatpush1.msra.mxu0 %v530
    %557 = vmatprep.subr.mxu0 0.0
    %558 = vmatpush1.msra.mxu0 %v529
    %559 = vmatprep.subr.mxu0 0.0
    %560 = vmatpush1.msra.mxu0 %v528
    %561 = vmatprep.subr.mxu0 0.0
    %562 = vmatpush1.msra.mxu0 %v527
    %563 = vmatprep.subr.mxu0 0.0
    %564 = vmatpush2.msra.mxu0 0.0
    %565 = vmatprep.subr.mxu0 0.0
    %566 = vmatpush2.msra.mxu0 0.0
    %567 = vmatprep.subr.mxu0 0.0
    %568 = vmatpush2.msra.mxu0 0.0
    %569 = vmatprep.subr.mxu0 0.0
    %570 = vmatpush2.msra.mxu0 0.0
    %571 = vmatprep.subr.mxu0 0.0
    %572 = vmatpush2.msra.mxu0 0.0
    %573 = vmatprep.subr.mxu0 0.0
    %574 = vmatpush2.msra.mxu0 0.0
    %575 = vmatprep.subr.mxu0 0.0
    %576 = vmatpush2.msra.mxu0 0.0
    %577 = vmatprep.subr.mxu0 0.0
    %578 = vmatpush2.msra.mxu0 0.0
    %579 = vmatprep.subr.mxu0 0.0
    %580 = vmatpush2.msra.mxu0 0.0
    %581 = vmatprep.subr.mxu0 0.0
    %582 = vmatpush2.msra.mxu0 0.0
    %583 = vmatprep.subr.mxu0 0.0
    %584 = vmatpush2.msra.mxu0 0.0
    %585 = vmatprep.subr.mxu0 0.0
    %586 = vmatpush2.msra.mxu0 0.0
    %587 = vmatprep.subr.mxu0 0.0
    %588 = vmatpush2.msra.mxu0 0.0
    %589 = vmatprep.subr.mxu0 0.0
    %590 = vmatpush2.msra.mxu0 0.0
    %591 = vmatprep.subr.mxu0 0.0
    %592 = vmatpush2.msra.mxu0 0.0
    %593 = vmatprep.subr.mxu0 0.0
    %594 = vmatpush2.msra.mxu0 0.0
    %595 = vmatprep.mubr.f32.mxu0 0.0
    %596 = vmatmul.mubr.f32.gmra.mxu0 %v147
    %v597 = vpop.f32.mrf.mxu0
    %v598 = vadd.f32 0.0, %v597
    %v599 = vpop.f32.mrf.mxu0
    %600 = vdwg.mxu0
    %v601 = vadd.f32 %v598, %v120
    %v602 = vsub.f32 %v527, %v121
    %v603 = vsub.f32 %v528, %v122
    %v604 = vsub.f32 %v529, %v123
    %v605 = vsub.f32 %v530, %v124
    %v606 = vmul.f32 %v125, %v602
    %v607 = vmul.f32 %v126, %v603
    %v608 = vmul.f32 %v127, %v604
    %v609 = vmul.f32 %v128, %v605
    %v610 = vadd.f32 %v606, %v607
    %v611 = vadd.f32 %v610, %v608
    %v612 = vadd.f32 %v611, %v609
    %v613 = vrot.slane %v612, 4
    %v614 = vadd.f32 %v612, %v613
    %v615 = vrot.slane %v614, 2
    %v616 = vadd.f32 %v614, %v615
    %v617 = vrot.slane %v616, 1
    %v618 = vadd.f32 %v616, %v617
    %v619 = vmul.f32 %v602, %v602
    %v620 = vmul.f32 %v603, %v603
    %v621 = vmul.f32 %v604, %v604
    %v622 = vmul.f32 %v605, %v605
    %v623 = vadd.f32 %v619, %v620
    %v624 = vadd.f32 %v623, %v621
    %v625 = vadd.f32 %v624, %v622
    %v626 = vrot.slane %v625, 4
    %v627 = vadd.f32 %v625, %v626
    %v628 = vrot.slane %v627, 2
    %v629 = vadd.f32 %v627, %v628
    %v630 = vrot.slane %v629, 1
    %v631 = vadd.f32 %v629, %v630
    %v632 = vmul.f32 %v141, %v631
    %v633 = vmax.f32 %v632, 1e-16
    %v634 = vrsqrt.pop %v633
    %v635 = vmul.f32 %v618, %v634
    %v636 = vadd.f32 %v635, 1.0
    %v637 = vmax.f32 %v636, 0.0
    %v638 = vmin.f32 %v637, 1.0
    %v639 = vmul.f32 %v601, %v638
    %vm640 = vcmp.gt.f32.partialorder %v639, %v513
    %v641 = vsel %vm640, %v639, %v513
    %v642 = vsel %vm640, 3, %v514
    %v643 = vsel %vm640, 1, 0
    %v644 = vlaneseq
    %v645 = vshrl.u32 %v644, 7
    %v646 = vsub.s32 0, %v645
    %v647 = vrot.slane %v643, %v646
    %vm648 = vcmp.eq.s32.totalorder %v647, 1
    %v649 = vsel %vm648, %v527, %v521
    %v650 = vsel %vm648, %v528, %v522
    %v651 = vsel %vm648, %v529, %v523
    %v652 = vsel %vm648, %v530, %v524
    %v653 = vsel %vm648, %v598, %v525
    %s654 = scalar_lea.vmem %s0, 128
    %v655 = vld [vmem:[%s654] sm:$0xff]
    %v656 = vld [vmem:[%s654 + $0x8] sm:$0xff]
    %v657 = vld [vmem:[%s654 + $0x10] sm:$0xff]
    %v658 = vld [vmem:[%s654 + $0x18] sm:$0xff]
    %659 = vmatprep.subr.mxu0 0.0
    %660 = vmatpush1.msra.mxu0 0.0
    %661 = vmatprep.subr.mxu0 0.0
    %662 = vmatpush1.msra.mxu0 0.0
    %663 = vmatprep.subr.mxu0 0.0
    %664 = vmatpush1.msra.mxu0 0.0
    %665 = vmatprep.subr.mxu0 0.0
    %666 = vmatpush1.msra.mxu0 0.0
    %667 = vmatprep.subr.mxu0 0.0
    %668 = vmatpush1.msra.mxu0 0.0
    %669 = vmatprep.subr.mxu0 0.0
    %670 = vmatpush1.msra.mxu0 0.0
    %671 = vmatprep.subr.mxu0 0.0
    %672 = vmatpush1.msra.mxu0 0.0
    %673 = vmatprep.subr.mxu0 0.0
    %674 = vmatpush1.msra.mxu0 0.0
    %675 = vmatprep.subr.mxu0 0.0
    %676 = vmatpush1.msra.mxu0 0.0
    %677 = vmatprep.subr.mxu0 0.0
    %678 = vmatpush1.msra.mxu0 0.0
    %679 = vmatprep.subr.mxu0 0.0
    %680 = vmatpush1.msra.mxu0 0.0
    %681 = vmatprep.subr.mxu0 0.0
    %682 = vmatpush1.msra.mxu0 0.0
    %683 = vmatprep.subr.mxu0 0.0
    %684 = vmatpush1.msra.mxu0 %v658
    %685 = vmatprep.subr.mxu0 0.0
    %686 = vmatpush1.msra.mxu0 %v657
    %687 = vmatprep.subr.mxu0 0.0
    %688 = vmatpush1.msra.mxu0 %v656
    %689 = vmatprep.subr.mxu0 0.0
    %690 = vmatpush1.msra.mxu0 %v655
    %691 = vmatprep.subr.mxu0 0.0
    %692 = vmatpush2.msra.mxu0 0.0
    %693 = vmatprep.subr.mxu0 0.0
    %694 = vmatpush2.msra.mxu0 0.0
    %695 = vmatprep.subr.mxu0 0.0
    %696 = vmatpush2.msra.mxu0 0.0
    %697 = vmatprep.subr.mxu0 0.0
    %698 = vmatpush2.msra.mxu0 0.0
    %699 = vmatprep.subr.mxu0 0.0
    %700 = vmatpush2.msra.mxu0 0.0
    %701 = vmatprep.subr.mxu0 0.0
    %702 = vmatpush2.msra.mxu0 0.0
    %703 = vmatprep.subr.mxu0 0.0
    %704 = vmatpush2.msra.mxu0 0.0
    %705 = vmatprep.subr.mxu0 0.0
    %706 = vmatpush2.msra.mxu0 0.0
    %707 = vmatprep.subr.mxu0 0.0
    %708 = vmatpush2.msra.mxu0 0.0
    %709 = vmatprep.subr.mxu0 0.0
    %710 = vmatpush2.msra.mxu0 0.0
    %711 = vmatprep.subr.mxu0 0.0
    %712 = vmatpush2.msra.mxu0 0.0
    %713 = vmatprep.subr.mxu0 0.0
    %714 = vmatpush2.msra.mxu0 0.0
    %715 = vmatprep.subr.mxu0 0.0
    %716 = vmatpush2.msra.mxu0 0.0
    %717 = vmatprep.subr.mxu0 0.0
    %718 = vmatpush2.msra.mxu0 0.0
    %719 = vmatprep.subr.mxu0 0.0
    %720 = vmatpush2.msra.mxu0 0.0
    %721 = vmatprep.subr.mxu0 0.0
    %722 = vmatpush2.msra.mxu0 0.0
    %723 = vmatprep.mubr.f32.mxu0 0.0
    %724 = vmatmul.mubr.f32.gmra.mxu0 %v147
    %v725 = vpop.f32.mrf.mxu0
    %v726 = vadd.f32 0.0, %v725
    %v727 = vpop.f32.mrf.mxu0
    %728 = vdwg.mxu0
    %v729 = vadd.f32 %v726, %v120
    %v730 = vsub.f32 %v655, %v121
    %v731 = vsub.f32 %v656, %v122
    %v732 = vsub.f32 %v657, %v123
    %v733 = vsub.f32 %v658, %v124
    %v734 = vmul.f32 %v125, %v730
    %v735 = vmul.f32 %v126, %v731
    %v736 = vmul.f32 %v127, %v732
    %v737 = vmul.f32 %v128, %v733
    %v738 = vadd.f32 %v734, %v735
    %v739 = vadd.f32 %v738, %v736
    %v740 = vadd.f32 %v739, %v737
    %v741 = vrot.slane %v740, 4
    %v742 = vadd.f32 %v740, %v741
    %v743 = vrot.slane %v742, 2
    %v744 = vadd.f32 %v742, %v743
    %v745 = vrot.slane %v744, 1
    %v746 = vadd.f32 %v744, %v745
    %v747 = vmul.f32 %v730, %v730
    %v748 = vmul.f32 %v731, %v731
    %v749 = vmul.f32 %v732, %v732
    %v750 = vmul.f32 %v733, %v733
    %v751 = vadd.f32 %v747, %v748
    %v752 = vadd.f32 %v751, %v749
    %v753 = vadd.f32 %v752, %v750
    %v754 = vrot.slane %v753, 4
    %v755 = vadd.f32 %v753, %v754
    %v756 = vrot.slane %v755, 2
    %v757 = vadd.f32 %v755, %v756
    %v758 = vrot.slane %v757, 1
    %v759 = vadd.f32 %v757, %v758
    %v760 = vmul.f32 %v141, %v759
    %v761 = vmax.f32 %v760, 1e-16
    %v762 = vrsqrt.pop %v761
    %v763 = vmul.f32 %v746, %v762
    %v764 = vadd.f32 %v763, 1.0
    %v765 = vmax.f32 %v764, 0.0
    %v766 = vmin.f32 %v765, 1.0
    %v767 = vmul.f32 %v729, %v766
    %vm768 = vcmp.gt.f32.partialorder %v767, %v641
    %v769 = vsel %vm768, %v767, %v641
    %v770 = vsel %vm768, 4, %v642
    %v771 = vsel %vm768, 1, 0
    %v772 = vlaneseq
    %v773 = vshrl.u32 %v772, 7
    %v774 = vsub.s32 0, %v773
    %v775 = vrot.slane %v771, %v774
    %vm776 = vcmp.eq.s32.totalorder %v775, 1
    %v777 = vsel %vm776, %v655, %v649
    %v778 = vsel %vm776, %v656, %v650
    %v779 = vsel %vm776, %v657, %v651
    %v780 = vsel %vm776, %v658, %v652
    %v781 = vsel %vm776, %v726, %v653
    %s782 = scalar_lea.vmem %s0, 160
    %v783 = vld [vmem:[%s782] sm:$0xff]
    %v784 = vld [vmem:[%s782 + $0x8] sm:$0xff]
    %v785 = vld [vmem:[%s782 + $0x10] sm:$0xff]
    %v786 = vld [vmem:[%s782 + $0x18] sm:$0xff]
    %787 = vmatprep.subr.mxu0 0.0
    %788 = vmatpush1.msra.mxu0 0.0
    %789 = vmatprep.subr.mxu0 0.0
    %790 = vmatpush1.msra.mxu0 0.0
    %791 = vmatprep.subr.mxu0 0.0
    %792 = vmatpush1.msra.mxu0 0.0
    %793 = vmatprep.subr.mxu0 0.0
    %794 = vmatpush1.msra.mxu0 0.0
    %795 = vmatprep.subr.mxu0 0.0
    %796 = vmatpush1.msra.mxu0 0.0
    %797 = vmatprep.subr.mxu0 0.0
    %798 = vmatpush1.msra.mxu0 0.0
    %799 = vmatprep.subr.mxu0 0.0
    %800 = vmatpush1.msra.mxu0 0.0
    %801 = vmatprep.subr.mxu0 0.0
    %802 = vmatpush1.msra.mxu0 0.0
    %803 = vmatprep.subr.mxu0 0.0
    %804 = vmatpush1.msra.mxu0 0.0
    %805 = vmatprep.subr.mxu0 0.0
    %806 = vmatpush1.msra.mxu0 0.0
    %807 = vmatprep.subr.mxu0 0.0
    %808 = vmatpush1.msra.mxu0 0.0
    %809 = vmatprep.subr.mxu0 0.0
    %810 = vmatpush1.msra.mxu0 0.0
    %811 = vmatprep.subr.mxu0 0.0
    %812 = vmatpush1.msra.mxu0 %v786
    %813 = vmatprep.subr.mxu0 0.0
    %814 = vmatpush1.msra.mxu0 %v785
    %815 = vmatprep.subr.mxu0 0.0
    %816 = vmatpush1.msra.mxu0 %v784
    %817 = vmatprep.subr.mxu0 0.0
    %818 = vmatpush1.msra.mxu0 %v783
    %819 = vmatprep.subr.mxu0 0.0
    %820 = vmatpush2.msra.mxu0 0.0
    %821 = vmatprep.subr.mxu0 0.0
    %822 = vmatpush2.msra.mxu0 0.0
    %823 = vmatprep.subr.mxu0 0.0
    %824 = vmatpush2.msra.mxu0 0.0
    %825 = vmatprep.subr.mxu0 0.0
    %826 = vmatpush2.msra.mxu0 0.0
    %827 = vmatprep.subr.mxu0 0.0
    %828 = vmatpush2.msra.mxu0 0.0
    %829 = vmatprep.subr.mxu0 0.0
    %830 = vmatpush2.msra.mxu0 0.0
    %831 = vmatprep.subr.mxu0 0.0
    %832 = vmatpush2.msra.mxu0 0.0
    %833 = vmatprep.subr.mxu0 0.0
    %834 = vmatpush2.msra.mxu0 0.0
    %835 = vmatprep.subr.mxu0 0.0
    %836 = vmatpush2.msra.mxu0 0.0
    %837 = vmatprep.subr.mxu0 0.0
    %838 = vmatpush2.msra.mxu0 0.0
    %839 = vmatprep.subr.mxu0 0.0
    %840 = vmatpush2.msra.mxu0 0.0
    %841 = vmatprep.subr.mxu0 0.0
    %842 = vmatpush2.msra.mxu0 0.0
    %843 = vmatprep.subr.mxu0 0.0
    %844 = vmatpush2.msra.mxu0 0.0
    %845 = vmatprep.subr.mxu0 0.0
    %846 = vmatpush2.msra.mxu0 0.0
    %847 = vmatprep.subr.mxu0 0.0
    %848 = vmatpush2.msra.mxu0 0.0
    %849 = vmatprep.subr.mxu0 0.0
    %850 = vmatpush2.msra.mxu0 0.0
    %851 = vmatprep.mubr.f32.mxu0 0.0
    %852 = vmatmul.mubr.f32.gmra.mxu0 %v147
    %v853 = vpop.f32.mrf.mxu0
    %v854 = vadd.f32 0.0, %v853
    %v855 = vpop.f32.mrf.mxu0
    %856 = vdwg.mxu0
    %v857 = vadd.f32 %v854, %v120
    %v858 = vsub.f32 %v783, %v121
    %v859 = vsub.f32 %v784, %v122
    %v860 = vsub.f32 %v785, %v123
    %v861 = vsub.f32 %v786, %v124
    %v862 = vmul.f32 %v125, %v858
    %v863 = vmul.f32 %v126, %v859
    %v864 = vmul.f32 %v127, %v860
    %v865 = vmul.f32 %v128, %v861
    %v866 = vadd.f32 %v862, %v863
    %v867 = vadd.f32 %v866, %v864
    %v868 = vadd.f32 %v867, %v865
    %v869 = vrot.slane %v868, 4
    %v870 = vadd.f32 %v868, %v869
    %v871 = vrot.slane %v870, 2
    %v872 = vadd.f32 %v870, %v871
    %v873 = vrot.slane %v872, 1
    %v874 = vadd.f32 %v872, %v873
    %v875 = vmul.f32 %v858, %v858
    %v876 = vmul.f32 %v859, %v859
    %v877 = vmul.f32 %v860, %v860
    %v878 = vmul.f32 %v861, %v861
    %v879 = vadd.f32 %v875, %v876
    %v880 = vadd.f32 %v879, %v877
    %v881 = vadd.f32 %v880, %v878
    %v882 = vrot.slane %v881, 4
    %v883 = vadd.f32 %v881, %v882
    %v884 = vrot.slane %v883, 2
    %v885 = vadd.f32 %v883, %v884
    %v886 = vrot.slane %v885, 1
    %v887 = vadd.f32 %v885, %v886
    %v888 = vmul.f32 %v141, %v887
    %v889 = vmax.f32 %v888, 1e-16
    %v890 = vrsqrt.pop %v889
    %v891 = vmul.f32 %v874, %v890
    %v892 = vadd.f32 %v891, 1.0
    %v893 = vmax.f32 %v892, 0.0
    %v894 = vmin.f32 %v893, 1.0
    %v895 = vmul.f32 %v857, %v894
    %vm896 = vcmp.gt.f32.partialorder %v895, %v769
    %v897 = vsel %vm896, %v895, %v769
    %v898 = vsel %vm896, 5, %v770
    %v899 = vsel %vm896, 1, 0
    %v900 = vlaneseq
    %v901 = vshrl.u32 %v900, 7
    %v902 = vsub.s32 0, %v901
    %v903 = vrot.slane %v899, %v902
    %vm904 = vcmp.eq.s32.totalorder %v903, 1
    %v905 = vsel %vm904, %v783, %v777
    %v906 = vsel %vm904, %v784, %v778
    %v907 = vsel %vm904, %v785, %v779
    %v908 = vsel %vm904, %v786, %v780
    %v909 = vsel %vm904, %v854, %v781
    %s910 = scalar_lea.vmem %s0, 192
    %v911 = vld [vmem:[%s910] sm:$0xff]
    %v912 = vld [vmem:[%s910 + $0x8] sm:$0xff]
    %v913 = vld [vmem:[%s910 + $0x10] sm:$0xff]
    %v914 = vld [vmem:[%s910 + $0x18] sm:$0xff]
    %915 = vmatprep.subr.mxu0 0.0
    %916 = vmatpush1.msra.mxu0 0.0
    %917 = vmatprep.subr.mxu0 0.0
    %918 = vmatpush1.msra.mxu0 0.0
    %919 = vmatprep.subr.mxu0 0.0
    %920 = vmatpush1.msra.mxu0 0.0
    %921 = vmatprep.subr.mxu0 0.0
    %922 = vmatpush1.msra.mxu0 0.0
    %923 = vmatprep.subr.mxu0 0.0
    %924 = vmatpush1.msra.mxu0 0.0
    %925 = vmatprep.subr.mxu0 0.0
    %926 = vmatpush1.msra.mxu0 0.0
    %927 = vmatprep.subr.mxu0 0.0
    %928 = vmatpush1.msra.mxu0 0.0
    %929 = vmatprep.subr.mxu0 0.0
    %930 = vmatpush1.msra.mxu0 0.0
    %931 = vmatprep.subr.mxu0 0.0
    %932 = vmatpush1.msra.mxu0 0.0
    %933 = vmatprep.subr.mxu0 0.0
    %934 = vmatpush1.msra.mxu0 0.0
    %935 = vmatprep.subr.mxu0 0.0
    %936 = vmatpush1.msra.mxu0 0.0
    %937 = vmatprep.subr.mxu0 0.0
    %938 = vmatpush1.msra.mxu0 0.0
    %939 = vmatprep.subr.mxu0 0.0
    %940 = vmatpush1.msra.mxu0 %v914
    %941 = vmatprep.subr.mxu0 0.0
    %942 = vmatpush1.msra.mxu0 %v913
    %943 = vmatprep.subr.mxu0 0.0
    %944 = vmatpush1.msra.mxu0 %v912
    %945 = vmatprep.subr.mxu0 0.0
    %946 = vmatpush1.msra.mxu0 %v911
    %947 = vmatprep.subr.mxu0 0.0
    %948 = vmatpush2.msra.mxu0 0.0
    %949 = vmatprep.subr.mxu0 0.0
    %950 = vmatpush2.msra.mxu0 0.0
    %951 = vmatprep.subr.mxu0 0.0
    %952 = vmatpush2.msra.mxu0 0.0
    %953 = vmatprep.subr.mxu0 0.0
    %954 = vmatpush2.msra.mxu0 0.0
    %955 = vmatprep.subr.mxu0 0.0
    %956 = vmatpush2.msra.mxu0 0.0
    %957 = vmatprep.subr.mxu0 0.0
    %958 = vmatpush2.msra.mxu0 0.0
    %959 = vmatprep.subr.mxu0 0.0
    %960 = vmatpush2.msra.mxu0 0.0
    %961 = vmatprep.subr.mxu0 0.0
    %962 = vmatpush2.msra.mxu0 0.0
    %963 = vmatprep.subr.mxu0 0.0
    %964 = vmatpush2.msra.mxu0 0.0
    %965 = vmatprep.subr.mxu0 0.0
    %966 = vmatpush2.msra.mxu0 0.0
    %967 = vmatprep.subr.mxu0 0.0
    %968 = vmatpush2.msra.mxu0 0.0
    %969 = vmatprep.subr.mxu0 0.0
    %970 = vmatpush2.msra.mxu0 0.0
    %971 = vmatprep.subr.mxu0 0.0
    %972 = vmatpush2.msra.mxu0 0.0
    %973 = vmatprep.subr.mxu0 0.0
    %974 = vmatpush2.msra.mxu0 0.0
    %975 = vmatprep.subr.mxu0 0.0
    %976 = vmatpush2.msra.mxu0 0.0
    %977 = vmatprep.subr.mxu0 0.0
    %978 = vmatpush2.msra.mxu0 0.0
    %979 = vmatprep.mubr.f32.mxu0 0.0
    %980 = vmatmul.mubr.f32.gmra.mxu0 %v147
    %v981 = vpop.f32.mrf.mxu0
    %v982 = vadd.f32 0.0, %v981
    %v983 = vpop.f32.mrf.mxu0
    %984 = vdwg.mxu0
    %v985 = vadd.f32 %v982, %v120
    %v986 = vsub.f32 %v911, %v121
    %v987 = vsub.f32 %v912, %v122
    %v988 = vsub.f32 %v913, %v123
    %v989 = vsub.f32 %v914, %v124
    %v990 = vmul.f32 %v125, %v986
    %v991 = vmul.f32 %v126, %v987
    %v992 = vmul.f32 %v127, %v988
    %v993 = vmul.f32 %v128, %v989
    %v994 = vadd.f32 %v990, %v991
    %v995 = vadd.f32 %v994, %v992
    %v996 = vadd.f32 %v995, %v993
    %v997 = vrot.slane %v996, 4
    %v998 = vadd.f32 %v996, %v997
    %v999 = vrot.slane %v998, 2
    %v1000 = vadd.f32 %v998, %v999
    %v1001 = vrot.slane %v1000, 1
    %v1002 = vadd.f32 %v1000, %v1001
    %v1003 = vmul.f32 %v986, %v986
    %v1004 = vmul.f32 %v987, %v987
    %v1005 = vmul.f32 %v988, %v988
    %v1006 = vmul.f32 %v989, %v989
    %v1007 = vadd.f32 %v1003, %v1004
    %v1008 = vadd.f32 %v1007, %v1005
    %v1009 = vadd.f32 %v1008, %v1006
    %v1010 = vrot.slane %v1009, 4
    %v1011 = vadd.f32 %v1009, %v1010
    %v1012 = vrot.slane %v1011, 2
    %v1013 = vadd.f32 %v1011, %v1012
    %v1014 = vrot.slane %v1013, 1
    %v1015 = vadd.f32 %v1013, %v1014
    %v1016 = vmul.f32 %v141, %v1015
    %v1017 = vmax.f32 %v1016, 1e-16
    %v1018 = vrsqrt.pop %v1017
    %v1019 = vmul.f32 %v1002, %v1018
    %v1020 = vadd.f32 %v1019, 1.0
    %v1021 = vmax.f32 %v1020, 0.0
    %v1022 = vmin.f32 %v1021, 1.0
    %v1023 = vmul.f32 %v985, %v1022
    %vm1024 = vcmp.gt.f32.partialorder %v1023, %v897
    %v1025 = vsel %vm1024, %v1023, %v897
    %v1026 = vsel %vm1024, 6, %v898
    %v1027 = vsel %vm1024, 1, 0
    %v1028 = vlaneseq
    %v1029 = vshrl.u32 %v1028, 7
    %v1030 = vsub.s32 0, %v1029
    %v1031 = vrot.slane %v1027, %v1030
    %vm1032 = vcmp.eq.s32.totalorder %v1031, 1
    %v1033 = vsel %vm1032, %v911, %v905
    %v1034 = vsel %vm1032, %v912, %v906
    %v1035 = vsel %vm1032, %v913, %v907
    %v1036 = vsel %vm1032, %v914, %v908
    %v1037 = vsel %vm1032, %v982, %v909
    %s1038 = scalar_lea.vmem %s0, 224
    %v1039 = vld [vmem:[%s1038] sm:$0xff]
    %v1040 = vld [vmem:[%s1038 + $0x8] sm:$0xff]
    %v1041 = vld [vmem:[%s1038 + $0x10] sm:$0xff]
    %v1042 = vld [vmem:[%s1038 + $0x18] sm:$0xff]
    %1043 = vmatprep.subr.mxu0 0.0
    %1044 = vmatpush1.msra.mxu0 0.0
    %1045 = vmatprep.subr.mxu0 0.0
    %1046 = vmatpush1.msra.mxu0 0.0
    %1047 = vmatprep.subr.mxu0 0.0
    %1048 = vmatpush1.msra.mxu0 0.0
    %1049 = vmatprep.subr.mxu0 0.0
    %1050 = vmatpush1.msra.mxu0 0.0
    %1051 = vmatprep.subr.mxu0 0.0
    %1052 = vmatpush1.msra.mxu0 0.0
    %1053 = vmatprep.subr.mxu0 0.0
    %1054 = vmatpush1.msra.mxu0 0.0
    %1055 = vmatprep.subr.mxu0 0.0
    %1056 = vmatpush1.msra.mxu0 0.0
    %1057 = vmatprep.subr.mxu0 0.0
    %1058 = vmatpush1.msra.mxu0 0.0
    %1059 = vmatprep.subr.mxu0 0.0
    %1060 = vmatpush1.msra.mxu0 0.0
    %1061 = vmatprep.subr.mxu0 0.0
    %1062 = vmatpush1.msra.mxu0 0.0
    %1063 = vmatprep.subr.mxu0 0.0
    %1064 = vmatpush1.msra.mxu0 0.0
    %1065 = vmatprep.subr.mxu0 0.0
    %1066 = vmatpush1.msra.mxu0 0.0
    %1067 = vmatprep.subr.mxu0 0.0
    %1068 = vmatpush1.msra.mxu0 %v1042
    %1069 = vmatprep.subr.mxu0 0.0
    %1070 = vmatpush1.msra.mxu0 %v1041
    %1071 = vmatprep.subr.mxu0 0.0
    %1072 = vmatpush1.msra.mxu0 %v1040
    %1073 = vmatprep.subr.mxu0 0.0
    %1074 = vmatpush1.msra.mxu0 %v1039
    %1075 = vmatprep.subr.mxu0 0.0
    %1076 = vmatpush2.msra.mxu0 0.0
    %1077 = vmatprep.subr.mxu0 0.0
    %1078 = vmatpush2.msra.mxu0 0.0
    %1079 = vmatprep.subr.mxu0 0.0
    %1080 = vmatpush2.msra.mxu0 0.0
    %1081 = vmatprep.subr.mxu0 0.0
    %1082 = vmatpush2.msra.mxu0 0.0
    %1083 = vmatprep.subr.mxu0 0.0
    %1084 = vmatpush2.msra.mxu0 0.0
    %1085 = vmatprep.subr.mxu0 0.0
    %1086 = vmatpush2.msra.mxu0 0.0
    %1087 = vmatprep.subr.mxu0 0.0
    %1088 = vmatpush2.msra.mxu0 0.0
    %1089 = vmatprep.subr.mxu0 0.0
    %1090 = vmatpush2.msra.mxu0 0.0
    %1091 = vmatprep.subr.mxu0 0.0
    %1092 = vmatpush2.msra.mxu0 0.0
    %1093 = vmatprep.subr.mxu0 0.0
    %1094 = vmatpush2.msra.mxu0 0.0
    %1095 = vmatprep.subr.mxu0 0.0
    %1096 = vmatpush2.msra.mxu0 0.0
    %1097 = vmatprep.subr.mxu0 0.0
    %1098 = vmatpush2.msra.mxu0 0.0
    %1099 = vmatprep.subr.mxu0 0.0
    %1100 = vmatpush2.msra.mxu0 0.0
    %1101 = vmatprep.subr.mxu0 0.0
    %1102 = vmatpush2.msra.mxu0 0.0
    %1103 = vmatprep.subr.mxu0 0.0
    %1104 = vmatpush2.msra.mxu0 0.0
    %1105 = vmatprep.subr.mxu0 0.0
    %1106 = vmatpush2.msra.mxu0 0.0
    %1107 = vmatprep.mubr.f32.mxu0 0.0
    %1108 = vmatmul.mubr.f32.gmra.mxu0 %v147
    %v1109 = vpop.f32.mrf.mxu0
    %v1110 = vadd.f32 0.0, %v1109
    %v1111 = vpop.f32.mrf.mxu0
    %1112 = vdwg.mxu0
    %v1113 = vadd.f32 %v1110, %v120
    %v1114 = vsub.f32 %v1039, %v121
    %v1115 = vsub.f32 %v1040, %v122
    %v1116 = vsub.f32 %v1041, %v123
    %v1117 = vsub.f32 %v1042, %v124
    %v1118 = vmul.f32 %v125, %v1114
    %v1119 = vmul.f32 %v126, %v1115
    %v1120 = vmul.f32 %v127, %v1116
    %v1121 = vmul.f32 %v128, %v1117
    %v1122 = vadd.f32 %v1118, %v1119
    %v1123 = vadd.f32 %v1122, %v1120
    %v1124 = vadd.f32 %v1123, %v1121
    %v1125 = vrot.slane %v1124, 4
    %v1126 = vadd.f32 %v1124, %v1125
    %v1127 = vrot.slane %v1126, 2
    %v1128 = vadd.f32 %v1126, %v1127
    %v1129 = vrot.slane %v1128, 1
    %v1130 = vadd.f32 %v1128, %v1129
    %v1131 = vmul.f32 %v1114, %v1114
    %v1132 = vmul.f32 %v1115, %v1115
    %v1133 = vmul.f32 %v1116, %v1116
    %v1134 = vmul.f32 %v1117, %v1117
    %v1135 = vadd.f32 %v1131, %v1132
    %v1136 = vadd.f32 %v1135, %v1133
    %v1137 = vadd.f32 %v1136, %v1134
    %v1138 = vrot.slane %v1137, 4
    %v1139 = vadd.f32 %v1137, %v1138
    %v1140 = vrot.slane %v1139, 2
    %v1141 = vadd.f32 %v1139, %v1140
    %v1142 = vrot.slane %v1141, 1
    %v1143 = vadd.f32 %v1141, %v1142
    %v1144 = vmul.f32 %v141, %v1143
    %v1145 = vmax.f32 %v1144, 1e-16
    %v1146 = vrsqrt.pop %v1145
    %v1147 = vmul.f32 %v1130, %v1146
    %v1148 = vadd.f32 %v1147, 1.0
    %v1149 = vmax.f32 %v1148, 0.0
    %v1150 = vmin.f32 %v1149, 1.0
    %v1151 = vmul.f32 %v1113, %v1150
    %vm1152 = vcmp.gt.f32.partialorder %v1151, %v1025
    %v1153 = vsel %vm1152, 7, %v1026
    %v1154 = vsel %vm1152, 1, 0
    %v1155 = vlaneseq
    %v1156 = vshrl.u32 %v1155, 7
    %v1157 = vsub.s32 0, %v1156
    %v1158 = vrot.slane %v1154, %v1157
    %vm1159 = vcmp.eq.s32.totalorder %v1158, 1
    %v1160 = vsel %vm1159, %v1039, %v1033
    %v1161 = vsel %vm1159, %v1040, %v1034
    %v1162 = vsel %vm1159, %v1041, %v1035
    %v1163 = vsel %vm1159, %v1042, %v1036
    %v1164 = vsel %vm1159, %v1110, %v1037
    %1165 = vst [vmem:[%s6] sm:$0xff] %v1160
    %1166 = vst [vmem:[%s6 + $0x8] sm:$0xff] %v1161
    %1167 = vst [vmem:[%s6 + $0x10] sm:$0xff] %v1162
    %1168 = vst [vmem:[%s6 + $0x18] sm:$0xff] %v1163
    %v1169 = vcvt.s32.f32 %v1153
    %1170 = vst [vmem:[%s7] sm:$0x1] %v1169
    %v1171 = vadd.f32 %v1164, %v115
    %s1172 = sld [smem:[#allocation2 + $0x1]]
    %v1173 = vstv %s1172
    %v1174 = vadd.f32 %v1171, %v1173
    %1175 = vst [vmem:[%s7] sm:$0x2] %v1174
    %s1176 = sld [smem:[#allocation2 + $0x2]]
    %v1177 = vstv %s1176
    %v1178 = vadd.f32 %v1171, %v1177
    %1179 = vst [vmem:[%s7] sm:$0x4] %v1178
    %1180 = vst [vmem:[%s7 + $0x3] sm:$0x1f] 0.0
    // Predicated region
    $region30: #{walk_forward.5} parent=1 // pred_check
      _
    $region31: #{walk_forward.5} parent=1 // pred_check_branch
      %1182 = sbr.rel (0) target = $region33
    $region32: #{walk_forward.5} parent=1 // pred_region
      _
    $region33: #{walk_forward.5} parent=1 // pred_fallthru
      _
    // Predicated region
    $region34: #{walk_forward.5} parent=1 // pred_check
      _
    $region35: #{walk_forward.5} parent=1 // pred_check_branch
      %1184 = sbr.rel (0) target = $region37
    $region36: #{walk_forward.5} parent=1 // pred_region
      _
    $region37: #{walk_forward.5} parent=1 // pred_fallthru
      _
    // Predicated region
    $region38: #{walk_forward.5} parent=1 // pred_check
      _
    $region39: #{walk_forward.5} parent=1 // pred_check_branch
      %1186 = sbr.rel (0) target = $region41
    $region40: #{walk_forward.5} parent=1 // pred_region
      _
    $region41: #{walk_forward.5} parent=1 // pred_fallthru
      _
    // Predicated region
    $region42: #{walk_forward.5} parent=1 // pred_check
      _
    $region43: #{walk_forward.5} parent=1 // pred_check_branch
      %1188 = sbr.rel (0) target = $region45
    $region44: #{walk_forward.5} parent=1 // pred_region
      _
    $region45: #{walk_forward.5} parent=1 // pred_fallthru
      _
    %1189 = vsyncpa [#allocation3], 1

// kernel: walk_forward.4
$region0: #{walk_forward.4}
  #allocation0 [shape = 'u32[]', space=smem, size = 0x4, offset = 0x4, fixed_abs, tag = 'smem constant byte address 0x4 - core index']
  #allocation1 [shape = 'u32[144,128]{1,0:T(1,128)}', space=vmem, size = 0x12000, scoped, tag = 'internal scratch']
  %s0 = inlined_call_operand.vmem [shape: f32[8,32,128], index: 0, kind: input, shape index: {}]
  %s1 = inlined_call_operand.vmem [shape: f32[32,128], index: 1, kind: input, shape index: {}]
  %s2 = inlined_call_operand.vmem [shape: f32[32,128], index: 2, kind: input, shape index: {}]
  %s3 = inlined_call_operand.vmem [shape: f32[8,32], index: 3, kind: input, shape index: {}]
  %s4 = inlined_call_operand.vmem [shape: f32[8,32], index: 4, kind: input, shape index: {}]
  %s5 = inlined_call_operand.vmem [shape: f32[4], index: 5, kind: input, shape index: {}]
  %s6 = inlined_call_operand.vmem [shape: f32[32,128], index: 6, kind: output, shape index: {0}]
  %s7 = inlined_call_operand.vmem [shape: f32[8,128], index: 7, kind: output, shape index: {1}]
  %8 = xla_tuple %s6, %s7
  %s9 = sld [smem:[#allocation0]]
  $region46: #{walk_forward.4} parent=0
    _
  %s11 = ssub.s32 1, %s9
  %s12 = scalar_select 0, %s11, %s9
  $region1: #{walk_forward.4} parent=0
    #allocation2 [shape = 'u8[512]{0}', space=smem, size = 0x200, scoped, tag = 'input window, operand 5, single buffered']
    #allocation3 [shape = 's32[1]{0}', space=sflag, size = 0x4, scoped, tag = 'scoped memory for walk_forward.4']
    %13 = vsyncpa [#allocation3], 0
    // Predicated region
    $region2: #{walk_forward.4} parent=1 // pred_check
      _
    $region3: #{walk_forward.4} parent=1 // pred_check_branch
      %15 = sbr.rel (0) target = $region5
    $region4: #{walk_forward.4} parent=1 // pred_region
      _
    $region5: #{walk_forward.4} parent=1 // pred_fallthru
      _
    // Predicated region
    $region6: #{walk_forward.4} parent=1 // pred_check
      _
    $region7: #{walk_forward.4} parent=1 // pred_check_branch
      %17 = sbr.rel (0) target = $region9
    $region8: #{walk_forward.4} parent=1 // pred_region
      _
    $region9: #{walk_forward.4} parent=1 // pred_fallthru
      _
    // Predicated region
    $region10: #{walk_forward.4} parent=1 // pred_check
      _
    $region11: #{walk_forward.4} parent=1 // pred_check_branch
      %19 = sbr.rel (0) target = $region13
    $region12: #{walk_forward.4} parent=1 // pred_region
      _
    $region13: #{walk_forward.4} parent=1 // pred_fallthru
      _
    // Predicated region
    $region14: #{walk_forward.4} parent=1 // pred_check
      _
    $region15: #{walk_forward.4} parent=1 // pred_check_branch
      %21 = sbr.rel (0) target = $region17
    $region16: #{walk_forward.4} parent=1 // pred_region
      _
    $region17: #{walk_forward.4} parent=1 // pred_fallthru
      _
    // Predicated region
    $region18: #{walk_forward.4} parent=1 // pred_check
      _
    $region19: #{walk_forward.4} parent=1 // pred_check_branch
      %23 = sbr.rel (0) target = $region21
    $region20: #{walk_forward.4} parent=1 // pred_region
      _
    $region21: #{walk_forward.4} parent=1 // pred_fallthru
      _
    // Predicated region
    $region22: #{walk_forward.4} parent=1 // pred_check
      _
    $region23: #{walk_forward.4} parent=1 // pred_check_branch
      %25 = sbr.rel (0) target = $region25
    $region24: #{walk_forward.4} parent=1 // pred_region
      %s27 = ssub.s32 16, 16
      %28 = vsyncadd [#allocation3], %s27
      %s30 = sshll.u32 %s5, 4
      %s31 = int_to_ptr.vmem [resolvable:$true] %s30
      %33 = dma.vmem_to_smem %s31, 16, [#allocation2], [#allocation3]
    $region25: #{walk_forward.4} parent=1 // pred_fallthru
      _
    // Predicated region
    $region26: #{walk_forward.4} parent=1 // pred_check
      _
    $region27: #{walk_forward.4} parent=1 // pred_check_branch
      %35 = sbr.rel (0) target = $region29
    $region28: #{walk_forward.4} parent=1 // pred_region
      %36 = dma.done [#allocation3], 16
    $region29: #{walk_forward.4} parent=1 // pred_fallthru
      _
    %37 = sfence
    %v38 = vld [vmem:[%s1] sm:$0xff]
    %v39 = vld [vmem:[%s1 + $0x8] sm:$0xff]
    %v40 = vld [vmem:[%s1 + $0x10] sm:$0xff]
    %v41 = vld [vmem:[%s1 + $0x18] sm:$0xff]
    %v42 = vld [vmem:[%s3] sm:$0xff]
    %v43 = vld [vmem:[%s4] sm:$0xff]
    %vm44 = vcmask 261120
    %v46 = vsel %vm44, %v43, 0
    %48 = vmatprep.subr.mxu0 0.0
    %49 = vmatpush1.msra.mxu0 0.0
    %50 = vmatprep.subr.mxu0 0.0
    %51 = vmatpush1.msra.mxu0 0.0
    %52 = vmatprep.subr.mxu0 0.0
    %53 = vmatpush1.msra.mxu0 0.0
    %54 = vmatprep.subr.mxu0 0.0
    %55 = vmatpush1.msra.mxu0 0.0
    %56 = vmatprep.subr.mxu0 0.0
    %57 = vmatpush1.msra.mxu0 0.0
    %58 = vmatprep.subr.mxu0 0.0
    %59 = vmatpush1.msra.mxu0 0.0
    %60 = vmatprep.subr.mxu0 0.0
    %61 = vmatpush1.msra.mxu0 0.0
    %62 = vmatprep.subr.mxu0 0.0
    %63 = vmatpush1.msra.mxu0 0.0
    %64 = vmatprep.subr.mxu0 0.0
    %65 = vmatpush1.msra.mxu0 0.0
    %66 = vmatprep.subr.mxu0 0.0
    %67 = vmatpush1.msra.mxu0 0.0
    %68 = vmatprep.subr.mxu0 0.0
    %69 = vmatpush1.msra.mxu0 0.0
    %70 = vmatprep.subr.mxu0 0.0
    %71 = vmatpush1.msra.mxu0 0.0
    %72 = vmatprep.subr.mxu0 0.0
    %73 = vmatpush1.msra.mxu0 %v41
    %74 = vmatprep.subr.mxu0 0.0
    %75 = vmatpush1.msra.mxu0 %v40
    %76 = vmatprep.subr.mxu0 0.0
    %77 = vmatpush1.msra.mxu0 %v39
    %78 = vmatprep.subr.mxu0 0.0
    %79 = vmatpush1.msra.mxu0 %v38
    %80 = vmatprep.subr.mxu0 0.0
    %81 = vmatpush2.msra.mxu0 0.0
    %82 = vmatprep.subr.mxu0 0.0
    %83 = vmatpush2.msra.mxu0 0.0
    %84 = vmatprep.subr.mxu0 0.0
    %85 = vmatpush2.msra.mxu0 0.0
    %86 = vmatprep.subr.mxu0 0.0
    %87 = vmatpush2.msra.mxu0 0.0
    %88 = vmatprep.subr.mxu0 0.0
    %89 = vmatpush2.msra.mxu0 0.0
    %90 = vmatprep.subr.mxu0 0.0
    %91 = vmatpush2.msra.mxu0 0.0
    %92 = vmatprep.subr.mxu0 0.0
    %93 = vmatpush2.msra.mxu0 0.0
    %94 = vmatprep.subr.mxu0 0.0
    %95 = vmatpush2.msra.mxu0 0.0
    %96 = vmatprep.subr.mxu0 0.0
    %97 = vmatpush2.msra.mxu0 0.0
    %98 = vmatprep.subr.mxu0 0.0
    %99 = vmatpush2.msra.mxu0 0.0
    %100 = vmatprep.subr.mxu0 0.0
    %101 = vmatpush2.msra.mxu0 0.0
    %102 = vmatprep.subr.mxu0 0.0
    %103 = vmatpush2.msra.mxu0 0.0
    %104 = vmatprep.subr.mxu0 0.0
    %105 = vmatpush2.msra.mxu0 0.0
    %106 = vmatprep.subr.mxu0 0.0
    %107 = vmatpush2.msra.mxu0 0.0
    %108 = vmatprep.subr.mxu0 0.0
    %109 = vmatpush2.msra.mxu0 0.0
    %110 = vmatprep.subr.mxu0 0.0
    %111 = vmatpush2.msra.mxu0 0.0
    %112 = vmatprep.mubr.f32.mxu0 0.0
    %113 = vmatmul.mubr.f32.gmra.mxu0 %v46
    %v114 = vpop.f32.mrf.mxu0
    %v115 = vadd.f32 0.0, %v114
    %v116 = vpop.f32.mrf.mxu0
    %117 = vdwg.mxu0
    %s118 = sld [smem:[#allocation2]]
    %v119 = vstv %s118
    %v120 = vadd.f32 %v115, %v119
    %v121 = vld [vmem:[%s0] sm:$0xff]
    %v122 = vld [vmem:[%s0 + $0x8] sm:$0xff]
    %v123 = vld [vmem:[%s0 + $0x10] sm:$0xff]
    %v124 = vld [vmem:[%s0 + $0x18] sm:$0xff]
    %v126 = vsel %vm44, %v42, 0
    %128 = vmatprep.subr.mxu0 0.0
    %129 = vmatpush1.msra.mxu0 0.0
    %130 = vmatprep.subr.mxu0 0.0
    %131 = vmatpush1.msra.mxu0 0.0
    %132 = vmatprep.subr.mxu0 0.0
    %133 = vmatpush1.msra.mxu0 0.0
    %134 = vmatprep.subr.mxu0 0.0
    %135 = vmatpush1.msra.mxu0 0.0
    %136 = vmatprep.subr.mxu0 0.0
    %137 = vmatpush1.msra.mxu0 0.0
    %138 = vmatprep.subr.mxu0 0.0
    %139 = vmatpush1.msra.mxu0 0.0
    %140 = vmatprep.subr.mxu0 0.0
    %141 = vmatpush1.msra.mxu0 0.0
    %142 = vmatprep.subr.mxu0 0.0
    %143 = vmatpush1.msra.mxu0 0.0
    %144 = vmatprep.subr.mxu0 0.0
    %145 = vmatpush1.msra.mxu0 0.0
    %146 = vmatprep.subr.mxu0 0.0
    %147 = vmatpush1.msra.mxu0 0.0
    %148 = vmatprep.subr.mxu0 0.0
    %149 = vmatpush1.msra.mxu0 0.0
    %150 = vmatprep.subr.mxu0 0.0
    %151 = vmatpush1.msra.mxu0 0.0
    %152 = vmatprep.subr.mxu0 0.0
    %153 = vmatpush1.msra.mxu0 %v124
    %154 = vmatprep.subr.mxu0 0.0
    %155 = vmatpush1.msra.mxu0 %v123
    %156 = vmatprep.subr.mxu0 0.0
    %157 = vmatpush1.msra.mxu0 %v122
    %158 = vmatprep.subr.mxu0 0.0
    %159 = vmatpush1.msra.mxu0 %v121
    %160 = vmatprep.subr.mxu0 0.0
    %161 = vmatpush2.msra.mxu0 0.0
    %162 = vmatprep.subr.mxu0 0.0
    %163 = vmatpush2.msra.mxu0 0.0
    %164 = vmatprep.subr.mxu0 0.0
    %165 = vmatpush2.msra.mxu0 0.0
    %166 = vmatprep.subr.mxu0 0.0
    %167 = vmatpush2.msra.mxu0 0.0
    %168 = vmatprep.subr.mxu0 0.0
    %169 = vmatpush2.msra.mxu0 0.0
    %170 = vmatprep.subr.mxu0 0.0
    %171 = vmatpush2.msra.mxu0 0.0
    %172 = vmatprep.subr.mxu0 0.0
    %173 = vmatpush2.msra.mxu0 0.0
    %174 = vmatprep.subr.mxu0 0.0
    %175 = vmatpush2.msra.mxu0 0.0
    %176 = vmatprep.subr.mxu0 0.0
    %177 = vmatpush2.msra.mxu0 0.0
    %178 = vmatprep.subr.mxu0 0.0
    %179 = vmatpush2.msra.mxu0 0.0
    %180 = vmatprep.subr.mxu0 0.0
    %181 = vmatpush2.msra.mxu0 0.0
    %182 = vmatprep.subr.mxu0 0.0
    %183 = vmatpush2.msra.mxu0 0.0
    %184 = vmatprep.subr.mxu0 0.0
    %185 = vmatpush2.msra.mxu0 0.0
    %186 = vmatprep.subr.mxu0 0.0
    %187 = vmatpush2.msra.mxu0 0.0
    %188 = vmatprep.subr.mxu0 0.0
    %189 = vmatpush2.msra.mxu0 0.0
    %190 = vmatprep.subr.mxu0 0.0
    %191 = vmatpush2.msra.mxu0 0.0
    %192 = vmatprep.mubr.f32.mxu0 0.0
    %193 = vmatmul.mubr.f32.gmra.mxu0 %v126
    %v194 = vpop.f32.mrf.mxu0
    %v195 = vadd.f32 0.0, %v194
    %v196 = vpop.f32.mrf.mxu0
    %197 = vdwg.mxu0
    %v198 = vadd.f32 %v195, %v120
    %vm199 = vcmp.gt.f32.partialorder %v198, -inf
    %v200 = vsel %vm199, %v198, -inf
    %v201 = vsel %vm199, 1, 0
    %v202 = vlaneseq
    %v203 = vshrl.u32 %v202, 7
    %v204 = vsub.s32 0, %v203
    %v205 = vrot.slane %v201, %v204
    %vm206 = vcmp.eq.s32.totalorder %v205, 1
    %v207 = vsel %vm206, %v121, 0.0
    %v208 = vsel %vm206, %v122, 0.0
    %v209 = vsel %vm206, %v123, 0.0
    %v210 = vsel %vm206, %v124, 0.0
    %v211 = vsel %vm206, %v195, 0.0
    %s212 = scalar_lea.vmem %s0, 32
    %v213 = vld [vmem:[%s212] sm:$0xff]
    %v214 = vld [vmem:[%s212 + $0x8] sm:$0xff]
    %v215 = vld [vmem:[%s212 + $0x10] sm:$0xff]
    %v216 = vld [vmem:[%s212 + $0x18] sm:$0xff]
    %217 = vmatprep.subr.mxu0 0.0
    %218 = vmatpush1.msra.mxu0 0.0
    %219 = vmatprep.subr.mxu0 0.0
    %220 = vmatpush1.msra.mxu0 0.0
    %221 = vmatprep.subr.mxu0 0.0
    %222 = vmatpush1.msra.mxu0 0.0
    %223 = vmatprep.subr.mxu0 0.0
    %224 = vmatpush1.msra.mxu0 0.0
    %225 = vmatprep.subr.mxu0 0.0
    %226 = vmatpush1.msra.mxu0 0.0
    %227 = vmatprep.subr.mxu0 0.0
    %228 = vmatpush1.msra.mxu0 0.0
    %229 = vmatprep.subr.mxu0 0.0
    %230 = vmatpush1.msra.mxu0 0.0
    %231 = vmatprep.subr.mxu0 0.0
    %232 = vmatpush1.msra.mxu0 0.0
    %233 = vmatprep.subr.mxu0 0.0
    %234 = vmatpush1.msra.mxu0 0.0
    %235 = vmatprep.subr.mxu0 0.0
    %236 = vmatpush1.msra.mxu0 0.0
    %237 = vmatprep.subr.mxu0 0.0
    %238 = vmatpush1.msra.mxu0 0.0
    %239 = vmatprep.subr.mxu0 0.0
    %240 = vmatpush1.msra.mxu0 0.0
    %241 = vmatprep.subr.mxu0 0.0
    %242 = vmatpush1.msra.mxu0 %v216
    %243 = vmatprep.subr.mxu0 0.0
    %244 = vmatpush1.msra.mxu0 %v215
    %245 = vmatprep.subr.mxu0 0.0
    %246 = vmatpush1.msra.mxu0 %v214
    %247 = vmatprep.subr.mxu0 0.0
    %248 = vmatpush1.msra.mxu0 %v213
    %249 = vmatprep.subr.mxu0 0.0
    %250 = vmatpush2.msra.mxu0 0.0
    %251 = vmatprep.subr.mxu0 0.0
    %252 = vmatpush2.msra.mxu0 0.0
    %253 = vmatprep.subr.mxu0 0.0
    %254 = vmatpush2.msra.mxu0 0.0
    %255 = vmatprep.subr.mxu0 0.0
    %256 = vmatpush2.msra.mxu0 0.0
    %257 = vmatprep.subr.mxu0 0.0
    %258 = vmatpush2.msra.mxu0 0.0
    %259 = vmatprep.subr.mxu0 0.0
    %260 = vmatpush2.msra.mxu0 0.0
    %261 = vmatprep.subr.mxu0 0.0
    %262 = vmatpush2.msra.mxu0 0.0
    %263 = vmatprep.subr.mxu0 0.0
    %264 = vmatpush2.msra.mxu0 0.0
    %265 = vmatprep.subr.mxu0 0.0
    %266 = vmatpush2.msra.mxu0 0.0
    %267 = vmatprep.subr.mxu0 0.0
    %268 = vmatpush2.msra.mxu0 0.0
    %269 = vmatprep.subr.mxu0 0.0
    %270 = vmatpush2.msra.mxu0 0.0
    %271 = vmatprep.subr.mxu0 0.0
    %272 = vmatpush2.msra.mxu0 0.0
    %273 = vmatprep.subr.mxu0 0.0
    %274 = vmatpush2.msra.mxu0 0.0
    %275 = vmatprep.subr.mxu0 0.0
    %276 = vmatpush2.msra.mxu0 0.0
    %277 = vmatprep.subr.mxu0 0.0
    %278 = vmatpush2.msra.mxu0 0.0
    %279 = vmatprep.subr.mxu0 0.0
    %280 = vmatpush2.msra.mxu0 0.0
    %281 = vmatprep.mubr.f32.mxu0 0.0
    %282 = vmatmul.mubr.f32.gmra.mxu0 %v126
    %v283 = vpop.f32.mrf.mxu0
    %v284 = vadd.f32 0.0, %v283
    %v285 = vpop.f32.mrf.mxu0
    %286 = vdwg.mxu0
    %v287 = vadd.f32 %v284, %v120
    %vm288 = vcmp.gt.f32.partialorder %v287, %v200
    %v289 = vsel %vm288, %v287, %v200
    %v290 = vsel %vm288, 1, 0
    %v291 = vlaneseq
    %v292 = vshrl.u32 %v291, 7
    %v293 = vsub.s32 0, %v292
    %v294 = vrot.slane %v290, %v293
    %vm295 = vcmp.eq.s32.totalorder %v294, 1
    %v296 = vsel %vm295, %v213, %v207
    %v297 = vsel %vm295, %v214, %v208
    %v298 = vsel %vm295, %v215, %v209
    %v299 = vsel %vm295, %v216, %v210
    %v300 = vsel %vm295, %v284, %v211
    %s301 = scalar_lea.vmem %s0, 64
    %v302 = vld [vmem:[%s301] sm:$0xff]
    %v303 = vld [vmem:[%s301 + $0x8] sm:$0xff]
    %v304 = vld [vmem:[%s301 + $0x10] sm:$0xff]
    %v305 = vld [vmem:[%s301 + $0x18] sm:$0xff]
    %306 = vmatprep.subr.mxu0 0.0
    %307 = vmatpush1.msra.mxu0 0.0
    %308 = vmatprep.subr.mxu0 0.0
    %309 = vmatpush1.msra.mxu0 0.0
    %310 = vmatprep.subr.mxu0 0.0
    %311 = vmatpush1.msra.mxu0 0.0
    %312 = vmatprep.subr.mxu0 0.0
    %313 = vmatpush1.msra.mxu0 0.0
    %314 = vmatprep.subr.mxu0 0.0
    %315 = vmatpush1.msra.mxu0 0.0
    %316 = vmatprep.subr.mxu0 0.0
    %317 = vmatpush1.msra.mxu0 0.0
    %318 = vmatprep.subr.mxu0 0.0
    %319 = vmatpush1.msra.mxu0 0.0
    %320 = vmatprep.subr.mxu0 0.0
    %321 = vmatpush1.msra.mxu0 0.0
    %322 = vmatprep.subr.mxu0 0.0
    %323 = vmatpush1.msra.mxu0 0.0
    %324 = vmatprep.subr.mxu0 0.0
    %325 = vmatpush1.msra.mxu0 0.0
    %326 = vmatprep.subr.mxu0 0.0
    %327 = vmatpush1.msra.mxu0 0.0
    %328 = vmatprep.subr.mxu0 0.0
    %329 = vmatpush1.msra.mxu0 0.0
    %330 = vmatprep.subr.mxu0 0.0
    %331 = vmatpush1.msra.mxu0 %v305
    %332 = vmatprep.subr.mxu0 0.0
    %333 = vmatpush1.msra.mxu0 %v304
    %334 = vmatprep.subr.mxu0 0.0
    %335 = vmatpush1.msra.mxu0 %v303
    %336 = vmatprep.subr.mxu0 0.0
    %337 = vmatpush1.msra.mxu0 %v302
    %338 = vmatprep.subr.mxu0 0.0
    %339 = vmatpush2.msra.mxu0 0.0
    %340 = vmatprep.subr.mxu0 0.0
    %341 = vmatpush2.msra.mxu0 0.0
    %342 = vmatprep.subr.mxu0 0.0
    %343 = vmatpush2.msra.mxu0 0.0
    %344 = vmatprep.subr.mxu0 0.0
    %345 = vmatpush2.msra.mxu0 0.0
    %346 = vmatprep.subr.mxu0 0.0
    %347 = vmatpush2.msra.mxu0 0.0
    %348 = vmatprep.subr.mxu0 0.0
    %349 = vmatpush2.msra.mxu0 0.0
    %350 = vmatprep.subr.mxu0 0.0
    %351 = vmatpush2.msra.mxu0 0.0
    %352 = vmatprep.subr.mxu0 0.0
    %353 = vmatpush2.msra.mxu0 0.0
    %354 = vmatprep.subr.mxu0 0.0
    %355 = vmatpush2.msra.mxu0 0.0
    %356 = vmatprep.subr.mxu0 0.0
    %357 = vmatpush2.msra.mxu0 0.0
    %358 = vmatprep.subr.mxu0 0.0
    %359 = vmatpush2.msra.mxu0 0.0
    %360 = vmatprep.subr.mxu0 0.0
    %361 = vmatpush2.msra.mxu0 0.0
    %362 = vmatprep.subr.mxu0 0.0
    %363 = vmatpush2.msra.mxu0 0.0
    %364 = vmatprep.subr.mxu0 0.0
    %365 = vmatpush2.msra.mxu0 0.0
    %366 = vmatprep.subr.mxu0 0.0
    %367 = vmatpush2.msra.mxu0 0.0
    %368 = vmatprep.subr.mxu0 0.0
    %369 = vmatpush2.msra.mxu0 0.0
    %370 = vmatprep.mubr.f32.mxu0 0.0
    %371 = vmatmul.mubr.f32.gmra.mxu0 %v126
    %v372 = vpop.f32.mrf.mxu0
    %v373 = vadd.f32 0.0, %v372
    %v374 = vpop.f32.mrf.mxu0
    %375 = vdwg.mxu0
    %v376 = vadd.f32 %v373, %v120
    %vm377 = vcmp.gt.f32.partialorder %v376, %v289
    %v378 = vsel %vm377, %v376, %v289
    %v379 = vsel %vm377, 2, %v290
    %v380 = vsel %vm377, 1, 0
    %v381 = vlaneseq
    %v382 = vshrl.u32 %v381, 7
    %v383 = vsub.s32 0, %v382
    %v384 = vrot.slane %v380, %v383
    %vm385 = vcmp.eq.s32.totalorder %v384, 1
    %v386 = vsel %vm385, %v302, %v296
    %v387 = vsel %vm385, %v303, %v297
    %v388 = vsel %vm385, %v304, %v298
    %v389 = vsel %vm385, %v305, %v299
    %v390 = vsel %vm385, %v373, %v300
    %s391 = scalar_lea.vmem %s0, 96
    %v392 = vld [vmem:[%s391] sm:$0xff]
    %v393 = vld [vmem:[%s391 + $0x8] sm:$0xff]
    %v394 = vld [vmem:[%s391 + $0x10] sm:$0xff]
    %v395 = vld [vmem:[%s391 + $0x18] sm:$0xff]
    %396 = vmatprep.subr.mxu0 0.0
    %397 = vmatpush1.msra.mxu0 0.0
    %398 = vmatprep.subr.mxu0 0.0
    %399 = vmatpush1.msra.mxu0 0.0
    %400 = vmatprep.subr.mxu0 0.0
    %401 = vmatpush1.msra.mxu0 0.0
    %402 = vmatprep.subr.mxu0 0.0
    %403 = vmatpush1.msra.mxu0 0.0
    %404 = vmatprep.subr.mxu0 0.0
    %405 = vmatpush1.msra.mxu0 0.0
    %406 = vmatprep.subr.mxu0 0.0
    %407 = vmatpush1.msra.mxu0 0.0
    %408 = vmatprep.subr.mxu0 0.0
    %409 = vmatpush1.msra.mxu0 0.0
    %410 = vmatprep.subr.mxu0 0.0
    %411 = vmatpush1.msra.mxu0 0.0
    %412 = vmatprep.subr.mxu0 0.0
    %413 = vmatpush1.msra.mxu0 0.0
    %414 = vmatprep.subr.mxu0 0.0
    %415 = vmatpush1.msra.mxu0 0.0
    %416 = vmatprep.subr.mxu0 0.0
    %417 = vmatpush1.msra.mxu0 0.0
    %418 = vmatprep.subr.mxu0 0.0
    %419 = vmatpush1.msra.mxu0 0.0
    %420 = vmatprep.subr.mxu0 0.0
    %421 = vmatpush1.msra.mxu0 %v395
    %422 = vmatprep.subr.mxu0 0.0
    %423 = vmatpush1.msra.mxu0 %v394
    %424 = vmatprep.subr.mxu0 0.0
    %425 = vmatpush1.msra.mxu0 %v393
    %426 = vmatprep.subr.mxu0 0.0
    %427 = vmatpush1.msra.mxu0 %v392
    %428 = vmatprep.subr.mxu0 0.0
    %429 = vmatpush2.msra.mxu0 0.0
    %430 = vmatprep.subr.mxu0 0.0
    %431 = vmatpush2.msra.mxu0 0.0
    %432 = vmatprep.subr.mxu0 0.0
    %433 = vmatpush2.msra.mxu0 0.0
    %434 = vmatprep.subr.mxu0 0.0
    %435 = vmatpush2.msra.mxu0 0.0
    %436 = vmatprep.subr.mxu0 0.0
    %437 = vmatpush2.msra.mxu0 0.0
    %438 = vmatprep.subr.mxu0 0.0
    %439 = vmatpush2.msra.mxu0 0.0
    %440 = vmatprep.subr.mxu0 0.0
    %441 = vmatpush2.msra.mxu0 0.0
    %442 = vmatprep.subr.mxu0 0.0
    %443 = vmatpush2.msra.mxu0 0.0
    %444 = vmatprep.subr.mxu0 0.0
    %445 = vmatpush2.msra.mxu0 0.0
    %446 = vmatprep.subr.mxu0 0.0
    %447 = vmatpush2.msra.mxu0 0.0
    %448 = vmatprep.subr.mxu0 0.0
    %449 = vmatpush2.msra.mxu0 0.0
    %450 = vmatprep.subr.mxu0 0.0
    %451 = vmatpush2.msra.mxu0 0.0
    %452 = vmatprep.subr.mxu0 0.0
    %453 = vmatpush2.msra.mxu0 0.0
    %454 = vmatprep.subr.mxu0 0.0
    %455 = vmatpush2.msra.mxu0 0.0
    %456 = vmatprep.subr.mxu0 0.0
    %457 = vmatpush2.msra.mxu0 0.0
    %458 = vmatprep.subr.mxu0 0.0
    %459 = vmatpush2.msra.mxu0 0.0
    %460 = vmatprep.mubr.f32.mxu0 0.0
    %461 = vmatmul.mubr.f32.gmra.mxu0 %v126
    %v462 = vpop.f32.mrf.mxu0
    %v463 = vadd.f32 0.0, %v462
    %v464 = vpop.f32.mrf.mxu0
    %465 = vdwg.mxu0
    %v466 = vadd.f32 %v463, %v120
    %vm467 = vcmp.gt.f32.partialorder %v466, %v378
    %v468 = vsel %vm467, %v466, %v378
    %v469 = vsel %vm467, 3, %v379
    %v470 = vsel %vm467, 1, 0
    %v471 = vlaneseq
    %v472 = vshrl.u32 %v471, 7
    %v473 = vsub.s32 0, %v472
    %v474 = vrot.slane %v470, %v473
    %vm475 = vcmp.eq.s32.totalorder %v474, 1
    %v476 = vsel %vm475, %v392, %v386
    %v477 = vsel %vm475, %v393, %v387
    %v478 = vsel %vm475, %v394, %v388
    %v479 = vsel %vm475, %v395, %v389
    %v480 = vsel %vm475, %v463, %v390
    %s481 = scalar_lea.vmem %s0, 128
    %v482 = vld [vmem:[%s481] sm:$0xff]
    %v483 = vld [vmem:[%s481 + $0x8] sm:$0xff]
    %v484 = vld [vmem:[%s481 + $0x10] sm:$0xff]
    %v485 = vld [vmem:[%s481 + $0x18] sm:$0xff]
    %486 = vmatprep.subr.mxu0 0.0
    %487 = vmatpush1.msra.mxu0 0.0
    %488 = vmatprep.subr.mxu0 0.0
    %489 = vmatpush1.msra.mxu0 0.0
    %490 = vmatprep.subr.mxu0 0.0
    %491 = vmatpush1.msra.mxu0 0.0
    %492 = vmatprep.subr.mxu0 0.0
    %493 = vmatpush1.msra.mxu0 0.0
    %494 = vmatprep.subr.mxu0 0.0
    %495 = vmatpush1.msra.mxu0 0.0
    %496 = vmatprep.subr.mxu0 0.0
    %497 = vmatpush1.msra.mxu0 0.0
    %498 = vmatprep.subr.mxu0 0.0
    %499 = vmatpush1.msra.mxu0 0.0
    %500 = vmatprep.subr.mxu0 0.0
    %501 = vmatpush1.msra.mxu0 0.0
    %502 = vmatprep.subr.mxu0 0.0
    %503 = vmatpush1.msra.mxu0 0.0
    %504 = vmatprep.subr.mxu0 0.0
    %505 = vmatpush1.msra.mxu0 0.0
    %506 = vmatprep.subr.mxu0 0.0
    %507 = vmatpush1.msra.mxu0 0.0
    %508 = vmatprep.subr.mxu0 0.0
    %509 = vmatpush1.msra.mxu0 0.0
    %510 = vmatprep.subr.mxu0 0.0
    %511 = vmatpush1.msra.mxu0 %v485
    %512 = vmatprep.subr.mxu0 0.0
    %513 = vmatpush1.msra.mxu0 %v484
    %514 = vmatprep.subr.mxu0 0.0
    %515 = vmatpush1.msra.mxu0 %v483
    %516 = vmatprep.subr.mxu0 0.0
    %517 = vmatpush1.msra.mxu0 %v482
    %518 = vmatprep.subr.mxu0 0.0
    %519 = vmatpush2.msra.mxu0 0.0
    %520 = vmatprep.subr.mxu0 0.0
    %521 = vmatpush2.msra.mxu0 0.0
    %522 = vmatprep.subr.mxu0 0.0
    %523 = vmatpush2.msra.mxu0 0.0
    %524 = vmatprep.subr.mxu0 0.0
    %525 = vmatpush2.msra.mxu0 0.0
    %526 = vmatprep.subr.mxu0 0.0
    %527 = vmatpush2.msra.mxu0 0.0
    %528 = vmatprep.subr.mxu0 0.0
    %529 = vmatpush2.msra.mxu0 0.0
    %530 = vmatprep.subr.mxu0 0.0
    %531 = vmatpush2.msra.mxu0 0.0
    %532 = vmatprep.subr.mxu0 0.0
    %533 = vmatpush2.msra.mxu0 0.0
    %534 = vmatprep.subr.mxu0 0.0
    %535 = vmatpush2.msra.mxu0 0.0
    %536 = vmatprep.subr.mxu0 0.0
    %537 = vmatpush2.msra.mxu0 0.0
    %538 = vmatprep.subr.mxu0 0.0
    %539 = vmatpush2.msra.mxu0 0.0
    %540 = vmatprep.subr.mxu0 0.0
    %541 = vmatpush2.msra.mxu0 0.0
    %542 = vmatprep.subr.mxu0 0.0
    %543 = vmatpush2.msra.mxu0 0.0
    %544 = vmatprep.subr.mxu0 0.0
    %545 = vmatpush2.msra.mxu0 0.0
    %546 = vmatprep.subr.mxu0 0.0
    %547 = vmatpush2.msra.mxu0 0.0
    %548 = vmatprep.subr.mxu0 0.0
    %549 = vmatpush2.msra.mxu0 0.0
    %550 = vmatprep.mubr.f32.mxu0 0.0
    %551 = vmatmul.mubr.f32.gmra.mxu0 %v126
    %v552 = vpop.f32.mrf.mxu0
    %v553 = vadd.f32 0.0, %v552
    %v554 = vpop.f32.mrf.mxu0
    %555 = vdwg.mxu0
    %v556 = vadd.f32 %v553, %v120
    %vm557 = vcmp.gt.f32.partialorder %v556, %v468
    %v558 = vsel %vm557, %v556, %v468
    %v559 = vsel %vm557, 4, %v469
    %v560 = vsel %vm557, 1, 0
    %v561 = vlaneseq
    %v562 = vshrl.u32 %v561, 7
    %v563 = vsub.s32 0, %v562
    %v564 = vrot.slane %v560, %v563
    %vm565 = vcmp.eq.s32.totalorder %v564, 1
    %v566 = vsel %vm565, %v482, %v476
    %v567 = vsel %vm565, %v483, %v477
    %v568 = vsel %vm565, %v484, %v478
    %v569 = vsel %vm565, %v485, %v479
    %v570 = vsel %vm565, %v553, %v480
    %s571 = scalar_lea.vmem %s0, 160
    %v572 = vld [vmem:[%s571] sm:$0xff]
    %v573 = vld [vmem:[%s571 + $0x8] sm:$0xff]
    %v574 = vld [vmem:[%s571 + $0x10] sm:$0xff]
    %v575 = vld [vmem:[%s571 + $0x18] sm:$0xff]
    %576 = vmatprep.subr.mxu0 0.0
    %577 = vmatpush1.msra.mxu0 0.0
    %578 = vmatprep.subr.mxu0 0.0
    %579 = vmatpush1.msra.mxu0 0.0
    %580 = vmatprep.subr.mxu0 0.0
    %581 = vmatpush1.msra.mxu0 0.0
    %582 = vmatprep.subr.mxu0 0.0
    %583 = vmatpush1.msra.mxu0 0.0
    %584 = vmatprep.subr.mxu0 0.0
    %585 = vmatpush1.msra.mxu0 0.0
    %586 = vmatprep.subr.mxu0 0.0
    %587 = vmatpush1.msra.mxu0 0.0
    %588 = vmatprep.subr.mxu0 0.0
    %589 = vmatpush1.msra.mxu0 0.0
    %590 = vmatprep.subr.mxu0 0.0
    %591 = vmatpush1.msra.mxu0 0.0
    %592 = vmatprep.subr.mxu0 0.0
    %593 = vmatpush1.msra.mxu0 0.0
    %594 = vmatprep.subr.mxu0 0.0
    %595 = vmatpush1.msra.mxu0 0.0
    %596 = vmatprep.subr.mxu0 0.0
    %597 = vmatpush1.msra.mxu0 0.0
    %598 = vmatprep.subr.mxu0 0.0
    %599 = vmatpush1.msra.mxu0 0.0
    %600 = vmatprep.subr.mxu0 0.0
    %601 = vmatpush1.msra.mxu0 %v575
    %602 = vmatprep.subr.mxu0 0.0
    %603 = vmatpush1.msra.mxu0 %v574
    %604 = vmatprep.subr.mxu0 0.0
    %605 = vmatpush1.msra.mxu0 %v573
    %606 = vmatprep.subr.mxu0 0.0
    %607 = vmatpush1.msra.mxu0 %v572
    %608 = vmatprep.subr.mxu0 0.0
    %609 = vmatpush2.msra.mxu0 0.0
    %610 = vmatprep.subr.mxu0 0.0
    %611 = vmatpush2.msra.mxu0 0.0
    %612 = vmatprep.subr.mxu0 0.0
    %613 = vmatpush2.msra.mxu0 0.0
    %614 = vmatprep.subr.mxu0 0.0
    %615 = vmatpush2.msra.mxu0 0.0
    %616 = vmatprep.subr.mxu0 0.0
    %617 = vmatpush2.msra.mxu0 0.0
    %618 = vmatprep.subr.mxu0 0.0
    %619 = vmatpush2.msra.mxu0 0.0
    %620 = vmatprep.subr.mxu0 0.0
    %621 = vmatpush2.msra.mxu0 0.0
    %622 = vmatprep.subr.mxu0 0.0
    %623 = vmatpush2.msra.mxu0 0.0
    %624 = vmatprep.subr.mxu0 0.0
    %625 = vmatpush2.msra.mxu0 0.0
    %626 = vmatprep.subr.mxu0 0.0
    %627 = vmatpush2.msra.mxu0 0.0
    %628 = vmatprep.subr.mxu0 0.0
    %629 = vmatpush2.msra.mxu0 0.0
    %630 = vmatprep.subr.mxu0 0.0
    %631 = vmatpush2.msra.mxu0 0.0
    %632 = vmatprep.subr.mxu0 0.0
    %633 = vmatpush2.msra.mxu0 0.0
    %634 = vmatprep.subr.mxu0 0.0
    %635 = vmatpush2.msra.mxu0 0.0
    %636 = vmatprep.subr.mxu0 0.0
    %637 = vmatpush2.msra.mxu0 0.0
    %638 = vmatprep.subr.mxu0 0.0
    %639 = vmatpush2.msra.mxu0 0.0
    %640 = vmatprep.mubr.f32.mxu0 0.0
    %641 = vmatmul.mubr.f32.gmra.mxu0 %v126
    %v642 = vpop.f32.mrf.mxu0
    %v643 = vadd.f32 0.0, %v642
    %v644 = vpop.f32.mrf.mxu0
    %645 = vdwg.mxu0
    %v646 = vadd.f32 %v643, %v120
    %vm647 = vcmp.gt.f32.partialorder %v646, %v558
    %v648 = vsel %vm647, %v646, %v558
    %v649 = vsel %vm647, 5, %v559
    %v650 = vsel %vm647, 1, 0
    %v651 = vlaneseq
    %v652 = vshrl.u32 %v651, 7
    %v653 = vsub.s32 0, %v652
    %v654 = vrot.slane %v650, %v653
    %vm655 = vcmp.eq.s32.totalorder %v654, 1
    %v656 = vsel %vm655, %v572, %v566
    %v657 = vsel %vm655, %v573, %v567
    %v658 = vsel %vm655, %v574, %v568
    %v659 = vsel %vm655, %v575, %v569
    %v660 = vsel %vm655, %v643, %v570
    %s661 = scalar_lea.vmem %s0, 192
    %v662 = vld [vmem:[%s661] sm:$0xff]
    %v663 = vld [vmem:[%s661 + $0x8] sm:$0xff]
    %v664 = vld [vmem:[%s661 + $0x10] sm:$0xff]
    %v665 = vld [vmem:[%s661 + $0x18] sm:$0xff]
    %666 = vmatprep.subr.mxu0 0.0
    %667 = vmatpush1.msra.mxu0 0.0
    %668 = vmatprep.subr.mxu0 0.0
    %669 = vmatpush1.msra.mxu0 0.0
    %670 = vmatprep.subr.mxu0 0.0
    %671 = vmatpush1.msra.mxu0 0.0
    %672 = vmatprep.subr.mxu0 0.0
    %673 = vmatpush1.msra.mxu0 0.0
    %674 = vmatprep.subr.mxu0 0.0
    %675 = vmatpush1.msra.mxu0 0.0
    %676 = vmatprep.subr.mxu0 0.0
    %677 = vmatpush1.msra.mxu0 0.0
    %678 = vmatprep.subr.mxu0 0.0
    %679 = vmatpush1.msra.mxu0 0.0
    %680 = vmatprep.subr.mxu0 0.0
    %681 = vmatpush1.msra.mxu0 0.0
    %682 = vmatprep.subr.mxu0 0.0
    %683 = vmatpush1.msra.mxu0 0.0
    %684 = vmatprep.subr.mxu0 0.0
    %685 = vmatpush1.msra.mxu0 0.0
    %686 = vmatprep.subr.mxu0 0.0
    %687 = vmatpush1.msra.mxu0 0.0
    %688 = vmatprep.subr.mxu0 0.0
    %689 = vmatpush1.msra.mxu0 0.0
    %690 = vmatprep.subr.mxu0 0.0
    %691 = vmatpush1.msra.mxu0 %v665
    %692 = vmatprep.subr.mxu0 0.0
    %693 = vmatpush1.msra.mxu0 %v664
    %694 = vmatprep.subr.mxu0 0.0
    %695 = vmatpush1.msra.mxu0 %v663
    %696 = vmatprep.subr.mxu0 0.0
    %697 = vmatpush1.msra.mxu0 %v662
    %698 = vmatprep.subr.mxu0 0.0
    %699 = vmatpush2.msra.mxu0 0.0
    %700 = vmatprep.subr.mxu0 0.0
    %701 = vmatpush2.msra.mxu0 0.0
    %702 = vmatprep.subr.mxu0 0.0
    %703 = vmatpush2.msra.mxu0 0.0
    %704 = vmatprep.subr.mxu0 0.0
    %705 = vmatpush2.msra.mxu0 0.0
    %706 = vmatprep.subr.mxu0 0.0
    %707 = vmatpush2.msra.mxu0 0.0
    %708 = vmatprep.subr.mxu0 0.0
    %709 = vmatpush2.msra.mxu0 0.0
    %710 = vmatprep.subr.mxu0 0.0
    %711 = vmatpush2.msra.mxu0 0.0
    %712 = vmatprep.subr.mxu0 0.0
    %713 = vmatpush2.msra.mxu0 0.0
    %714 = vmatprep.subr.mxu0 0.0
    %715 = vmatpush2.msra.mxu0 0.0
    %716 = vmatprep.subr.mxu0 0.0
    %717 = vmatpush2.msra.mxu0 0.0
    %718 = vmatprep.subr.mxu0 0.0
    %719 = vmatpush2.msra.mxu0 0.0
    %720 = vmatprep.subr.mxu0 0.0
    %721 = vmatpush2.msra.mxu0 0.0
    %722 = vmatprep.subr.mxu0 0.0
    %723 = vmatpush2.msra.mxu0 0.0
    %724 = vmatprep.subr.mxu0 0.0
    %725 = vmatpush2.msra.mxu0 0.0
    %726 = vmatprep.subr.mxu0 0.0
    %727 = vmatpush2.msra.mxu0 0.0
    %728 = vmatprep.subr.mxu0 0.0
    %729 = vmatpush2.msra.mxu0 0.0
    %730 = vmatprep.mubr.f32.mxu0 0.0
    %731 = vmatmul.mubr.f32.gmra.mxu0 %v126
    %v732 = vpop.f32.mrf.mxu0
    %v733 = vadd.f32 0.0, %v732
    %v734 = vpop.f32.mrf.mxu0
    %735 = vdwg.mxu0
    %v736 = vadd.f32 %v733, %v120
    %vm737 = vcmp.gt.f32.partialorder %v736, %v648
    %v738 = vsel %vm737, %v736, %v648
    %v739 = vsel %vm737, 6, %v649
    %v740 = vsel %vm737, 1, 0
    %v741 = vlaneseq
    %v742 = vshrl.u32 %v741, 7
    %v743 = vsub.s32 0, %v742
    %v744 = vrot.slane %v740, %v743
    %vm745 = vcmp.eq.s32.totalorder %v744, 1
    %v746 = vsel %vm745, %v662, %v656
    %v747 = vsel %vm745, %v663, %v657
    %v748 = vsel %vm745, %v664, %v658
    %v749 = vsel %vm745, %v665, %v659
    %v750 = vsel %vm745, %v733, %v660
    %s751 = scalar_lea.vmem %s0, 224
    %v752 = vld [vmem:[%s751] sm:$0xff]
    %v753 = vld [vmem:[%s751 + $0x8] sm:$0xff]
    %v754 = vld [vmem:[%s751 + $0x10] sm:$0xff]
    %v755 = vld [vmem:[%s751 + $0x18] sm:$0xff]
    %756 = vmatprep.subr.mxu0 0.0
    %757 = vmatpush1.msra.mxu0 0.0
    %758 = vmatprep.subr.mxu0 0.0
    %759 = vmatpush1.msra.mxu0 0.0
    %760 = vmatprep.subr.mxu0 0.0
    %761 = vmatpush1.msra.mxu0 0.0
    %762 = vmatprep.subr.mxu0 0.0
    %763 = vmatpush1.msra.mxu0 0.0
    %764 = vmatprep.subr.mxu0 0.0
    %765 = vmatpush1.msra.mxu0 0.0
    %766 = vmatprep.subr.mxu0 0.0
    %767 = vmatpush1.msra.mxu0 0.0
    %768 = vmatprep.subr.mxu0 0.0
    %769 = vmatpush1.msra.mxu0 0.0
    %770 = vmatprep.subr.mxu0 0.0
    %771 = vmatpush1.msra.mxu0 0.0
    %772 = vmatprep.subr.mxu0 0.0
    %773 = vmatpush1.msra.mxu0 0.0
    %774 = vmatprep.subr.mxu0 0.0
    %775 = vmatpush1.msra.mxu0 0.0
    %776 = vmatprep.subr.mxu0 0.0
    %777 = vmatpush1.msra.mxu0 0.0
    %778 = vmatprep.subr.mxu0 0.0
    %779 = vmatpush1.msra.mxu0 0.0
    %780 = vmatprep.subr.mxu0 0.0
    %781 = vmatpush1.msra.mxu0 %v755
    %782 = vmatprep.subr.mxu0 0.0
    %783 = vmatpush1.msra.mxu0 %v754
    %784 = vmatprep.subr.mxu0 0.0
    %785 = vmatpush1.msra.mxu0 %v753
    %786 = vmatprep.subr.mxu0 0.0
    %787 = vmatpush1.msra.mxu0 %v752
    %788 = vmatprep.subr.mxu0 0.0
    %789 = vmatpush2.msra.mxu0 0.0
    %790 = vmatprep.subr.mxu0 0.0
    %791 = vmatpush2.msra.mxu0 0.0
    %792 = vmatprep.subr.mxu0 0.0
    %793 = vmatpush2.msra.mxu0 0.0
    %794 = vmatprep.subr.mxu0 0.0
    %795 = vmatpush2.msra.mxu0 0.0
    %796 = vmatprep.subr.mxu0 0.0
    %797 = vmatpush2.msra.mxu0 0.0
    %798 = vmatprep.subr.mxu0 0.0
    %799 = vmatpush2.msra.mxu0 0.0
    %800 = vmatprep.subr.mxu0 0.0
    %801 = vmatpush2.msra.mxu0 0.0
    %802 = vmatprep.subr.mxu0 0.0
    %803 = vmatpush2.msra.mxu0 0.0
    %804 = vmatprep.subr.mxu0 0.0
    %805 = vmatpush2.msra.mxu0 0.0
    %806 = vmatprep.subr.mxu0 0.0
    %807 = vmatpush2.msra.mxu0 0.0
    %808 = vmatprep.subr.mxu0 0.0
    %809 = vmatpush2.msra.mxu0 0.0
    %810 = vmatprep.subr.mxu0 0.0
    %811 = vmatpush2.msra.mxu0 0.0
    %812 = vmatprep.subr.mxu0 0.0
    %813 = vmatpush2.msra.mxu0 0.0
    %814 = vmatprep.subr.mxu0 0.0
    %815 = vmatpush2.msra.mxu0 0.0
    %816 = vmatprep.subr.mxu0 0.0
    %817 = vmatpush2.msra.mxu0 0.0
    %818 = vmatprep.subr.mxu0 0.0
    %819 = vmatpush2.msra.mxu0 0.0
    %820 = vmatprep.mubr.f32.mxu0 0.0
    %821 = vmatmul.mubr.f32.gmra.mxu0 %v126
    %v822 = vpop.f32.mrf.mxu0
    %v823 = vadd.f32 0.0, %v822
    %v824 = vpop.f32.mrf.mxu0
    %825 = vdwg.mxu0
    %v826 = vadd.f32 %v823, %v120
    %vm827 = vcmp.gt.f32.partialorder %v826, %v738
    %v828 = vsel %vm827, 7, %v739
    %v829 = vsel %vm827, 1, 0
    %v830 = vlaneseq
    %v831 = vshrl.u32 %v830, 7
    %v832 = vsub.s32 0, %v831
    %v833 = vrot.slane %v829, %v832
    %vm834 = vcmp.eq.s32.totalorder %v833, 1
    %v835 = vsel %vm834, %v752, %v746
    %v836 = vsel %vm834, %v753, %v747
    %v837 = vsel %vm834, %v754, %v748
    %v838 = vsel %vm834, %v755, %v749
    %v839 = vsel %vm834, %v823, %v750
    %840 = vst [vmem:[%s6] sm:$0xff] %v835
    %841 = vst [vmem:[%s6 + $0x8] sm:$0xff] %v836
    %842 = vst [vmem:[%s6 + $0x10] sm:$0xff] %v837
    %843 = vst [vmem:[%s6 + $0x18] sm:$0xff] %v838
    %v844 = vcvt.s32.f32 %v828
    %845 = vst [vmem:[%s7] sm:$0x1] %v844
    %v846 = vadd.f32 %v839, %v115
    %s847 = sld [smem:[#allocation2 + $0x1]]
    %v848 = vstv %s847
    %v849 = vadd.f32 %v846, %v848
    %850 = vst [vmem:[%s7] sm:$0x2] %v849
    %s851 = sld [smem:[#allocation2 + $0x2]]
    %v852 = vstv %s851
    %v853 = vadd.f32 %v846, %v852
    %854 = vst [vmem:[%s7] sm:$0x4] %v853
    %855 = vst [vmem:[%s7 + $0x3] sm:$0x1f] 0.0
    // Predicated region
    $region30: #{walk_forward.4} parent=1 // pred_check
      _
    $region31: #{walk_forward.4} parent=1 // pred_check_branch
      %857 = sbr.rel (0) target = $region33
    $region32: #{walk_forward.4} parent=1 // pred_region
      _
    $region33: #{walk_forward.4} parent=1 // pred_fallthru
      _
    // Predicated region
    $region34: #{walk_forward.4} parent=1 // pred_check
      _
    $region35: #{walk_forward.4} parent=1 // pred_check_branch
      %859 = sbr.rel (0) target = $region37
    $region36: #{walk_forward.4} parent=1 // pred_region
      _
    $region37: #{walk_forward.4} parent=1 // pred_fallthru
      _
    // Predicated region
    $region38: #{walk_forward.4} parent=1 // pred_check
      _
    $region39: #{walk_forward.4} parent=1 // pred_check_branch
      %861 = sbr.rel (0) target = $region41
    $region40: #{walk_forward.4} parent=1 // pred_region
      _
    $region41: #{walk_forward.4} parent=1 // pred_fallthru
      _
    // Predicated region
    $region42: #{walk_forward.4} parent=1 // pred_check
      _
    $region43: #{walk_forward.4} parent=1 // pred_check_branch
      %863 = sbr.rel (0) target = $region45
    $region44: #{walk_forward.4} parent=1 // pred_region
      _
    $region45: #{walk_forward.4} parent=1 // pred_fallthru
      _
    %864 = vsyncpa [#allocation3], 1

// kernel: walk_forward.7
$region0: #{walk_forward.7}
  #allocation0 [shape = 'u32[]', space=smem, size = 0x4, offset = 0x4, fixed_abs, tag = 'smem constant byte address 0x4 - core index']
  #allocation1 [shape = 'u32[144,128]{1,0:T(1,128)}', space=vmem, size = 0x12000, scoped, tag = 'internal scratch']
  %s0 = inlined_call_operand.vmem [shape: f32[8,32,128], index: 0, kind: input, shape index: {}]
  %s1 = inlined_call_operand.vmem [shape: f32[32,128], index: 1, kind: input, shape index: {}]
  %s2 = inlined_call_operand.vmem [shape: f32[32,128], index: 2, kind: input, shape index: {}]
  %s3 = inlined_call_operand.vmem [shape: f32[8,32], index: 3, kind: input, shape index: {}]
  %s4 = inlined_call_operand.vmem [shape: f32[8,32], index: 4, kind: input, shape index: {}]
  %s5 = inlined_call_operand.vmem [shape: f32[4], index: 5, kind: input, shape index: {}]
  %s6 = inlined_call_operand.vmem [shape: f32[32,128], index: 6, kind: output, shape index: {0}]
  %s7 = inlined_call_operand.hbm [shape: f32[8,128], index: 7, kind: output, shape index: {1}]
  %8 = xla_tuple %s6, %s7
  %s9 = sld [smem:[#allocation0]]
  $region46: #{walk_forward.7} parent=0
    _
  %s11 = ssub.s32 1, %s9
  %s12 = scalar_select 0, %s11, %s9
  $region1: #{walk_forward.7} parent=0
    #allocation2 [shape = 'u8[512]{0}', space=smem, size = 0x200, scoped, tag = 'input window, operand 5, single buffered']
    #allocation3 [shape = 's32[1]{0}', space=sflag, size = 0x4, scoped, tag = 'scoped memory for walk_forward.7']
    #allocation4 [shape = 's32[1]{0}', space=sflag, size = 0x4, scoped, tag = 'scoped memory for walk_forward.7']
    #allocation5 [shape = 'u8[4096]{0}', space=vmem, size = 0x1000, scoped, tag = 'output window, operand 1, single buffered']
    %13 = vsyncpa [#allocation4], 0
    %14 = vsyncpa [#allocation3], 0
    // Predicated region
    $region2: #{walk_forward.7} parent=1 // pred_check
      _
    $region3: #{walk_forward.7} parent=1 // pred_check_branch
      %16 = sbr.rel (0) target = $region5
    $region4: #{walk_forward.7} parent=1 // pred_region
      _
    $region5: #{walk_forward.7} parent=1 // pred_fallthru
      _
    // Predicated region
    $region6: #{walk_forward.7} parent=1 // pred_check
      _
    $region7: #{walk_forward.7} parent=1 // pred_check_branch
      %18 = sbr.rel (0) target = $region9
    $region8: #{walk_forward.7} parent=1 // pred_region
      _
    $region9: #{walk_forward.7} parent=1 // pred_fallthru
      _
    // Predicated region
    $region10: #{walk_forward.7} parent=1 // pred_check
      _
    $region11: #{walk_forward.7} parent=1 // pred_check_branch
      %20 = sbr.rel (0) target = $region13
    $region12: #{walk_forward.7} parent=1 // pred_region
      _
    $region13: #{walk_forward.7} parent=1 // pred_fallthru
      _
    // Predicated region
    $region14: #{walk_forward.7} parent=1 // pred_check
      _
    $region15: #{walk_forward.7} parent=1 // pred_check_branch
      %22 = sbr.rel (0) target = $region17
    $region16: #{walk_forward.7} parent=1 // pred_region
      _
    $region17: #{walk_forward.7} parent=1 // pred_fallthru
      _
    // Predicated region
    $region18: #{walk_forward.7} parent=1 // pred_check
      _
    $region19: #{walk_forward.7} parent=1 // pred_check_branch
      %24 = sbr.rel (0) target = $region21
    $region20: #{walk_forward.7} parent=1 // pred_region
      _
    $region21: #{walk_forward.7} parent=1 // pred_fallthru
      _
    // Predicated region
    $region22: #{walk_forward.7} parent=1 // pred_check
      _
    $region23: #{walk_forward.7} parent=1 // pred_check_branch
      %26 = sbr.rel (0) target = $region25
    $region24: #{walk_forward.7} parent=1 // pred_region
      %s28 = ssub.s32 16, 16
      %29 = vsyncadd [#allocation4], %s28
      %s31 = sshll.u32 %s5, 4
      %s32 = int_to_ptr.vmem [resolvable:$true] %s31
      %34 = dma.vmem_to_smem %s32, 16, [#allocation2], [#allocation4]
    $region25: #{walk_forward.7} parent=1 // pred_fallthru
      _
    // Predicated region
    $region26: #{walk_forward.7} parent=1 // pred_check
      _
    $region27: #{walk_forward.7} parent=1 // pred_check_branch
      %36 = sbr.rel (0) target = $region29
    $region28: #{walk_forward.7} parent=1 // pred_region
      %37 = dma.done [#allocation4], 16
    $region29: #{walk_forward.7} parent=1 // pred_fallthru
      _
    %38 = sfence
    %v39 = vld [vmem:[%s1] sm:$0xff]
    %v40 = vld [vmem:[%s1 + $0x8] sm:$0xff]
    %v41 = vld [vmem:[%s1 + $0x10] sm:$0xff]
    %v42 = vld [vmem:[%s1 + $0x18] sm:$0xff]
    %v43 = vld [vmem:[%s3] sm:$0xff]
    %v44 = vld [vmem:[%s4] sm:$0xff]
    %vm45 = vcmask 261120
    %v47 = vsel %vm45, %v44, 0
    %49 = vmatprep.subr.mxu0 0.0
    %50 = vmatpush1.msra.mxu0 0.0
    %51 = vmatprep.subr.mxu0 0.0
    %52 = vmatpush1.msra.mxu0 0.0
    %53 = vmatprep.subr.mxu0 0.0
    %54 = vmatpush1.msra.mxu0 0.0
    %55 = vmatprep.subr.mxu0 0.0
    %56 = vmatpush1.msra.mxu0 0.0
    %57 = vmatprep.subr.mxu0 0.0
    %58 = vmatpush1.msra.mxu0 0.0
    %59 = vmatprep.subr.mxu0 0.0
    %60 = vmatpush1.msra.mxu0 0.0
    %61 = vmatprep.subr.mxu0 0.0
    %62 = vmatpush1.msra.mxu0 0.0
    %63 = vmatprep.subr.mxu0 0.0
    %64 = vmatpush1.msra.mxu0 0.0
    %65 = vmatprep.subr.mxu0 0.0
    %66 = vmatpush1.msra.mxu0 0.0
    %67 = vmatprep.subr.mxu0 0.0
    %68 = vmatpush1.msra.mxu0 0.0
    %69 = vmatprep.subr.mxu0 0.0
    %70 = vmatpush1.msra.mxu0 0.0
    %71 = vmatprep.subr.mxu0 0.0
    %72 = vmatpush1.msra.mxu0 0.0
    %73 = vmatprep.subr.mxu0 0.0
    %74 = vmatpush1.msra.mxu0 %v42
    %75 = vmatprep.subr.mxu0 0.0
    %76 = vmatpush1.msra.mxu0 %v41
    %77 = vmatprep.subr.mxu0 0.0
    %78 = vmatpush1.msra.mxu0 %v40
    %79 = vmatprep.subr.mxu0 0.0
    %80 = vmatpush1.msra.mxu0 %v39
    %81 = vmatprep.subr.mxu0 0.0
    %82 = vmatpush2.msra.mxu0 0.0
    %83 = vmatprep.subr.mxu0 0.0
    %84 = vmatpush2.msra.mxu0 0.0
    %85 = vmatprep.subr.mxu0 0.0
    %86 = vmatpush2.msra.mxu0 0.0
    %87 = vmatprep.subr.mxu0 0.0
    %88 = vmatpush2.msra.mxu0 0.0
    %89 = vmatprep.subr.mxu0 0.0
    %90 = vmatpush2.msra.mxu0 0.0
    %91 = vmatprep.subr.mxu0 0.0
    %92 = vmatpush2.msra.mxu0 0.0
    %93 = vmatprep.subr.mxu0 0.0
    %94 = vmatpush2.msra.mxu0 0.0
    %95 = vmatprep.subr.mxu0 0.0
    %96 = vmatpush2.msra.mxu0 0.0
    %97 = vmatprep.subr.mxu0 0.0
    %98 = vmatpush2.msra.mxu0 0.0
    %99 = vmatprep.subr.mxu0 0.0
    %100 = vmatpush2.msra.mxu0 0.0
    %101 = vmatprep.subr.mxu0 0.0
    %102 = vmatpush2.msra.mxu0 0.0
    %103 = vmatprep.subr.mxu0 0.0
    %104 = vmatpush2.msra.mxu0 0.0
    %105 = vmatprep.subr.mxu0 0.0
    %106 = vmatpush2.msra.mxu0 0.0
    %107 = vmatprep.subr.mxu0 0.0
    %108 = vmatpush2.msra.mxu0 0.0
    %109 = vmatprep.subr.mxu0 0.0
    %110 = vmatpush2.msra.mxu0 0.0
    %111 = vmatprep.subr.mxu0 0.0
    %112 = vmatpush2.msra.mxu0 0.0
    %113 = vmatprep.mubr.f32.mxu0 0.0
    %114 = vmatmul.mubr.f32.gmra.mxu0 %v47
    %v115 = vpop.f32.mrf.mxu0
    %v116 = vadd.f32 0.0, %v115
    %v117 = vpop.f32.mrf.mxu0
    %118 = vdwg.mxu0
    %s119 = sld [smem:[#allocation2]]
    %v120 = vstv %s119
    %v121 = vadd.f32 %v116, %v120
    %v122 = vld [vmem:[%s2] sm:$0xff]
    %v123 = vld [vmem:[%s2 + $0x8] sm:$0xff]
    %v124 = vld [vmem:[%s2 + $0x10] sm:$0xff]
    %v125 = vld [vmem:[%s2 + $0x18] sm:$0xff]
    %v126 = vsub.f32 %v122, %v39
    %v127 = vsub.f32 %v123, %v40
    %v128 = vsub.f32 %v124, %v41
    %v129 = vsub.f32 %v125, %v42
    %v130 = vmul.f32 %v126, %v126
    %v131 = vmul.f32 %v127, %v127
    %v132 = vmul.f32 %v128, %v128
    %v133 = vmul.f32 %v129, %v129
    %v134 = vadd.f32 %v130, %v131
    %v135 = vadd.f32 %v134, %v132
    %v136 = vadd.f32 %v135, %v133
    %v137 = vrot.slane %v136, 4
    %v138 = vadd.f32 %v136, %v137
    %v139 = vrot.slane %v138, 2
    %v140 = vadd.f32 %v138, %v139
    %v141 = vrot.slane %v140, 1
    %v142 = vadd.f32 %v140, %v141
    %v143 = vld [vmem:[%s0] sm:$0xff]
    %v144 = vld [vmem:[%s0 + $0x8] sm:$0xff]
    %v145 = vld [vmem:[%s0 + $0x10] sm:$0xff]
    %v146 = vld [vmem:[%s0 + $0x18] sm:$0xff]
    %v148 = vsel %vm45, %v43, 0
    %150 = vmatprep.subr.mxu0 0.0
    %151 = vmatpush1.msra.mxu0 0.0
    %152 = vmatprep.subr.mxu0 0.0
    %153 = vmatpush1.msra.mxu0 0.0
    %154 = vmatprep.subr.mxu0 0.0
    %155 = vmatpush1.msra.mxu0 0.0
    %156 = vmatprep.subr.mxu0 0.0
    %157 = vmatpush1.msra.mxu0 0.0
    %158 = vmatprep.subr.mxu0 0.0
    %159 = vmatpush1.msra.mxu0 0.0
    %160 = vmatprep.subr.mxu0 0.0
    %161 = vmatpush1.msra.mxu0 0.0
    %162 = vmatprep.subr.mxu0 0.0
    %163 = vmatpush1.msra.mxu0 0.0
    %164 = vmatprep.subr.mxu0 0.0
    %165 = vmatpush1.msra.mxu0 0.0
    %166 = vmatprep.subr.mxu0 0.0
    %167 = vmatpush1.msra.mxu0 0.0
    %168 = vmatprep.subr.mxu0 0.0
    %169 = vmatpush1.msra.mxu0 0.0
    %170 = vmatprep.subr.mxu0 0.0
    %171 = vmatpush1.msra.mxu0 0.0
    %172 = vmatprep.subr.mxu0 0.0
    %173 = vmatpush1.msra.mxu0 0.0
    %174 = vmatprep.subr.mxu0 0.0
    %175 = vmatpush1.msra.mxu0 %v146
    %176 = vmatprep.subr.mxu0 0.0
    %177 = vmatpush1.msra.mxu0 %v145
    %178 = vmatprep.subr.mxu0 0.0
    %179 = vmatpush1.msra.mxu0 %v144
    %180 = vmatprep.subr.mxu0 0.0
    %181 = vmatpush1.msra.mxu0 %v143
    %182 = vmatprep.subr.mxu0 0.0
    %183 = vmatpush2.msra.mxu0 0.0
    %184 = vmatprep.subr.mxu0 0.0
    %185 = vmatpush2.msra.mxu0 0.0
    %186 = vmatprep.subr.mxu0 0.0
    %187 = vmatpush2.msra.mxu0 0.0
    %188 = vmatprep.subr.mxu0 0.0
    %189 = vmatpush2.msra.mxu0 0.0
    %190 = vmatprep.subr.mxu0 0.0
    %191 = vmatpush2.msra.mxu0 0.0
    %192 = vmatprep.subr.mxu0 0.0
    %193 = vmatpush2.msra.mxu0 0.0
    %194 = vmatprep.subr.mxu0 0.0
    %195 = vmatpush2.msra.mxu0 0.0
    %196 = vmatprep.subr.mxu0 0.0
    %197 = vmatpush2.msra.mxu0 0.0
    %198 = vmatprep.subr.mxu0 0.0
    %199 = vmatpush2.msra.mxu0 0.0
    %200 = vmatprep.subr.mxu0 0.0
    %201 = vmatpush2.msra.mxu0 0.0
    %202 = vmatprep.subr.mxu0 0.0
    %203 = vmatpush2.msra.mxu0 0.0
    %204 = vmatprep.subr.mxu0 0.0
    %205 = vmatpush2.msra.mxu0 0.0
    %206 = vmatprep.subr.mxu0 0.0
    %207 = vmatpush2.msra.mxu0 0.0
    %208 = vmatprep.subr.mxu0 0.0
    %209 = vmatpush2.msra.mxu0 0.0
    %210 = vmatprep.subr.mxu0 0.0
    %211 = vmatpush2.msra.mxu0 0.0
    %212 = vmatprep.subr.mxu0 0.0
    %213 = vmatpush2.msra.mxu0 0.0
    %214 = vmatprep.mubr.f32.mxu0 0.0
    %215 = vmatmul.mubr.f32.gmra.mxu0 %v148
    %v216 = vpop.f32.mrf.mxu0
    %v217 = vadd.f32 0.0, %v216
    %v218 = vpop.f32.mrf.mxu0
    %219 = vdwg.mxu0
    %v220 = vadd.f32 %v217, %v121
    %v221 = vsub.f32 %v143, %v122
    %v222 = vsub.f32 %v144, %v123
    %v223 = vsub.f32 %v145, %v124
    %v224 = vsub.f32 %v146, %v125
    %v225 = vmul.f32 %v126, %v221
    %v226 = vmul.f32 %v127, %v222
    %v227 = vmul.f32 %v128, %v223
    %v228 = vmul.f32 %v129, %v224
    %v229 = vadd.f32 %v225, %v226
    %v230 = vadd.f32 %v229, %v227
    %v231 = vadd.f32 %v230, %v228
    %v232 = vrot.slane %v231, 4
    %v233 = vadd.f32 %v231, %v232
    %v234 = vrot.slane %v233, 2
    %v235 = vadd.f32 %v233, %v234
    %v236 = vrot.slane %v235, 1
    %v237 = vadd.f32 %v235, %v236
    %v238 = vmul.f32 %v221, %v221
    %v239 = vmul.f32 %v222, %v222
    %v240 = vmul.f32 %v223, %v223
    %v241 = vmul.f32 %v224, %v224
    %v242 = vadd.f32 %v238, %v239
    %v243 = vadd.f32 %v242, %v240
    %v244 = vadd.f32 %v243, %v241
    %v245 = vrot.slane %v244, 4
    %v246 = vadd.f32 %v244, %v245
    %v247 = vrot.slane %v246, 2
    %v248 = vadd.f32 %v246, %v247
    %v249 = vrot.slane %v248, 1
    %v250 = vadd.f32 %v248, %v249
    %v251 = vmul.f32 %v142, %v250
    %v252 = vmax.f32 %v251, 1e-16
    %v253 = vrsqrt.pop %v252
    %v254 = vmul.f32 %v237, %v253
    %v255 = vadd.f32 %v254, 1.0
    %v256 = vmax.f32 %v255, 0.0
    %v257 = vmin.f32 %v256, 1.0
    %v258 = vmul.f32 %v220, %v257
    %vm259 = vcmp.gt.f32.partialorder %v258, -inf
    %v260 = vsel %vm259, %v258, -inf
    %v261 = vsel %vm259, 1, 0
    %v262 = vlaneseq
    %v263 = vshrl.u32 %v262, 7
    %v264 = vsub.s32 0, %v263
    %v265 = vrot.slane %v261, %v264
    %vm266 = vcmp.eq.s32.totalorder %v265, 1
    %v267 = vsel %vm266, %v143, 0.0
    %v268 = vsel %vm266, %v144, 0.0
    %v269 = vsel %vm266, %v145, 0.0
    %v270 = vsel %vm266, %v146, 0.0
    %v271 = vsel %vm266, %v217, 0.0
    %s272 = scalar_lea.vmem %s0, 32
    %v273 = vld [vmem:[%s272] sm:$0xff]
    %v274 = vld [vmem:[%s272 + $0x8] sm:$0xff]
    %v275 = vld [vmem:[%s272 + $0x10] sm:$0xff]
    %v276 = vld [vmem:[%s272 + $0x18] sm:$0xff]
    %277 = vmatprep.subr.mxu0 0.0
    %278 = vmatpush1.msra.mxu0 0.0
    %279 = vmatprep.subr.mxu0 0.0
    %280 = vmatpush1.msra.mxu0 0.0
    %281 = vmatprep.subr.mxu0 0.0
    %282 = vmatpush1.msra.mxu0 0.0
    %283 = vmatprep.subr.mxu0 0.0
    %284 = vmatpush1.msra.mxu0 0.0
    %285 = vmatprep.subr.mxu0 0.0
    %286 = vmatpush1.msra.mxu0 0.0
    %287 = vmatprep.subr.mxu0 0.0
    %288 = vmatpush1.msra.mxu0 0.0
    %289 = vmatprep.subr.mxu0 0.0
    %290 = vmatpush1.msra.mxu0 0.0
    %291 = vmatprep.subr.mxu0 0.0
    %292 = vmatpush1.msra.mxu0 0.0
    %293 = vmatprep.subr.mxu0 0.0
    %294 = vmatpush1.msra.mxu0 0.0
    %295 = vmatprep.subr.mxu0 0.0
    %296 = vmatpush1.msra.mxu0 0.0
    %297 = vmatprep.subr.mxu0 0.0
    %298 = vmatpush1.msra.mxu0 0.0
    %299 = vmatprep.subr.mxu0 0.0
    %300 = vmatpush1.msra.mxu0 0.0
    %301 = vmatprep.subr.mxu0 0.0
    %302 = vmatpush1.msra.mxu0 %v276
    %303 = vmatprep.subr.mxu0 0.0
    %304 = vmatpush1.msra.mxu0 %v275
    %305 = vmatprep.subr.mxu0 0.0
    %306 = vmatpush1.msra.mxu0 %v274
    %307 = vmatprep.subr.mxu0 0.0
    %308 = vmatpush1.msra.mxu0 %v273
    %309 = vmatprep.subr.mxu0 0.0
    %310 = vmatpush2.msra.mxu0 0.0
    %311 = vmatprep.subr.mxu0 0.0
    %312 = vmatpush2.msra.mxu0 0.0
    %313 = vmatprep.subr.mxu0 0.0
    %314 = vmatpush2.msra.mxu0 0.0
    %315 = vmatprep.subr.mxu0 0.0
    %316 = vmatpush2.msra.mxu0 0.0
    %317 = vmatprep.subr.mxu0 0.0
    %318 = vmatpush2.msra.mxu0 0.0
    %319 = vmatprep.subr.mxu0 0.0
    %320 = vmatpush2.msra.mxu0 0.0
    %321 = vmatprep.subr.mxu0 0.0
    %322 = vmatpush2.msra.mxu0 0.0
    %323 = vmatprep.subr.mxu0 0.0
    %324 = vmatpush2.msra.mxu0 0.0
    %325 = vmatprep.subr.mxu0 0.0
    %326 = vmatpush2.msra.mxu0 0.0
    %327 = vmatprep.subr.mxu0 0.0
    %328 = vmatpush2.msra.mxu0 0.0
    %329 = vmatprep.subr.mxu0 0.0
    %330 = vmatpush2.msra.mxu0 0.0
    %331 = vmatprep.subr.mxu0 0.0
    %332 = vmatpush2.msra.mxu0 0.0
    %333 = vmatprep.subr.mxu0 0.0
    %334 = vmatpush2.msra.mxu0 0.0
    %335 = vmatprep.subr.mxu0 0.0
    %336 = vmatpush2.msra.mxu0 0.0
    %337 = vmatprep.subr.mxu0 0.0
    %338 = vmatpush2.msra.mxu0 0.0
    %339 = vmatprep.subr.mxu0 0.0
    %340 = vmatpush2.msra.mxu0 0.0
    %341 = vmatprep.mubr.f32.mxu0 0.0
    %342 = vmatmul.mubr.f32.gmra.mxu0 %v148
    %v343 = vpop.f32.mrf.mxu0
    %v344 = vadd.f32 0.0, %v343
    %v345 = vpop.f32.mrf.mxu0
    %346 = vdwg.mxu0
    %v347 = vadd.f32 %v344, %v121
    %v348 = vsub.f32 %v273, %v122
    %v349 = vsub.f32 %v274, %v123
    %v350 = vsub.f32 %v275, %v124
    %v351 = vsub.f32 %v276, %v125
    %v352 = vmul.f32 %v126, %v348
    %v353 = vmul.f32 %v127, %v349
    %v354 = vmul.f32 %v128, %v350
    %v355 = vmul.f32 %v129, %v351
    %v356 = vadd.f32 %v352, %v353
    %v357 = vadd.f32 %v356, %v354
    %v358 = vadd.f32 %v357, %v355
    %v359 = vrot.slane %v358, 4
    %v360 = vadd.f32 %v358, %v359
    %v361 = vrot.slane %v360, 2
    %v362 = vadd.f32 %v360, %v361
    %v363 = vrot.slane %v362, 1
    %v364 = vadd.f32 %v362, %v363
    %v365 = vmul.f32 %v348, %v348
    %v366 = vmul.f32 %v349, %v349
    %v367 = vmul.f32 %v350, %v350
    %v368 = vmul.f32 %v351, %v351
    %v369 = vadd.f32 %v365, %v366
    %v370 = vadd.f32 %v369, %v367
    %v371 = vadd.f32 %v370, %v368
    %v372 = vrot.slane %v371, 4
    %v373 = vadd.f32 %v371, %v372
    %v374 = vrot.slane %v373, 2
    %v375 = vadd.f32 %v373, %v374
    %v376 = vrot.slane %v375, 1
    %v377 = vadd.f32 %v375, %v376
    %v378 = vmul.f32 %v142, %v377
    %v379 = vmax.f32 %v378, 1e-16
    %v380 = vrsqrt.pop %v379
    %v381 = vmul.f32 %v364, %v380
    %v382 = vadd.f32 %v381, 1.0
    %v383 = vmax.f32 %v382, 0.0
    %v384 = vmin.f32 %v383, 1.0
    %v385 = vmul.f32 %v347, %v384
    %vm386 = vcmp.gt.f32.partialorder %v385, %v260
    %v387 = vsel %vm386, %v385, %v260
    %v388 = vsel %vm386, 1, 0
    %v389 = vlaneseq
    %v390 = vshrl.u32 %v389, 7
    %v391 = vsub.s32 0, %v390
    %v392 = vrot.slane %v388, %v391
    %vm393 = vcmp.eq.s32.totalorder %v392, 1
    %v394 = vsel %vm393, %v273, %v267
    %v395 = vsel %vm393, %v274, %v268
    %v396 = vsel %vm393, %v275, %v269
    %v397 = vsel %vm393, %v276, %v270
    %v398 = vsel %vm393, %v344, %v271
    %s399 = scalar_lea.vmem %s0, 64
    %v400 = vld [vmem:[%s399] sm:$0xff]
    %v401 = vld [vmem:[%s399 + $0x8] sm:$0xff]
    %v402 = vld [vmem:[%s399 + $0x10] sm:$0xff]
    %v403 = vld [vmem:[%s399 + $0x18] sm:$0xff]
    %404 = vmatprep.subr.mxu0 0.0
    %405 = vmatpush1.msra.mxu0 0.0
    %406 = vmatprep.subr.mxu0 0.0
    %407 = vmatpush1.msra.mxu0 0.0
    %408 = vmatprep.subr.mxu0 0.0
    %409 = vmatpush1.msra.mxu0 0.0
    %410 = vmatprep.subr.mxu0 0.0
    %411 = vmatpush1.msra.mxu0 0.0
    %412 = vmatprep.subr.mxu0 0.0
    %413 = vmatpush1.msra.mxu0 0.0
    %414 = vmatprep.subr.mxu0 0.0
    %415 = vmatpush1.msra.mxu0 0.0
    %416 = vmatprep.subr.mxu0 0.0
    %417 = vmatpush1.msra.mxu0 0.0
    %418 = vmatprep.subr.mxu0 0.0
    %419 = vmatpush1.msra.mxu0 0.0
    %420 = vmatprep.subr.mxu0 0.0
    %421 = vmatpush1.msra.mxu0 0.0
    %422 = vmatprep.subr.mxu0 0.0
    %423 = vmatpush1.msra.mxu0 0.0
    %424 = vmatprep.subr.mxu0 0.0
    %425 = vmatpush1.msra.mxu0 0.0
    %426 = vmatprep.subr.mxu0 0.0
    %427 = vmatpush1.msra.mxu0 0.0
    %428 = vmatprep.subr.mxu0 0.0
    %429 = vmatpush1.msra.mxu0 %v403
    %430 = vmatprep.subr.mxu0 0.0
    %431 = vmatpush1.msra.mxu0 %v402
    %432 = vmatprep.subr.mxu0 0.0
    %433 = vmatpush1.msra.mxu0 %v401
    %434 = vmatprep.subr.mxu0 0.0
    %435 = vmatpush1.msra.mxu0 %v400
    %436 = vmatprep.subr.mxu0 0.0
    %437 = vmatpush2.msra.mxu0 0.0
    %438 = vmatprep.subr.mxu0 0.0
    %439 = vmatpush2.msra.mxu0 0.0
    %440 = vmatprep.subr.mxu0 0.0
    %441 = vmatpush2.msra.mxu0 0.0
    %442 = vmatprep.subr.mxu0 0.0
    %443 = vmatpush2.msra.mxu0 0.0
    %444 = vmatprep.subr.mxu0 0.0
    %445 = vmatpush2.msra.mxu0 0.0
    %446 = vmatprep.subr.mxu0 0.0
    %447 = vmatpush2.msra.mxu0 0.0
    %448 = vmatprep.subr.mxu0 0.0
    %449 = vmatpush2.msra.mxu0 0.0
    %450 = vmatprep.subr.mxu0 0.0
    %451 = vmatpush2.msra.mxu0 0.0
    %452 = vmatprep.subr.mxu0 0.0
    %453 = vmatpush2.msra.mxu0 0.0
    %454 = vmatprep.subr.mxu0 0.0
    %455 = vmatpush2.msra.mxu0 0.0
    %456 = vmatprep.subr.mxu0 0.0
    %457 = vmatpush2.msra.mxu0 0.0
    %458 = vmatprep.subr.mxu0 0.0
    %459 = vmatpush2.msra.mxu0 0.0
    %460 = vmatprep.subr.mxu0 0.0
    %461 = vmatpush2.msra.mxu0 0.0
    %462 = vmatprep.subr.mxu0 0.0
    %463 = vmatpush2.msra.mxu0 0.0
    %464 = vmatprep.subr.mxu0 0.0
    %465 = vmatpush2.msra.mxu0 0.0
    %466 = vmatprep.subr.mxu0 0.0
    %467 = vmatpush2.msra.mxu0 0.0
    %468 = vmatprep.mubr.f32.mxu0 0.0
    %469 = vmatmul.mubr.f32.gmra.mxu0 %v148
    %v470 = vpop.f32.mrf.mxu0
    %v471 = vadd.f32 0.0, %v470
    %v472 = vpop.f32.mrf.mxu0
    %473 = vdwg.mxu0
    %v474 = vadd.f32 %v471, %v121
    %v475 = vsub.f32 %v400, %v122
    %v476 = vsub.f32 %v401, %v123
    %v477 = vsub.f32 %v402, %v124
    %v478 = vsub.f32 %v403, %v125
    %v479 = vmul.f32 %v126, %v475
    %v480 = vmul.f32 %v127, %v476
    %v481 = vmul.f32 %v128, %v477
    %v482 = vmul.f32 %v129, %v478
    %v483 = vadd.f32 %v479, %v480
    %v484 = vadd.f32 %v483, %v481
    %v485 = vadd.f32 %v484, %v482
    %v486 = vrot.slane %v485, 4
    %v487 = vadd.f32 %v485, %v486
    %v488 = vrot.slane %v487, 2
    %v489 = vadd.f32 %v487, %v488
    %v490 = vrot.slane %v489, 1
    %v491 = vadd.f32 %v489, %v490
    %v492 = vmul.f32 %v475, %v475
    %v493 = vmul.f32 %v476, %v476
    %v494 = vmul.f32 %v477, %v477
    %v495 = vmul.f32 %v478, %v478
    %v496 = vadd.f32 %v492, %v493
    %v497 = vadd.f32 %v496, %v494
    %v498 = vadd.f32 %v497, %v495
    %v499 = vrot.slane %v498, 4
    %v500 = vadd.f32 %v498, %v499
    %v501 = vrot.slane %v500, 2
    %v502 = vadd.f32 %v500, %v501
    %v503 = vrot.slane %v502, 1
    %v504 = vadd.f32 %v502, %v503
    %v505 = vmul.f32 %v142, %v504
    %v506 = vmax.f32 %v505, 1e-16
    %v507 = vrsqrt.pop %v506
    %v508 = vmul.f32 %v491, %v507
    %v509 = vadd.f32 %v508, 1.0
    %v510 = vmax.f32 %v509, 0.0
    %v511 = vmin.f32 %v510, 1.0
    %v512 = vmul.f32 %v474, %v511
    %vm513 = vcmp.gt.f32.partialorder %v512, %v387
    %v514 = vsel %vm513, %v512, %v387
    %v515 = vsel %vm513, 2, %v388
    %v516 = vsel %vm513, 1, 0
    %v517 = vlaneseq
    %v518 = vshrl.u32 %v517, 7
    %v519 = vsub.s32 0, %v518
    %v520 = vrot.slane %v516, %v519
    %vm521 = vcmp.eq.s32.totalorder %v520, 1
    %v522 = vsel %vm521, %v400, %v394
    %v523 = vsel %vm521, %v401, %v395
    %v524 = vsel %vm521, %v402, %v396
    %v525 = vsel %vm521, %v403, %v397
    %v526 = vsel %vm521, %v471, %v398
    %s527 = scalar_lea.vmem %s0, 96
    %v528 = vld [vmem:[%s527] sm:$0xff]
    %v529 = vld [vmem:[%s527 + $0x8] sm:$0xff]
    %v530 = vld [vmem:[%s527 + $0x10] sm:$0xff]
    %v531 = vld [vmem:[%s527 + $0x18] sm:$0xff]
    %532 = vmatprep.subr.mxu0 0.0
    %533 = vmatpush1.msra.mxu0 0.0
    %534 = vmatprep.subr.mxu0 0.0
    %535 = vmatpush1.msra.mxu0 0.0
    %536 = vmatprep.subr.mxu0 0.0
    %537 = vmatpush1.msra.mxu0 0.0
    %538 = vmatprep.subr.mxu0 0.0
    %539 = vmatpush1.msra.mxu0 0.0
    %540 = vmatprep.subr.mxu0 0.0
    %541 = vmatpush1.msra.mxu0 0.0
    %542 = vmatprep.subr.mxu0 0.0
    %543 = vmatpush1.msra.mxu0 0.0
    %544 = vmatprep.subr.mxu0 0.0
    %545 = vmatpush1.msra.mxu0 0.0
    %546 = vmatprep.subr.mxu0 0.0
    %547 = vmatpush1.msra.mxu0 0.0
    %548 = vmatprep.subr.mxu0 0.0
    %549 = vmatpush1.msra.mxu0 0.0
    %550 = vmatprep.subr.mxu0 0.0
    %551 = vmatpush1.msra.mxu0 0.0
    %552 = vmatprep.subr.mxu0 0.0
    %553 = vmatpush1.msra.mxu0 0.0
    %554 = vmatprep.subr.mxu0 0.0
    %555 = vmatpush1.msra.mxu0 0.0
    %556 = vmatprep.subr.mxu0 0.0
    %557 = vmatpush1.msra.mxu0 %v531
    %558 = vmatprep.subr.mxu0 0.0
    %559 = vmatpush1.msra.mxu0 %v530
    %560 = vmatprep.subr.mxu0 0.0
    %561 = vmatpush1.msra.mxu0 %v529
    %562 = vmatprep.subr.mxu0 0.0
    %563 = vmatpush1.msra.mxu0 %v528
    %564 = vmatprep.subr.mxu0 0.0
    %565 = vmatpush2.msra.mxu0 0.0
    %566 = vmatprep.subr.mxu0 0.0
    %567 = vmatpush2.msra.mxu0 0.0
    %568 = vmatprep.subr.mxu0 0.0
    %569 = vmatpush2.msra.mxu0 0.0
    %570 = vmatprep.subr.mxu0 0.0
    %571 = vmatpush2.msra.mxu0 0.0
    %572 = vmatprep.subr.mxu0 0.0
    %573 = vmatpush2.msra.mxu0 0.0
    %574 = vmatprep.subr.mxu0 0.0
    %575 = vmatpush2.msra.mxu0 0.0
    %576 = vmatprep.subr.mxu0 0.0
    %577 = vmatpush2.msra.mxu0 0.0
    %578 = vmatprep.subr.mxu0 0.0
    %579 = vmatpush2.msra.mxu0 0.0
    %580 = vmatprep.subr.mxu0 0.0
    %581 = vmatpush2.msra.mxu0 0.0
    %582 = vmatprep.subr.mxu0 0.0
    %583 = vmatpush2.msra.mxu0 0.0
    %584 = vmatprep.subr.mxu0 0.0
    %585 = vmatpush2.msra.mxu0 0.0
    %586 = vmatprep.subr.mxu0 0.0
    %587 = vmatpush2.msra.mxu0 0.0
    %588 = vmatprep.subr.mxu0 0.0
    %589 = vmatpush2.msra.mxu0 0.0
    %590 = vmatprep.subr.mxu0 0.0
    %591 = vmatpush2.msra.mxu0 0.0
    %592 = vmatprep.subr.mxu0 0.0
    %593 = vmatpush2.msra.mxu0 0.0
    %594 = vmatprep.subr.mxu0 0.0
    %595 = vmatpush2.msra.mxu0 0.0
    %596 = vmatprep.mubr.f32.mxu0 0.0
    %597 = vmatmul.mubr.f32.gmra.mxu0 %v148
    %v598 = vpop.f32.mrf.mxu0
    %v599 = vadd.f32 0.0, %v598
    %v600 = vpop.f32.mrf.mxu0
    %601 = vdwg.mxu0
    %v602 = vadd.f32 %v599, %v121
    %v603 = vsub.f32 %v528, %v122
    %v604 = vsub.f32 %v529, %v123
    %v605 = vsub.f32 %v530, %v124
    %v606 = vsub.f32 %v531, %v125
    %v607 = vmul.f32 %v126, %v603
    %v608 = vmul.f32 %v127, %v604
    %v609 = vmul.f32 %v128, %v605
    %v610 = vmul.f32 %v129, %v606
    %v611 = vadd.f32 %v607, %v608
    %v612 = vadd.f32 %v611, %v609
    %v613 = vadd.f32 %v612, %v610
    %v614 = vrot.slane %v613, 4
    %v615 = vadd.f32 %v613, %v614
    %v616 = vrot.slane %v615, 2
    %v617 = vadd.f32 %v615, %v616
    %v618 = vrot.slane %v617, 1
    %v619 = vadd.f32 %v617, %v618
    %v620 = vmul.f32 %v603, %v603
    %v621 = vmul.f32 %v604, %v604
    %v622 = vmul.f32 %v605, %v605
    %v623 = vmul.f32 %v606, %v606
    %v624 = vadd.f32 %v620, %v621
    %v625 = vadd.f32 %v624, %v622
    %v626 = vadd.f32 %v625, %v623
    %v627 = vrot.slane %v626, 4
    %v628 = vadd.f32 %v626, %v627
    %v629 = vrot.slane %v628, 2
    %v630 = vadd.f32 %v628, %v629
    %v631 = vrot.slane %v630, 1
    %v632 = vadd.f32 %v630, %v631
    %v633 = vmul.f32 %v142, %v632
    %v634 = vmax.f32 %v633, 1e-16
    %v635 = vrsqrt.pop %v634
    %v636 = vmul.f32 %v619, %v635
    %v637 = vadd.f32 %v636, 1.0
    %v638 = vmax.f32 %v637, 0.0
    %v639 = vmin.f32 %v638, 1.0
    %v640 = vmul.f32 %v602, %v639
    %vm641 = vcmp.gt.f32.partialorder %v640, %v514
    %v642 = vsel %vm641, %v640, %v514
    %v643 = vsel %vm641, 3, %v515
    %v644 = vsel %vm641, 1, 0
    %v645 = vlaneseq
    %v646 = vshrl.u32 %v645, 7
    %v647 = vsub.s32 0, %v646
    %v648 = vrot.slane %v644, %v647
    %vm649 = vcmp.eq.s32.totalorder %v648, 1
    %v650 = vsel %vm649, %v528, %v522
    %v651 = vsel %vm649, %v529, %v523
    %v652 = vsel %vm649, %v530, %v524
    %v653 = vsel %vm649, %v531, %v525
    %v654 = vsel %vm649, %v599, %v526
    %s655 = scalar_lea.vmem %s0, 128
    %v656 = vld [vmem:[%s655] sm:$0xff]
    %v657 = vld [vmem:[%s655 + $0x8] sm:$0xff]
    %v658 = vld [vmem:[%s655 + $0x10] sm:$0xff]
    %v659 = vld [vmem:[%s655 + $0x18] sm:$0xff]
    %660 = vmatprep.subr.mxu0 0.0
    %661 = vmatpush1.msra.mxu0 0.0
    %662 = vmatprep.subr.mxu0 0.0
    %663 = vmatpush1.msra.mxu0 0.0
    %664 = vmatprep.subr.mxu0 0.0
    %665 = vmatpush1.msra.mxu0 0.0
    %666 = vmatprep.subr.mxu0 0.0
    %667 = vmatpush1.msra.mxu0 0.0
    %668 = vmatprep.subr.mxu0 0.0
    %669 = vmatpush1.msra.mxu0 0.0
    %670 = vmatprep.subr.mxu0 0.0
    %671 = vmatpush1.msra.mxu0 0.0
    %672 = vmatprep.subr.mxu0 0.0
    %673 = vmatpush1.msra.mxu0 0.0
    %674 = vmatprep.subr.mxu0 0.0
    %675 = vmatpush1.msra.mxu0 0.0
    %676 = vmatprep.subr.mxu0 0.0
    %677 = vmatpush1.msra.mxu0 0.0
    %678 = vmatprep.subr.mxu0 0.0
    %679 = vmatpush1.msra.mxu0 0.0
    %680 = vmatprep.subr.mxu0 0.0
    %681 = vmatpush1.msra.mxu0 0.0
    %682 = vmatprep.subr.mxu0 0.0
    %683 = vmatpush1.msra.mxu0 0.0
    %684 = vmatprep.subr.mxu0 0.0
    %685 = vmatpush1.msra.mxu0 %v659
    %686 = vmatprep.subr.mxu0 0.0
    %687 = vmatpush1.msra.mxu0 %v658
    %688 = vmatprep.subr.mxu0 0.0
    %689 = vmatpush1.msra.mxu0 %v657
    %690 = vmatprep.subr.mxu0 0.0
    %691 = vmatpush1.msra.mxu0 %v656
    %692 = vmatprep.subr.mxu0 0.0
    %693 = vmatpush2.msra.mxu0 0.0
    %694 = vmatprep.subr.mxu0 0.0
    %695 = vmatpush2.msra.mxu0 0.0
    %696 = vmatprep.subr.mxu0 0.0
    %697 = vmatpush2.msra.mxu0 0.0
    %698 = vmatprep.subr.mxu0 0.0
    %699 = vmatpush2.msra.mxu0 0.0
    %700 = vmatprep.subr.mxu0 0.0
    %701 = vmatpush2.msra.mxu0 0.0
    %702 = vmatprep.subr.mxu0 0.0
    %703 = vmatpush2.msra.mxu0 0.0
    %704 = vmatprep.subr.mxu0 0.0
    %705 = vmatpush2.msra.mxu0 0.0
    %706 = vmatprep.subr.mxu0 0.0
    %707 = vmatpush2.msra.mxu0 0.0
    %708 = vmatprep.subr.mxu0 0.0
    %709 = vmatpush2.msra.mxu0 0.0
    %710 = vmatprep.subr.mxu0 0.0
    %711 = vmatpush2.msra.mxu0 0.0
    %712 = vmatprep.subr.mxu0 0.0
    %713 = vmatpush2.msra.mxu0 0.0
    %714 = vmatprep.subr.mxu0 0.0
    %715 = vmatpush2.msra.mxu0 0.0
    %716 = vmatprep.subr.mxu0 0.0
    %717 = vmatpush2.msra.mxu0 0.0
    %718 = vmatprep.subr.mxu0 0.0
    %719 = vmatpush2.msra.mxu0 0.0
    %720 = vmatprep.subr.mxu0 0.0
    %721 = vmatpush2.msra.mxu0 0.0
    %722 = vmatprep.subr.mxu0 0.0
    %723 = vmatpush2.msra.mxu0 0.0
    %724 = vmatprep.mubr.f32.mxu0 0.0
    %725 = vmatmul.mubr.f32.gmra.mxu0 %v148
    %v726 = vpop.f32.mrf.mxu0
    %v727 = vadd.f32 0.0, %v726
    %v728 = vpop.f32.mrf.mxu0
    %729 = vdwg.mxu0
    %v730 = vadd.f32 %v727, %v121
    %v731 = vsub.f32 %v656, %v122
    %v732 = vsub.f32 %v657, %v123
    %v733 = vsub.f32 %v658, %v124
    %v734 = vsub.f32 %v659, %v125
    %v735 = vmul.f32 %v126, %v731
    %v736 = vmul.f32 %v127, %v732
    %v737 = vmul.f32 %v128, %v733
    %v738 = vmul.f32 %v129, %v734
    %v739 = vadd.f32 %v735, %v736
    %v740 = vadd.f32 %v739, %v737
    %v741 = vadd.f32 %v740, %v738
    %v742 = vrot.slane %v741, 4
    %v743 = vadd.f32 %v741, %v742
    %v744 = vrot.slane %v743, 2
    %v745 = vadd.f32 %v743, %v744
    %v746 = vrot.slane %v745, 1
    %v747 = vadd.f32 %v745, %v746
    %v748 = vmul.f32 %v731, %v731
    %v749 = vmul.f32 %v732, %v732
    %v750 = vmul.f32 %v733, %v733
    %v751 = vmul.f32 %v734, %v734
    %v752 = vadd.f32 %v748, %v749
    %v753 = vadd.f32 %v752, %v750
    %v754 = vadd.f32 %v753, %v751
    %v755 = vrot.slane %v754, 4
    %v756 = vadd.f32 %v754, %v755
    %v757 = vrot.slane %v756, 2
    %v758 = vadd.f32 %v756, %v757
    %v759 = vrot.slane %v758, 1
    %v760 = vadd.f32 %v758, %v759
    %v761 = vmul.f32 %v142, %v760
    %v762 = vmax.f32 %v761, 1e-16
    %v763 = vrsqrt.pop %v762
    %v764 = vmul.f32 %v747, %v763
    %v765 = vadd.f32 %v764, 1.0
    %v766 = vmax.f32 %v765, 0.0
    %v767 = vmin.f32 %v766, 1.0
    %v768 = vmul.f32 %v730, %v767
    %vm769 = vcmp.gt.f32.partialorder %v768, %v642
    %v770 = vsel %vm769, %v768, %v642
    %v771 = vsel %vm769, 4, %v643
    %v772 = vsel %vm769, 1, 0
    %v773 = vlaneseq
    %v774 = vshrl.u32 %v773, 7
    %v775 = vsub.s32 0, %v774
    %v776 = vrot.slane %v772, %v775
    %vm777 = vcmp.eq.s32.totalorder %v776, 1
    %v778 = vsel %vm777, %v656, %v650
    %v779 = vsel %vm777, %v657, %v651
    %v780 = vsel %vm777, %v658, %v652
    %v781 = vsel %vm777, %v659, %v653
    %v782 = vsel %vm777, %v727, %v654
    %s783 = scalar_lea.vmem %s0, 160
    %v784 = vld [vmem:[%s783] sm:$0xff]
    %v785 = vld [vmem:[%s783 + $0x8] sm:$0xff]
    %v786 = vld [vmem:[%s783 + $0x10] sm:$0xff]
    %v787 = vld [vmem:[%s783 + $0x18] sm:$0xff]
    %788 = vmatprep.subr.mxu0 0.0
    %789 = vmatpush1.msra.mxu0 0.0
    %790 = vmatprep.subr.mxu0 0.0
    %791 = vmatpush1.msra.mxu0 0.0
    %792 = vmatprep.subr.mxu0 0.0
    %793 = vmatpush1.msra.mxu0 0.0
    %794 = vmatprep.subr.mxu0 0.0
    %795 = vmatpush1.msra.mxu0 0.0
    %796 = vmatprep.subr.mxu0 0.0
    %797 = vmatpush1.msra.mxu0 0.0
    %798 = vmatprep.subr.mxu0 0.0
    %799 = vmatpush1.msra.mxu0 0.0
    %800 = vmatprep.subr.mxu0 0.0
    %801 = vmatpush1.msra.mxu0 0.0
    %802 = vmatprep.subr.mxu0 0.0
    %803 = vmatpush1.msra.mxu0 0.0
    %804 = vmatprep.subr.mxu0 0.0
    %805 = vmatpush1.msra.mxu0 0.0
    %806 = vmatprep.subr.mxu0 0.0
    %807 = vmatpush1.msra.mxu0 0.0
    %808 = vmatprep.subr.mxu0 0.0
    %809 = vmatpush1.msra.mxu0 0.0
    %810 = vmatprep.subr.mxu0 0.0
    %811 = vmatpush1.msra.mxu0 0.0
    %812 = vmatprep.subr.mxu0 0.0
    %813 = vmatpush1.msra.mxu0 %v787
    %814 = vmatprep.subr.mxu0 0.0
    %815 = vmatpush1.msra.mxu0 %v786
    %816 = vmatprep.subr.mxu0 0.0
    %817 = vmatpush1.msra.mxu0 %v785
    %818 = vmatprep.subr.mxu0 0.0
    %819 = vmatpush1.msra.mxu0 %v784
    %820 = vmatprep.subr.mxu0 0.0
    %821 = vmatpush2.msra.mxu0 0.0
    %822 = vmatprep.subr.mxu0 0.0
    %823 = vmatpush2.msra.mxu0 0.0
    %824 = vmatprep.subr.mxu0 0.0
    %825 = vmatpush2.msra.mxu0 0.0
    %826 = vmatprep.subr.mxu0 0.0
    %827 = vmatpush2.msra.mxu0 0.0
    %828 = vmatprep.subr.mxu0 0.0
    %829 = vmatpush2.msra.mxu0 0.0
    %830 = vmatprep.subr.mxu0 0.0
    %831 = vmatpush2.msra.mxu0 0.0
    %832 = vmatprep.subr.mxu0 0.0
    %833 = vmatpush2.msra.mxu0 0.0
    %834 = vmatprep.subr.mxu0 0.0
    %835 = vmatpush2.msra.mxu0 0.0
    %836 = vmatprep.subr.mxu0 0.0
    %837 = vmatpush2.msra.mxu0 0.0
    %838 = vmatprep.subr.mxu0 0.0
    %839 = vmatpush2.msra.mxu0 0.0
    %840 = vmatprep.subr.mxu0 0.0
    %841 = vmatpush2.msra.mxu0 0.0
    %842 = vmatprep.subr.mxu0 0.0
    %843 = vmatpush2.msra.mxu0 0.0
    %844 = vmatprep.subr.mxu0 0.0
    %845 = vmatpush2.msra.mxu0 0.0
    %846 = vmatprep.subr.mxu0 0.0
    %847 = vmatpush2.msra.mxu0 0.0
    %848 = vmatprep.subr.mxu0 0.0
    %849 = vmatpush2.msra.mxu0 0.0
    %850 = vmatprep.subr.mxu0 0.0
    %851 = vmatpush2.msra.mxu0 0.0
    %852 = vmatprep.mubr.f32.mxu0 0.0
    %853 = vmatmul.mubr.f32.gmra.mxu0 %v148
    %v854 = vpop.f32.mrf.mxu0
    %v855 = vadd.f32 0.0, %v854
    %v856 = vpop.f32.mrf.mxu0
    %857 = vdwg.mxu0
    %v858 = vadd.f32 %v855, %v121
    %v859 = vsub.f32 %v784, %v122
    %v860 = vsub.f32 %v785, %v123
    %v861 = vsub.f32 %v786, %v124
    %v862 = vsub.f32 %v787, %v125
    %v863 = vmul.f32 %v126, %v859
    %v864 = vmul.f32 %v127, %v860
    %v865 = vmul.f32 %v128, %v861
    %v866 = vmul.f32 %v129, %v862
    %v867 = vadd.f32 %v863, %v864
    %v868 = vadd.f32 %v867, %v865
    %v869 = vadd.f32 %v868, %v866
    %v870 = vrot.slane %v869, 4
    %v871 = vadd.f32 %v869, %v870
    %v872 = vrot.slane %v871, 2
    %v873 = vadd.f32 %v871, %v872
    %v874 = vrot.slane %v873, 1
    %v875 = vadd.f32 %v873, %v874
    %v876 = vmul.f32 %v859, %v859
    %v877 = vmul.f32 %v860, %v860
    %v878 = vmul.f32 %v861, %v861
    %v879 = vmul.f32 %v862, %v862
    %v880 = vadd.f32 %v876, %v877
    %v881 = vadd.f32 %v880, %v878
    %v882 = vadd.f32 %v881, %v879
    %v883 = vrot.slane %v882, 4
    %v884 = vadd.f32 %v882, %v883
    %v885 = vrot.slane %v884, 2
    %v886 = vadd.f32 %v884, %v885
    %v887 = vrot.slane %v886, 1
    %v888 = vadd.f32 %v886, %v887
    %v889 = vmul.f32 %v142, %v888
    %v890 = vmax.f32 %v889, 1e-16
    %v891 = vrsqrt.pop %v890
    %v892 = vmul.f32 %v875, %v891
    %v893 = vadd.f32 %v892, 1.0
    %v894 = vmax.f32 %v893, 0.0
    %v895 = vmin.f32 %v894, 1.0
    %v896 = vmul.f32 %v858, %v895
    %vm897 = vcmp.gt.f32.partialorder %v896, %v770
    %v898 = vsel %vm897, %v896, %v770
    %v899 = vsel %vm897, 5, %v771
    %v900 = vsel %vm897, 1, 0
    %v901 = vlaneseq
    %v902 = vshrl.u32 %v901, 7
    %v903 = vsub.s32 0, %v902
    %v904 = vrot.slane %v900, %v903
    %vm905 = vcmp.eq.s32.totalorder %v904, 1
    %v906 = vsel %vm905, %v784, %v778
    %v907 = vsel %vm905, %v785, %v779
    %v908 = vsel %vm905, %v786, %v780
    %v909 = vsel %vm905, %v787, %v781
    %v910 = vsel %vm905, %v855, %v782
    %s911 = scalar_lea.vmem %s0, 192
    %v912 = vld [vmem:[%s911] sm:$0xff]
    %v913 = vld [vmem:[%s911 + $0x8] sm:$0xff]
    %v914 = vld [vmem:[%s911 + $0x10] sm:$0xff]
    %v915 = vld [vmem:[%s911 + $0x18] sm:$0xff]
    %916 = vmatprep.subr.mxu0 0.0
    %917 = vmatpush1.msra.mxu0 0.0
    %918 = vmatprep.subr.mxu0 0.0
    %919 = vmatpush1.msra.mxu0 0.0
    %920 = vmatprep.subr.mxu0 0.0
    %921 = vmatpush1.msra.mxu0 0.0
    %922 = vmatprep.subr.mxu0 0.0
    %923 = vmatpush1.msra.mxu0 0.0
    %924 = vmatprep.subr.mxu0 0.0
    %925 = vmatpush1.msra.mxu0 0.0
    %926 = vmatprep.subr.mxu0 0.0
    %927 = vmatpush1.msra.mxu0 0.0
    %928 = vmatprep.subr.mxu0 0.0
    %929 = vmatpush1.msra.mxu0 0.0
    %930 = vmatprep.subr.mxu0 0.0
    %931 = vmatpush1.msra.mxu0 0.0
    %932 = vmatprep.subr.mxu0 0.0
    %933 = vmatpush1.msra.mxu0 0.0
    %934 = vmatprep.subr.mxu0 0.0
    %935 = vmatpush1.msra.mxu0 0.0
    %936 = vmatprep.subr.mxu0 0.0
    %937 = vmatpush1.msra.mxu0 0.0
    %938 = vmatprep.subr.mxu0 0.0
    %939 = vmatpush1.msra.mxu0 0.0
    %940 = vmatprep.subr.mxu0 0.0
    %941 = vmatpush1.msra.mxu0 %v915
    %942 = vmatprep.subr.mxu0 0.0
    %943 = vmatpush1.msra.mxu0 %v914
    %944 = vmatprep.subr.mxu0 0.0
    %945 = vmatpush1.msra.mxu0 %v913
    %946 = vmatprep.subr.mxu0 0.0
    %947 = vmatpush1.msra.mxu0 %v912
    %948 = vmatprep.subr.mxu0 0.0
    %949 = vmatpush2.msra.mxu0 0.0
    %950 = vmatprep.subr.mxu0 0.0
    %951 = vmatpush2.msra.mxu0 0.0
    %952 = vmatprep.subr.mxu0 0.0
    %953 = vmatpush2.msra.mxu0 0.0
    %954 = vmatprep.subr.mxu0 0.0
    %955 = vmatpush2.msra.mxu0 0.0
    %956 = vmatprep.subr.mxu0 0.0
    %957 = vmatpush2.msra.mxu0 0.0
    %958 = vmatprep.subr.mxu0 0.0
    %959 = vmatpush2.msra.mxu0 0.0
    %960 = vmatprep.subr.mxu0 0.0
    %961 = vmatpush2.msra.mxu0 0.0
    %962 = vmatprep.subr.mxu0 0.0
    %963 = vmatpush2.msra.mxu0 0.0
    %964 = vmatprep.subr.mxu0 0.0
    %965 = vmatpush2.msra.mxu0 0.0
    %966 = vmatprep.subr.mxu0 0.0
    %967 = vmatpush2.msra.mxu0 0.0
    %968 = vmatprep.subr.mxu0 0.0
    %969 = vmatpush2.msra.mxu0 0.0
    %970 = vmatprep.subr.mxu0 0.0
    %971 = vmatpush2.msra.mxu0 0.0
    %972 = vmatprep.subr.mxu0 0.0
    %973 = vmatpush2.msra.mxu0 0.0
    %974 = vmatprep.subr.mxu0 0.0
    %975 = vmatpush2.msra.mxu0 0.0
    %976 = vmatprep.subr.mxu0 0.0
    %977 = vmatpush2.msra.mxu0 0.0
    %978 = vmatprep.subr.mxu0 0.0
    %979 = vmatpush2.msra.mxu0 0.0
    %980 = vmatprep.mubr.f32.mxu0 0.0
    %981 = vmatmul.mubr.f32.gmra.mxu0 %v148
    %v982 = vpop.f32.mrf.mxu0
    %v983 = vadd.f32 0.0, %v982
    %v984 = vpop.f32.mrf.mxu0
    %985 = vdwg.mxu0
    %v986 = vadd.f32 %v983, %v121
    %v987 = vsub.f32 %v912, %v122
    %v988 = vsub.f32 %v913, %v123
    %v989 = vsub.f32 %v914, %v124
    %v990 = vsub.f32 %v915, %v125
    %v991 = vmul.f32 %v126, %v987
    %v992 = vmul.f32 %v127, %v988
    %v993 = vmul.f32 %v128, %v989
    %v994 = vmul.f32 %v129, %v990
    %v995 = vadd.f32 %v991, %v992
    %v996 = vadd.f32 %v995, %v993
    %v997 = vadd.f32 %v996, %v994
    %v998 = vrot.slane %v997, 4
    %v999 = vadd.f32 %v997, %v998
    %v1000 = vrot.slane %v999, 2
    %v1001 = vadd.f32 %v999, %v1000
    %v1002 = vrot.slane %v1001, 1
    %v1003 = vadd.f32 %v1001, %v1002
    %v1004 = vmul.f32 %v987, %v987
    %v1005 = vmul.f32 %v988, %v988
    %v1006 = vmul.f32 %v989, %v989
    %v1007 = vmul.f32 %v990, %v990
    %v1008 = vadd.f32 %v1004, %v1005
    %v1009 = vadd.f32 %v1008, %v1006
    %v1010 = vadd.f32 %v1009, %v1007
    %v1011 = vrot.slane %v1010, 4
    %v1012 = vadd.f32 %v1010, %v1011
    %v1013 = vrot.slane %v1012, 2
    %v1014 = vadd.f32 %v1012, %v1013
    %v1015 = vrot.slane %v1014, 1
    %v1016 = vadd.f32 %v1014, %v1015
    %v1017 = vmul.f32 %v142, %v1016
    %v1018 = vmax.f32 %v1017, 1e-16
    %v1019 = vrsqrt.pop %v1018
    %v1020 = vmul.f32 %v1003, %v1019
    %v1021 = vadd.f32 %v1020, 1.0
    %v1022 = vmax.f32 %v1021, 0.0
    %v1023 = vmin.f32 %v1022, 1.0
    %v1024 = vmul.f32 %v986, %v1023
    %vm1025 = vcmp.gt.f32.partialorder %v1024, %v898
    %v1026 = vsel %vm1025, %v1024, %v898
    %v1027 = vsel %vm1025, 6, %v899
    %v1028 = vsel %vm1025, 1, 0
    %v1029 = vlaneseq
    %v1030 = vshrl.u32 %v1029, 7
    %v1031 = vsub.s32 0, %v1030
    %v1032 = vrot.slane %v1028, %v1031
    %vm1033 = vcmp.eq.s32.totalorder %v1032, 1
    %v1034 = vsel %vm1033, %v912, %v906
    %v1035 = vsel %vm1033, %v913, %v907
    %v1036 = vsel %vm1033, %v914, %v908
    %v1037 = vsel %vm1033, %v915, %v909
    %v1038 = vsel %vm1033, %v983, %v910
    %s1039 = scalar_lea.vmem %s0, 224
    %v1040 = vld [vmem:[%s1039] sm:$0xff]
    %v1041 = vld [vmem:[%s1039 + $0x8] sm:$0xff]
    %v1042 = vld [vmem:[%s1039 + $0x10] sm:$0xff]
    %v1043 = vld [vmem:[%s1039 + $0x18] sm:$0xff]
    %1044 = vmatprep.subr.mxu0 0.0
    %1045 = vmatpush1.msra.mxu0 0.0
    %1046 = vmatprep.subr.mxu0 0.0
    %1047 = vmatpush1.msra.mxu0 0.0
    %1048 = vmatprep.subr.mxu0 0.0
    %1049 = vmatpush1.msra.mxu0 0.0
    %1050 = vmatprep.subr.mxu0 0.0
    %1051 = vmatpush1.msra.mxu0 0.0
    %1052 = vmatprep.subr.mxu0 0.0
    %1053 = vmatpush1.msra.mxu0 0.0
    %1054 = vmatprep.subr.mxu0 0.0
    %1055 = vmatpush1.msra.mxu0 0.0
    %1056 = vmatprep.subr.mxu0 0.0
    %1057 = vmatpush1.msra.mxu0 0.0
    %1058 = vmatprep.subr.mxu0 0.0
    %1059 = vmatpush1.msra.mxu0 0.0
    %1060 = vmatprep.subr.mxu0 0.0
    %1061 = vmatpush1.msra.mxu0 0.0
    %1062 = vmatprep.subr.mxu0 0.0
    %1063 = vmatpush1.msra.mxu0 0.0
    %1064 = vmatprep.subr.mxu0 0.0
    %1065 = vmatpush1.msra.mxu0 0.0
    %1066 = vmatprep.subr.mxu0 0.0
    %1067 = vmatpush1.msra.mxu0 0.0
    %1068 = vmatprep.subr.mxu0 0.0
    %1069 = vmatpush1.msra.mxu0 %v1043
    %1070 = vmatprep.subr.mxu0 0.0
    %1071 = vmatpush1.msra.mxu0 %v1042
    %1072 = vmatprep.subr.mxu0 0.0
    %1073 = vmatpush1.msra.mxu0 %v1041
    %1074 = vmatprep.subr.mxu0 0.0
    %1075 = vmatpush1.msra.mxu0 %v1040
    %1076 = vmatprep.subr.mxu0 0.0
    %1077 = vmatpush2.msra.mxu0 0.0
    %1078 = vmatprep.subr.mxu0 0.0
    %1079 = vmatpush2.msra.mxu0 0.0
    %1080 = vmatprep.subr.mxu0 0.0
    %1081 = vmatpush2.msra.mxu0 0.0
    %1082 = vmatprep.subr.mxu0 0.0
    %1083 = vmatpush2.msra.mxu0 0.0
    %1084 = vmatprep.subr.mxu0 0.0
    %1085 = vmatpush2.msra.mxu0 0.0
    %1086 = vmatprep.subr.mxu0 0.0
    %1087 = vmatpush2.msra.mxu0 0.0
    %1088 = vmatprep.subr.mxu0 0.0
    %1089 = vmatpush2.msra.mxu0 0.0
    %1090 = vmatprep.subr.mxu0 0.0
    %1091 = vmatpush2.msra.mxu0 0.0
    %1092 = vmatprep.subr.mxu0 0.0
    %1093 = vmatpush2.msra.mxu0 0.0
    %1094 = vmatprep.subr.mxu0 0.0
    %1095 = vmatpush2.msra.mxu0 0.0
    %1096 = vmatprep.subr.mxu0 0.0
    %1097 = vmatpush2.msra.mxu0 0.0
    %1098 = vmatprep.subr.mxu0 0.0
    %1099 = vmatpush2.msra.mxu0 0.0
    %1100 = vmatprep.subr.mxu0 0.0
    %1101 = vmatpush2.msra.mxu0 0.0
    %1102 = vmatprep.subr.mxu0 0.0
    %1103 = vmatpush2.msra.mxu0 0.0
    %1104 = vmatprep.subr.mxu0 0.0
    %1105 = vmatpush2.msra.mxu0 0.0
    %1106 = vmatprep.subr.mxu0 0.0
    %1107 = vmatpush2.msra.mxu0 0.0
    %1108 = vmatprep.mubr.f32.mxu0 0.0
    %1109 = vmatmul.mubr.f32.gmra.mxu0 %v148
    %v1110 = vpop.f32.mrf.mxu0
    %v1111 = vadd.f32 0.0, %v1110
    %v1112 = vpop.f32.mrf.mxu0
    %1113 = vdwg.mxu0
    %v1114 = vadd.f32 %v1111, %v121
    %v1115 = vsub.f32 %v1040, %v122
    %v1116 = vsub.f32 %v1041, %v123
    %v1117 = vsub.f32 %v1042, %v124
    %v1118 = vsub.f32 %v1043, %v125
    %v1119 = vmul.f32 %v126, %v1115
    %v1120 = vmul.f32 %v127, %v1116
    %v1121 = vmul.f32 %v128, %v1117
    %v1122 = vmul.f32 %v129, %v1118
    %v1123 = vadd.f32 %v1119, %v1120
    %v1124 = vadd.f32 %v1123, %v1121
    %v1125 = vadd.f32 %v1124, %v1122
    %v1126 = vrot.slane %v1125, 4
    %v1127 = vadd.f32 %v1125, %v1126
    %v1128 = vrot.slane %v1127, 2
    %v1129 = vadd.f32 %v1127, %v1128
    %v1130 = vrot.slane %v1129, 1
    %v1131 = vadd.f32 %v1129, %v1130
    %v1132 = vmul.f32 %v1115, %v1115
    %v1133 = vmul.f32 %v1116, %v1116
    %v1134 = vmul.f32 %v1117, %v1117
    %v1135 = vmul.f32 %v1118, %v1118
    %v1136 = vadd.f32 %v1132, %v1133
    %v1137 = vadd.f32 %v1136, %v1134
    %v1138 = vadd.f32 %v1137, %v1135
    %v1139 = vrot.slane %v1138, 4
    %v1140 = vadd.f32 %v1138, %v1139
    %v1141 = vrot.slane %v1140, 2
    %v1142 = vadd.f32 %v1140, %v1141
    %v1143 = vrot.slane %v1142, 1
    %v1144 = vadd.f32 %v1142, %v1143
    %v1145 = vmul.f32 %v142, %v1144
    %v1146 = vmax.f32 %v1145, 1e-16
    %v1147 = vrsqrt.pop %v1146
    %v1148 = vmul.f32 %v1131, %v1147
    %v1149 = vadd.f32 %v1148, 1.0
    %v1150 = vmax.f32 %v1149, 0.0
    %v1151 = vmin.f32 %v1150, 1.0
    %v1152 = vmul.f32 %v1114, %v1151
    %vm1153 = vcmp.gt.f32.partialorder %v1152, %v1026
    %v1154 = vsel %vm1153, 7, %v1027
    %v1155 = vsel %vm1153, 1, 0
    %v1156 = vlaneseq
    %v1157 = vshrl.u32 %v1156, 7
    %v1158 = vsub.s32 0, %v1157
    %v1159 = vrot.slane %v1155, %v1158
    %vm1160 = vcmp.eq.s32.totalorder %v1159, 1
    %v1161 = vsel %vm1160, %v1040, %v1034
    %v1162 = vsel %vm1160, %v1041, %v1035
    %v1163 = vsel %vm1160, %v1042, %v1036
    %v1164 = vsel %vm1160, %v1043, %v1037
    %v1165 = vsel %vm1160, %v1111, %v1038
    %1166 = vst [vmem:[%s6] sm:$0xff] %v1161
    %1167 = vst [vmem:[%s6 + $0x8] sm:$0xff] %v1162
    %1168 = vst [vmem:[%s6 + $0x10] sm:$0xff] %v1163
    %1169 = vst [vmem:[%s6 + $0x18] sm:$0xff] %v1164
    %v1170 = vcvt.s32.f32 %v1154
    %1171 = vst [vmem:[#allocation5] sm:$0x1] %v1170
    %v1172 = vadd.f32 %v1165, %v116
    %s1173 = sld [smem:[#allocation2 + $0x1]]
    %v1174 = vstv %s1173
    %v1175 = vadd.f32 %v1172, %v1174
    %1176 = vst [vmem:[#allocation5] sm:$0x2] %v1175
    %s1177 = sld [smem:[#allocation2 + $0x2]]
    %v1178 = vstv %s1177
    %v1179 = vadd.f32 %v1172, %v1178
    %1180 = vst [vmem:[#allocation5] sm:$0x4] %v1179
    %1181 = vst [vmem:[#allocation5 + $0x3] sm:$0x1f] 0.0
    // Predicated region
    $region30: #{walk_forward.7} parent=1 // pred_check
      _
    $region31: #{walk_forward.7} parent=1 // pred_check_branch
      %1183 = sbr.rel (0) target = $region33
    $region32: #{walk_forward.7} parent=1 // pred_region
      _
    $region33: #{walk_forward.7} parent=1 // pred_fallthru
      _
    // Predicated region
    $region34: #{walk_forward.7} parent=1 // pred_check
      _
    $region35: #{walk_forward.7} parent=1 // pred_check_branch
      %1185 = sbr.rel (0) target = $region37
    $region36: #{walk_forward.7} parent=1 // pred_region
      %s1187 = ssub.s32 128, 128
      %1188 = vsyncadd [#allocation3], %s1187
      %s1190 = sshll.u32 [#allocation5], 4
      %s1191 = int_to_ptr.vmem [resolvable:$true] %s1190
      %1193 = dma.vmem_to_hbm [thread:$0]  %s1191, 128, %s7, [#allocation3]
    $region37: #{walk_forward.7} parent=1 // pred_fallthru
      _
    // Predicated region
    $region38: #{walk_forward.7} parent=1 // pred_check
      _
    $region39: #{walk_forward.7} parent=1 // pred_check_branch
      %1195 = sbr.rel (0) target = $region41
    $region40: #{walk_forward.7} parent=1 // pred_region
      _
    $region41: #{walk_forward.7} parent=1 // pred_fallthru
      _
    // Predicated region
    $region42: #{walk_forward.7} parent=1 // pred_check
      _
    $region43: #{walk_forward.7} parent=1 // pred_check_branch
      %1197 = sbr.rel (0) target = $region45
    $region44: #{walk_forward.7} parent=1 // pred_region
      %1198 = dma.done [#allocation3], 128
    $region45: #{walk_forward.7} parent=1 // pred_fallthru
      _
    %1199 = vsyncpa [#allocation3], 1
    %1200 = vsyncpa [#allocation4], 1

</llo_original>
